<compile_context>
chip_gen: v7x
topology: tpu7x:2x2x1
jax: 0.10.0
libtpu: 0.0.40
codegen_flags: <defaults>
</compile_context>

<pallas_src>
import jax
import jax.numpy as jnp
from jax.experimental import pallas as pl
from jax.experimental.pallas import tpu as pltpu

LANE = 128
M_TILE = 1024                      # M-tile cap (rows of pooled output / batch)
VMEM_LIMIT = 32 * 1024 * 1024      # explicit (> v5e's 16MB default), safe on v7x


def _round_up(x, m):
    return (x + m - 1) // m * m


def _choose_mt(mp, cap):
    """Pick an M tile: multiple of 32 (bf16 sublane tiles), capped, and when the
    problem is big enough split into >=2 grid steps so v7x can shard the
    'parallel' axis across both TensorCores."""
    mt = min(cap, _round_up(mp, 32))
    if mp > 32 and mt >= mp:
        mt = _round_up((mp + 1) // 2, 32)
    return mt


# ---------------------------------------------------------------------------
# Pallas kernels
# ---------------------------------------------------------------------------
def _conv_relu_pool_kernel(x_ref, w_ref, b_ref, o_ref):
    """Fused conv-as-matmul + bias + ReLU + 2x2 max-pool.

    x_ref: (4, mt, K)  bf16 -- 4 = the four positions of each 2x2 pooling window
    w_ref: (K, Np)     bf16 -- Np = cout padded to 128 (lane-dense MXU operand)
    b_ref: (1, Np)     f32
    o_ref: (mt, cout)  bf16 -- true channel width, no N over-padding
    """
    g, mt, k = x_ref.shape
    cout = o_ref.shape[1]
    # One MXU pass over all 4 pool positions: RHS pushed once, vmatmuls
    # back-to-back.  The leading-dim collapse is tile-aligned (mt % 32 == 0).
    x = x_ref[...].reshape(g * mt, k)
    y = jnp.dot(x, w_ref[...], preferred_element_type=jnp.float32)   # (4*mt, Np) f32
    # 2x2 max-pool = tree-max of the 4 aligned row-slabs (VPU epilogue).
    m = jnp.maximum(jnp.maximum(y[0 * mt:1 * mt], y[1 * mt:2 * mt]),
                    jnp.maximum(y[2 * mt:3 * mt], y[3 * mt:4 * mt]))
    # max(relu(x_j@w + b)) == relu(max_j(x_j@w) + b)  (ReLU monotone, shared bias)
    m = jnp.maximum(m + b_ref[...], 0.0)
    o_ref[...] = m[:, :cout].astype(o_ref.dtype)


def _fc_stack_kernel(x_ref, w1_ref, b1_ref, w2_ref, b2_ref, w3_ref, b3_ref, o_ref):
    """relu(relu(x@w1+b1)@w2+b2)@w3+b3 fused; intermediates never leave VMEM."""
    h = jnp.dot(x_ref[...], w1_ref[...], preferred_element_type=jnp.float32)
    h = jnp.maximum(h + b1_ref[...], 0.0).astype(jnp.bfloat16)
    h = jnp.dot(h, w2_ref[...], preferred_element_type=jnp.float32)
    h = jnp.maximum(h + b2_ref[...], 0.0).astype(jnp.bfloat16)
    h = jnp.dot(h, w3_ref[...], preferred_element_type=jnp.float32)
    o_ref[...] = (h + b3_ref[...]).astype(o_ref.dtype)


# ---------------------------------------------------------------------------
# Wrappers
# ---------------------------------------------------------------------------
def conv_relu_pool(x, wmat, bmat, *, kh, kw, cout, m_tile=M_TILE):
    """x: NHWC (B,H,W,Cin). Valid KhxKw conv (stride 1) + bias + ReLU + 2x2/2 max-pool.

    wmat: (K, Np) bf16 weight matrix, K ordered (kh, kw, cin), Np padded to 128.
    bmat: (1, Np) f32 bias.  Returns NHWC pooled output (B, Hp, Wp, cout) in bf16.
    """
    B, H, W, Cin = x.shape
    Ho, Wo = H - kh + 1, W - kw + 1
    Hp, Wp = Ho // 2, Wo // 2
    K = kh * kw * Cin
    Np = wmat.shape[1]
    Mp = B * Hp * Wp

    x = x.astype(jnp.bfloat16)

    # Build the pool-grouped im2col DIRECTLY from x with strided slices: one
    # materialized HBM tensor (no cols -> groups copy).  Rows ordered (b,hp,wp),
    # columns ordered (kh,kw,cin) to match the packed weight.  K left unpadded.
    def pool_group(dy, dx):
        taps = [x[:, i + dy:i + dy + Ho:2, j + dx:j + dx + Wo:2, :]
                for i in range(kh) for j in range(kw)]
        return jnp.concatenate(taps, axis=-1).reshape(Mp, K)

    groups = jnp.stack([pool_group(dy, dx) for dy in (0, 1) for dx in (0, 1)],
                       axis=0)                                   # (4, Mp, K) bf16

    mt = _choose_mt(Mp, m_tile)
    Mpad = _round_up(Mp, mt)
    if Mpad != Mp:
        groups = jnp.pad(groups, ((0, 0), (0, Mpad - Mp), (0, 0)))

    out = pl.pallas_call(
        _conv_relu_pool_kernel,
        out_shape=jax.ShapeDtypeStruct((Mpad, cout), jnp.bfloat16),
        grid=(Mpad // mt,),
        in_specs=[
            pl.BlockSpec((4, mt, K), lambda i: (0, i, 0)),
            pl.BlockSpec((K, Np), lambda i: (0, 0)),
            pl.BlockSpec((1, Np), lambda i: (0, 0)),
        ],
        out_specs=pl.BlockSpec((mt, cout), lambda i: (i, 0)),
        compiler_params=pltpu.CompilerParams(
            dimension_semantics=("parallel",),
            vmem_limit_bytes=VMEM_LIMIT),
    )(groups, wmat, bmat)
    return out[:Mp].reshape(B, Hp, Wp, cout)


def fc_stack(x, fc, *, m_tile=M_TILE):
    """Fused fc1(+relu) -> fc2(+relu) -> fc3. Weights pre-padded / bf16."""
    B, K = x.shape
    out_dim = fc["w3"].shape[1]
    x = x.astype(jnp.bfloat16)

    mt = _choose_mt(B, m_tile)
    Mpad = _round_up(B, mt)
    if Mpad != B:
        x = jnp.pad(x, ((0, Mpad - B), (0, 0)))

    out = pl.pallas_call(
        _fc_stack_kernel,
        out_shape=jax.ShapeDtypeStruct((Mpad, out_dim), jnp.float32),
        grid=(Mpad // mt,),
        in_specs=[
            pl.BlockSpec((mt, K), lambda i: (i, 0)),
            pl.BlockSpec(fc["w1"].shape, lambda i: (0, 0)),
            pl.BlockSpec(fc["b1"].shape, lambda i: (0, 0)),
            pl.BlockSpec(fc["w2"].shape, lambda i: (0, 0)),
            pl.BlockSpec(fc["b2"].shape, lambda i: (0, 0)),
            pl.BlockSpec(fc["w3"].shape, lambda i: (0, 0)),
            pl.BlockSpec(fc["b3"].shape, lambda i: (0, 0)),
        ],
        out_specs=pl.BlockSpec((mt, out_dim), lambda i: (i, 0)),
        compiler_params=pltpu.CompilerParams(
            dimension_semantics=("parallel",),
            vmem_limit_bytes=VMEM_LIMIT),
    )(x, fc["w1"], fc["b1"], fc["w2"], fc["b2"], fc["w3"], fc["b3"])
    return out[:B]


# ---------------------------------------------------------------------------
# Parameters (deterministic, PyTorch-default-style uniform init, torch layouts)
# ---------------------------------------------------------------------------
def init_params(key):
    def uniform(k, shape, fan_in):
        bound = 1.0 / jnp.sqrt(jnp.float32(fan_in))
        return jax.random.uniform(k, shape, jnp.float32, -bound, bound)

    ks = jax.random.split(key, 10)
    return {
        "conv1_w": uniform(ks[0], (6, 3, 5, 5), 3 * 5 * 5),
        "conv1_b": uniform(ks[1], (6,), 3 * 5 * 5),
        "conv2_w": uniform(ks[2], (16, 6, 5, 5), 6 * 5 * 5),
        "conv2_b": uniform(ks[3], (16,), 6 * 5 * 5),
        "fc1_w": uniform(ks[4], (120, 16 * 5 * 5), 16 * 5 * 5),
        "fc1_b": uniform(ks[5], (120,), 16 * 5 * 5),
        "fc2_w": uniform(ks[6], (84, 120), 120),
        "fc2_b": uniform(ks[7], (84,), 120),
        "fc3_w": uniform(ks[8], (10, 84), 84),
        "fc3_b": uniform(ks[9], (10,), 84),
    }


def prepare_params(params):
    """One-time layout prep: transpose / reorder / N-pad to 128 / cast weights to
    bf16 (biases stay f32 for the f32 epilogue). No K padding (kept unpadded)."""
    def pad_n(a, cols):
        return jnp.pad(a, ((0, 0), (0, cols - a.shape[1])))

    def pad_k(a, rows):
        return jnp.pad(a, ((0, rows - a.shape[0]), (0, 0)))

    def conv_pack(w, b):
        cout, cin, kh, kw = w.shape
        k = kh * kw * cin
        np_ = _round_up(cout, LANE)
        wmat = w.transpose(2, 3, 1, 0).reshape(k, cout)      # K ordered (kh, kw, cin)
        return {"w": pad_n(wmat, np_).astype(jnp.bfloat16),
                "b": pad_n(b.reshape(1, cout), np_).astype(jnp.float32)}

    # fc1 consumes the NHWC flatten (h, w, c); reorder its torch (c, h, w) columns.
    w1 = (params["fc1_w"].reshape(120, 16, 5, 5)
          .transpose(0, 2, 3, 1).reshape(120, 400).T)        # (400, 120)
    w2 = params["fc2_w"].T                                   # (120, 84)
    w3 = params["fc3_w"].T                                   # (84, 10)
    fc = {
        "w1": pad_n(w1, LANE).astype(jnp.bfloat16),                       # (400, 128)
        "b1": pad_n(params["fc1_b"].reshape(1, -1), LANE).astype(jnp.float32),
        "w2": pad_k(pad_n(w2, LANE), LANE).astype(jnp.bfloat16),          # (128, 128)
        "b2": pad_n(params["fc2_b"].reshape(1, -1), LANE).astype(jnp.float32),
        "w3": pad_k(w3, LANE).astype(jnp.bfloat16),                       # (128, 10)
        "b3": params["fc3_b"].reshape(1, -1).astype(jnp.float32),         # (1, 10)
    }
    return {"conv1": conv_pack(params["conv1_w"], params["conv1_b"]),
            "conv2": conv_pack(params["conv2_w"], params["conv2_b"]),
            "fc": fc}


# ---------------------------------------------------------------------------
# Forward pass (mirrors Net.forward)
# ---------------------------------------------------------------------------
def net_forward(prep, x_nchw):
    x = jnp.transpose(x_nchw, (0, 2, 3, 1)).astype(jnp.bfloat16)  # NCHW -> NHWC once
    x = conv_relu_pool(x, prep["conv1"]["w"], prep["conv1"]["b"],
                       kh=5, kw=5, cout=6)                        # (B, 14, 14, 6)
    x = conv_relu_pool(x, prep["conv2"]["w"], prep["conv2"]["b"],
                       kh=5, kw=5, cout=16)                       # (B, 5, 5, 16)
    x = x.reshape(x.shape[0], 5 * 5 * 16)                         # NHWC flatten
    return fc_stack(x, prep["fc"])                                # (B, 10) f32


if __name__ == "__main__":
    key = jax.random.PRNGKey(0)
    pkey, xkey = jax.random.split(key)
    params = init_params(pkey)
    prep = prepare_params(params)   # one-time weight layout prep, outside hot path
    # Input shape implied by the module: 3x32x32 images (16*5*5 flatten after two conv+pool).
    x = jax.random.normal(xkey, (2, 3, 32, 32), dtype=jnp.float32)
    fwd = jax.jit(net_forward)
    out = jax.block_until_ready(fwd(prep, x))
    assert out.shape == (2, 10) and out.dtype == jnp.float32
    print("KERNEL_OK")
</pallas_src>

<mosaic_0001>
module attributes {stable_mosaic.version = 11 : i64} {
  func.func @_conv_relu_pool_kernel(%arg0: i32, %arg1: memref<4x224x75xbf16, #tpu.memory_space<vmem>>, %arg2: memref<75x128xbf16, #tpu.memory_space<vmem>>, %arg3: memref<1x128xf32, #tpu.memory_space<vmem>>, %arg4: memref<224x6xbf16, #tpu.memory_space<vmem>>) attributes {dimension_semantics = [#tpu.dimension_semantics<parallel>], iteration_bounds = array<i64: 2>, scalar_prefetch = 0 : i64, scratch_operands = 0 : i64, tpu.core_type = #tpu.core_type<tc>, window_params = [{transform_indices = @transform_0, window_bounds = array<i64: 4, 224, 75>}, {pipeline_mode = #tpu.pipeline_mode<synchronous>, transform_indices = @transform_1, window_bounds = array<i64: 75, 128>}, {pipeline_mode = #tpu.pipeline_mode<synchronous>, transform_indices = @transform_2, window_bounds = array<i64: 1, 128>}, {transform_indices = @transform_3, window_bounds = array<i64: 224, 6>}]} {
    %c0 = arith.constant 0 : index
    %c0_0 = arith.constant 0 : index
    %c0_1 = arith.constant 0 : index
    %0 = vector.load %arg1[%c0, %c0_0, %c0_1] : memref<4x224x75xbf16, #tpu.memory_space<vmem>>, vector<4x224x75xbf16>
    %1 = vector.shape_cast %0 : vector<4x224x75xbf16> to vector<896x75xbf16>
    %c0_2 = arith.constant 0 : index
    %c0_3 = arith.constant 0 : index
    %2 = vector.load %arg2[%c0_2, %c0_3] : memref<75x128xbf16, #tpu.memory_space<vmem>>, vector<75x128xbf16>
    %cst = arith.constant dense<0.000000e+00> : vector<896x128xf32>
    %3 = tpu.matmul %1, %2, %cst {dimension_numbers = #tpu.dot_dimension_numbers<[1], [0], [0], [1], [0, 0, 1, 1], [], []>} : vector<896x75xbf16>, vector<75x128xbf16>, vector<896x128xf32> -> vector<896x128xf32>
    %4 = vector.extract_strided_slice %3 {offsets = [0, 0], sizes = [224, 128], strides = [1, 1]} : vector<896x128xf32> to vector<224x128xf32>
    %5 = vector.extract_strided_slice %3 {offsets = [224, 0], sizes = [224, 128], strides = [1, 1]} : vector<896x128xf32> to vector<224x128xf32>
    %6 = arith.maximumf %4, %5 : vector<224x128xf32>
    %7 = vector.extract_strided_slice %3 {offsets = [448, 0], sizes = [224, 128], strides = [1, 1]} : vector<896x128xf32> to vector<224x128xf32>
    %8 = vector.extract_strided_slice %3 {offsets = [672, 0], sizes = [224, 128], strides = [1, 1]} : vector<896x128xf32> to vector<224x128xf32>
    %9 = arith.maximumf %7, %8 : vector<224x128xf32>
    %10 = arith.maximumf %6, %9 : vector<224x128xf32>
    %c0_4 = arith.constant 0 : index
    %c0_5 = arith.constant 0 : index
    %11 = vector.load %arg3[%c0_4, %c0_5] : memref<1x128xf32, #tpu.memory_space<vmem>>, vector<1x128xf32>
    %12 = vector.broadcast %11 : vector<1x128xf32> to vector<224x128xf32>
    %13 = arith.addf %10, %12 : vector<224x128xf32>
    %cst_6 = arith.constant 0.000000e+00 : f32
    %14 = vector.broadcast %cst_6 : f32 to vector<224x128xf32>
    %15 = arith.maximumf %13, %14 : vector<224x128xf32>
    %16 = vector.extract_strided_slice %15 {offsets = [0, 0], sizes = [224, 6], strides = [1, 1]} : vector<224x128xf32> to vector<224x6xf32>
    %17 = arith.truncf %16 : vector<224x6xf32> to vector<224x6xbf16>
    %c0_7 = arith.constant 0 : index
    %c0_8 = arith.constant 0 : index
    %18 = vector.load %arg4[%c0_7, %c0_8] : memref<224x6xbf16, #tpu.memory_space<vmem>>, vector<224x6xbf16>
    tpu.vector_store %arg4[%c0_7, %c0_8], %17 {strides = array<i32>} : memref<224x6xbf16, #tpu.memory_space<vmem>>, vector<224x6xbf16>,
    return
  }
  func.func @transform_0(%arg0: i32) -> (i32, i32, i32) {
    %c0_i32 = arith.constant 0 : i32
    %c0_i32_0 = arith.constant 0 : i32
    %c0_i32_1 = arith.constant 0 : i32
    return %c0_i32, %arg0, %c0_i32_0 : i32, i32, i32
  }
  func.func @transform_1(%arg0: i32) -> (i32, i32) {
    %c0_i32 = arith.constant 0 : i32
    %c0_i32_0 = arith.constant 0 : i32
    %c0_i32_1 = arith.constant 0 : i32
    return %c0_i32, %c0_i32_0 : i32, i32
  }
  func.func @transform_2(%arg0: i32) -> (i32, i32) {
    %c0_i32 = arith.constant 0 : i32
    %c0_i32_0 = arith.constant 0 : i32
    %c0_i32_1 = arith.constant 0 : i32
    return %c0_i32, %c0_i32_0 : i32, i32
  }
  func.func @transform_3(%arg0: i32) -> (i32, i32) {
    %c0_i32 = arith.constant 0 : i32
    %c0_i32_0 = arith.constant 0 : i32
    return %arg0, %c0_i32 : i32, i32
  }
}

module attributes {stable_mosaic.version = 11 : i64} {
  func.func @_conv_relu_pool_kernel(%arg0: i32, %arg1: memref<4x32x150xbf16, #tpu.memory_space<vmem>>, %arg2: memref<150x128xbf16, #tpu.memory_space<vmem>>, %arg3: memref<1x128xf32, #tpu.memory_space<vmem>>, %arg4: memref<32x16xbf16, #tpu.memory_space<vmem>>) attributes {dimension_semantics = [#tpu.dimension_semantics<parallel>], iteration_bounds = array<i64: 2>, scalar_prefetch = 0 : i64, scratch_operands = 0 : i64, tpu.core_type = #tpu.core_type<tc>, window_params = [{transform_indices = @transform_0, window_bounds = array<i64: 4, 32, 150>}, {pipeline_mode = #tpu.pipeline_mode<synchronous>, transform_indices = @transform_1, window_bounds = array<i64: 150, 128>}, {pipeline_mode = #tpu.pipeline_mode<synchronous>, transform_indices = @transform_2, window_bounds = array<i64: 1, 128>}, {transform_indices = @transform_3, window_bounds = array<i64: 32, 16>}]} {
    %c0 = arith.constant 0 : index
    %c0_0 = arith.constant 0 : index
    %c0_1 = arith.constant 0 : index
    %0 = vector.load %arg1[%c0, %c0_0, %c0_1] : memref<4x32x150xbf16, #tpu.memory_space<vmem>>, vector<4x32x150xbf16>
    %1 = vector.shape_cast %0 : vector<4x32x150xbf16> to vector<128x150xbf16>
    %c0_2 = arith.constant 0 : index
    %c0_3 = arith.constant 0 : index
    %2 = vector.load %arg2[%c0_2, %c0_3] : memref<150x128xbf16, #tpu.memory_space<vmem>>, vector<150x128xbf16>
    %cst = arith.constant dense<0.000000e+00> : vector<128x128xf32>
    %3 = tpu.matmul %1, %2, %cst {dimension_numbers = #tpu.dot_dimension_numbers<[1], [0], [0], [1], [0, 0, 1, 1], [], []>} : vector<128x150xbf16>, vector<150x128xbf16>, vector<128x128xf32> -> vector<128x128xf32>
    %4 = vector.extract_strided_slice %3 {offsets = [0, 0], sizes = [32, 128], strides = [1, 1]} : vector<128x128xf32> to vector<32x128xf32>
    %5 = vector.extract_strided_slice %3 {offsets = [32, 0], sizes = [32, 128], strides = [1, 1]} : vector<128x128xf32> to vector<32x128xf32>
    %6 = arith.maximumf %4, %5 : vector<32x128xf32>
    %7 = vector.extract_strided_slice %3 {offsets = [64, 0], sizes = [32, 128], strides = [1, 1]} : vector<128x128xf32> to vector<32x128xf32>
    %8 = vector.extract_strided_slice %3 {offsets = [96, 0], sizes = [32, 128], strides = [1, 1]} : vector<128x128xf32> to vector<32x128xf32>
    %9 = arith.maximumf %7, %8 : vector<32x128xf32>
    %10 = arith.maximumf %6, %9 : vector<32x128xf32>
    %c0_4 = arith.constant 0 : index
    %c0_5 = arith.constant 0 : index
    %11 = vector.load %arg3[%c0_4, %c0_5] : memref<1x128xf32, #tpu.memory_space<vmem>>, vector<1x128xf32>
    %12 = vector.broadcast %11 : vector<1x128xf32> to vector<32x128xf32>
    %13 = arith.addf %10, %12 : vector<32x128xf32>
    %cst_6 = arith.constant 0.000000e+00 : f32
    %14 = vector.broadcast %cst_6 : f32 to vector<32x128xf32>
    %15 = arith.maximumf %13, %14 : vector<32x128xf32>
    %16 = vector.extract_strided_slice %15 {offsets = [0, 0], sizes = [32, 16], strides = [1, 1]} : vector<32x128xf32> to vector<32x16xf32>
    %17 = arith.truncf %16 : vector<32x16xf32> to vector<32x16xbf16>
    %c0_7 = arith.constant 0 : index
    %c0_8 = arith.constant 0 : index
    %18 = vector.load %arg4[%c0_7, %c0_8] : memref<32x16xbf16, #tpu.memory_space<vmem>>, vector<32x16xbf16>
    tpu.vector_store %arg4[%c0_7, %c0_8], %17 {strides = array<i32>} : memref<32x16xbf16, #tpu.memory_space<vmem>>, vector<32x16xbf16>,
    return
  }
  func.func @transform_0(%arg0: i32) -> (i32, i32, i32) {
    %c0_i32 = arith.constant 0 : i32
    %c0_i32_0 = arith.constant 0 : i32
    %c0_i32_1 = arith.constant 0 : i32
    return %c0_i32, %arg0, %c0_i32_0 : i32, i32, i32
  }
  func.func @transform_1(%arg0: i32) -> (i32, i32) {
    %c0_i32 = arith.constant 0 : i32
    %c0_i32_0 = arith.constant 0 : i32
    %c0_i32_1 = arith.constant 0 : i32
    return %c0_i32, %c0_i32_0 : i32, i32
  }
  func.func @transform_2(%arg0: i32) -> (i32, i32) {
    %c0_i32 = arith.constant 0 : i32
    %c0_i32_0 = arith.constant 0 : i32
    %c0_i32_1 = arith.constant 0 : i32
    return %c0_i32, %c0_i32_0 : i32, i32
  }
  func.func @transform_3(%arg0: i32) -> (i32, i32) {
    %c0_i32 = arith.constant 0 : i32
    %c0_i32_0 = arith.constant 0 : i32
    return %arg0, %c0_i32 : i32, i32
  }
}

module attributes {stable_mosaic.version = 11 : i64} {
  func.func @_fc_stack_kernel(%arg0: i32, %arg1: memref<32x400xbf16, #tpu.memory_space<vmem>>, %arg2: memref<400x128xbf16, #tpu.memory_space<vmem>>, %arg3: memref<1x128xf32, #tpu.memory_space<vmem>>, %arg4: memref<128x128xbf16, #tpu.memory_space<vmem>>, %arg5: memref<1x128xf32, #tpu.memory_space<vmem>>, %arg6: memref<128x10xbf16, #tpu.memory_space<vmem>>, %arg7: memref<1x10xf32, #tpu.memory_space<vmem>>, %arg8: memref<32x10xf32, #tpu.memory_space<vmem>>) attributes {dimension_semantics = [#tpu.dimension_semantics<parallel>], iteration_bounds = array<i64: 1>, scalar_prefetch = 0 : i64, scratch_operands = 0 : i64, tpu.core_type = #tpu.core_type<tc>, window_params = [{transform_indices = @transform_0, window_bounds = array<i64: 32, 400>}, {pipeline_mode = #tpu.pipeline_mode<synchronous>, transform_indices = @transform_1, window_bounds = array<i64: 400, 128>}, {pipeline_mode = #tpu.pipeline_mode<synchronous>, transform_indices = @transform_2, window_bounds = array<i64: 1, 128>}, {pipeline_mode = #tpu.pipeline_mode<synchronous>, transform_indices = @transform_3, window_bounds = array<i64: 128, 128>}, {pipeline_mode = #tpu.pipeline_mode<synchronous>, transform_indices = @transform_4, window_bounds = array<i64: 1, 128>}, {pipeline_mode = #tpu.pipeline_mode<synchronous>, transform_indices = @transform_5, window_bounds = array<i64: 128, 10>}, {pipeline_mode = #tpu.pipeline_mode<synchronous>, transform_indices = @transform_6, window_bounds = array<i64: 1, 10>}, {transform_indices = @transform_7, window_bounds = array<i64: 32, 10>}]} {
    %c0 = arith.constant 0 : index
    %c0_0 = arith.constant 0 : index
    %0 = vector.load %arg1[%c0, %c0_0] : memref<32x400xbf16, #tpu.memory_space<vmem>>, vector<32x400xbf16>
    %c0_1 = arith.constant 0 : index
    %c0_2 = arith.constant 0 : index
    %1 = vector.load %arg2[%c0_1, %c0_2] : memref<400x128xbf16, #tpu.memory_space<vmem>>, vector<400x128xbf16>
    %cst = arith.constant dense<0.000000e+00> : vector<32x128xf32>
    %2 = tpu.matmul %0, %1, %cst {dimension_numbers = #tpu.dot_dimension_numbers<[1], [0], [0], [1], [0, 0, 1, 1], [], []>} : vector<32x400xbf16>, vector<400x128xbf16>, vector<32x128xf32> -> vector<32x128xf32>
    %c0_3 = arith.constant 0 : index
    %c0_4 = arith.constant 0 : index
    %3 = vector.load %arg3[%c0_3, %c0_4] : memref<1x128xf32, #tpu.memory_space<vmem>>, vector<1x128xf32>
    %4 = vector.broadcast %3 : vector<1x128xf32> to vector<32x128xf32>
    %5 = arith.addf %2, %4 : vector<32x128xf32>
    %cst_5 = arith.constant 0.000000e+00 : f32
    %6 = vector.broadcast %cst_5 : f32 to vector<32x128xf32>
    %7 = arith.maximumf %5, %6 : vector<32x128xf32>
    %8 = arith.truncf %7 : vector<32x128xf32> to vector<32x128xbf16>
    %c0_6 = arith.constant 0 : index
    %c0_7 = arith.constant 0 : index
    %9 = vector.load %arg4[%c0_6, %c0_7] : memref<128x128xbf16, #tpu.memory_space<vmem>>, vector<128x128xbf16>
    %cst_8 = arith.constant dense<0.000000e+00> : vector<32x128xf32>
    %10 = tpu.matmul %8, %9, %cst_8 {dimension_numbers = #tpu.dot_dimension_numbers<[1], [0], [0], [1], [0, 0, 1, 1], [], []>} : vector<32x128xbf16>, vector<128x128xbf16>, vector<32x128xf32> -> vector<32x128xf32>
    %c0_9 = arith.constant 0 : index
    %c0_10 = arith.constant 0 : index
    %11 = vector.load %arg5[%c0_9, %c0_10] : memref<1x128xf32, #tpu.memory_space<vmem>>, vector<1x128xf32>
    %12 = vector.broadcast %11 : vector<1x128xf32> to vector<32x128xf32>
    %13 = arith.addf %10, %12 : vector<32x128xf32>
    %cst_11 = arith.constant 0.000000e+00 : f32
    %14 = vector.broadcast %cst_11 : f32 to vector<32x128xf32>
    %15 = arith.maximumf %13, %14 : vector<32x128xf32>
    %16 = arith.truncf %15 : vector<32x128xf32> to vector<32x128xbf16>
    %c0_12 = arith.constant 0 : index
    %c0_13 = arith.constant 0 : index
    %17 = vector.load %arg6[%c0_12, %c0_13] : memref<128x10xbf16, #tpu.memory_space<vmem>>, vector<128x10xbf16>
    %cst_14 = arith.constant dense<0.000000e+00> : vector<32x10xf32>
    %18 = tpu.matmul %16, %17, %cst_14 {dimension_numbers = #tpu.dot_dimension_numbers<[1], [0], [0], [1], [0, 0, 1, 1], [], []>} : vector<32x128xbf16>, vector<128x10xbf16>, vector<32x10xf32> -> vector<32x10xf32>
    %c0_15 = arith.constant 0 : index
    %c0_16 = arith.constant 0 : index
    %19 = vector.load %arg7[%c0_15, %c0_16] : memref<1x10xf32, #tpu.memory_space<vmem>>, vector<1x10xf32>
    %20 = vector.broadcast %19 : vector<1x10xf32> to vector<32x10xf32>
    %21 = arith.addf %18, %20 : vector<32x10xf32>
    %c0_17 = arith.constant 0 : index
    %c0_18 = arith.constant 0 : index
    %22 = vector.load %arg8[%c0_17, %c0_18] : memref<32x10xf32, #tpu.memory_space<vmem>>, vector<32x10xf32>
    tpu.vector_store %arg8[%c0_17, %c0_18], %21 {strides = array<i32>} : memref<32x10xf32, #tpu.memory_space<vmem>>, vector<32x10xf32>,
    return
  }
  func.func @transform_0(%arg0: i32) -> (i32, i32) {
    %c0_i32 = arith.constant 0 : i32
    %c0_i32_0 = arith.constant 0 : i32
    return %arg0, %c0_i32 : i32, i32
  }
  func.func @transform_1(%arg0: i32) -> (i32, i32) {
    %c0_i32 = arith.constant 0 : i32
    %c0_i32_0 = arith.constant 0 : i32
    %c0_i32_1 = arith.constant 0 : i32
    return %c0_i32, %c0_i32_0 : i32, i32
  }
  func.func @transform_2(%arg0: i32) -> (i32, i32) {
    %c0_i32 = arith.constant 0 : i32
    %c0_i32_0 = arith.constant 0 : i32
    %c0_i32_1 = arith.constant 0 : i32
    return %c0_i32, %c0_i32_0 : i32, i32
  }
  func.func @transform_3(%arg0: i32) -> (i32, i32) {
    %c0_i32 = arith.constant 0 : i32
    %c0_i32_0 = arith.constant 0 : i32
    %c0_i32_1 = arith.constant 0 : i32
    return %c0_i32, %c0_i32_0 : i32, i32
  }
  func.func @transform_4(%arg0: i32) -> (i32, i32) {
    %c0_i32 = arith.constant 0 : i32
    %c0_i32_0 = arith.constant 0 : i32
    %c0_i32_1 = arith.constant 0 : i32
    return %c0_i32, %c0_i32_0 : i32, i32
  }
  func.func @transform_5(%arg0: i32) -> (i32, i32) {
    %c0_i32 = arith.constant 0 : i32
    %c0_i32_0 = arith.constant 0 : i32
    %c0_i32_1 = arith.constant 0 : i32
    return %c0_i32, %c0_i32_0 : i32, i32
  }
  func.func @transform_6(%arg0: i32) -> (i32, i32) {
    %c0_i32 = arith.constant 0 : i32
    %c0_i32_0 = arith.constant 0 : i32
    %c0_i32_1 = arith.constant 0 : i32
    return %c0_i32, %c0_i32_0 : i32, i32
  }
  func.func @transform_7(%arg0: i32) -> (i32, i32) {
    %c0_i32 = arith.constant 0 : i32
    %c0_i32_0 = arith.constant 0 : i32
    return %arg0, %c0_i32 : i32, i32
  }
}

</mosaic_0001>

<llo_original>
// kernel: net_forward.3
$region0: #{net_forward.3}
  #allocation0 [shape = 'u32[]', space=smem, size = 0x4, offset = 0x4, fixed_abs, tag = 'smem constant byte address 0x4 - core index']
  #allocation1 [shape = 'u32[144,128]{1,0:T(1,128)}', space=vmem, size = 0x12000, scoped, tag = 'internal scratch']
  %s0 = inlined_call_operand.vmem [shape: bf16[4,448,75], index: 0, kind: input, shape index: {}]
  %s1 = inlined_call_operand.vmem [shape: bf16[75,128], index: 1, kind: input, shape index: {}]
  %s2 = inlined_call_operand.vmem [shape: f32[1,128], index: 2, kind: input, shape index: {}]
  %s3 = inlined_call_operand.vmem [shape: bf16[448,6], index: 3, kind: output, shape index: {}]
  %s4 = sld [smem:[#allocation0]]
  $region86: #{net_forward.3} parent=0
    _
  %s6 = ssub.s32 1, %s4
  %s7 = scalar_select 0, %s6, %s4
  $region1: #{net_forward.3} parent=0
    #allocation2 [shape = 'u8[458752]{0}', space=vmem, size = 0x70000, scoped, tag = 'input window, operand 0']
    loop: start=0, step=1, limit=4
    $region2: #{net_forward.3} parent=1 // loop_pre_header
      _
    $region3: #{net_forward.3} parent=1 // loop_header
      %s9 = sphi 0, %s13
      %p10 = scmp.ge.s32.totalorder %s9, 4
      %s19 = sphi 0, %s21
      %s22 = sphi 0, %s19
      %s23 = sphi 0, %s22
      %s39 = sphi 0, %s23
      %s43 = sphi 0, %s43
      %s45 = sphi 0, %s43
      %s46 = sphi 0, %s45
      %s60 = sphi 0, %s46
      %s64 = sphi 0, %s64
      %s66 = sphi 0, %s64
      %s67 = sphi 0, %s66
      %s81 = sphi 0, %s67
      %s87 = sphi 0, %s89
      %s90 = sphi 0, %s87
      %s91 = sphi 0, %s90
      %s107 = sphi 0, %s91
    $region4: #{net_forward.3} parent=1 // loop_header_branch
      %12 = sbr.rel (%p10) target = $region8
    $region5: #{net_forward.3} parent=1 // loop_body
      %s14 = ssub.s32 %s9, 1
      %s15 = ssub.s32 %s9, 2
      %s16 = sadd.s32 %s9, 1
      %s17 = ssub.s32 %s9, %s16
      %p18 = scmp.eq.s32.totalorder %s17, 0
      %s20 = sadd.s32 %s19, 1
      %s21 = scalar_select %p18, %s19, %s20
      %p24 = pneg %p18
      %p25 = scmp.eq.s32.totalorder %s9, 1
      %p26 = por %p24, %p25
      %p27 = scmp.ne.s32.totalorder %s19, %s22
      %p28 = scmp.eq.s32.totalorder %s9, 0
      %p29 = por %p27, %p28
      %p30 = scmp.ne.s32.totalorder %s19, %s22
      %p31 = scmp.eq.s32.totalorder %s14, 1
      %p32 = por %p30, %p31
      %p33 = scmp.ne.s32.totalorder %s22, %s23
      %p34 = scmp.eq.s32.totalorder %s14, 0
      %p35 = por %p33, %p34
      %p36 = scmp.ne.s32.totalorder %s22, %s23
      %p37 = scmp.eq.s32.totalorder %s15, 1
      %p38 = por %p36, %p37
      %p40 = scmp.ne.s32.totalorder %s23, %s39
      %p41 = scmp.eq.s32.totalorder %s15, 0
      %p42 = por %p40, %p41
      %s44 = sadd.s32 %s43, 1
      %p47 = scmp.eq.s32.totalorder %s9, 1
      %p48 = scmp.ne.s32.totalorder %s43, %s45
      %p49 = scmp.eq.s32.totalorder %s9, 0
      %p50 = por %p48, %p49
      %p51 = scmp.ne.s32.totalorder %s43, %s45
      %p52 = scmp.eq.s32.totalorder %s14, 1
      %p53 = por %p51, %p52
      %p54 = scmp.ne.s32.totalorder %s45, %s46
      %p55 = scmp.eq.s32.totalorder %s14, 0
      %p56 = por %p54, %p55
      %p57 = scmp.ne.s32.totalorder %s45, %s46
      %p58 = scmp.eq.s32.totalorder %s15, 1
      %p59 = por %p57, %p58
      %p61 = scmp.ne.s32.totalorder %s46, %s60
      %p62 = scmp.eq.s32.totalorder %s15, 0
      %p63 = por %p61, %p62
      %s65 = sadd.s32 %s64, 1
      %p68 = scmp.eq.s32.totalorder %s9, 1
      %p69 = scmp.ne.s32.totalorder %s64, %s66
      %p70 = scmp.eq.s32.totalorder %s9, 0
      %p71 = por %p69, %p70
      %p72 = scmp.ne.s32.totalorder %s64, %s66
      %p73 = scmp.eq.s32.totalorder %s14, 1
      %p74 = por %p72, %p73
      %p75 = scmp.ne.s32.totalorder %s66, %s67
      %p76 = scmp.eq.s32.totalorder %s14, 0
      %p77 = por %p75, %p76
      %p78 = scmp.ne.s32.totalorder %s66, %s67
      %p79 = scmp.eq.s32.totalorder %s15, 1
      %p80 = por %p78, %p79
      %p82 = scmp.ne.s32.totalorder %s67, %s81
      %p83 = scmp.eq.s32.totalorder %s15, 0
      %p84 = por %p82, %p83
      %s85 = ssub.s32 %s9, %s16
      %p86 = scmp.eq.s32.totalorder %s85, 0
      %s88 = sadd.s32 %s87, 1
      %s89 = scalar_select %p86, %s87, %s88
      %p92 = pneg %p86
      %p93 = scmp.eq.s32.totalorder %s9, 1
      %p94 = por %p92, %p93
      %p95 = scmp.ne.s32.totalorder %s87, %s90
      %p96 = scmp.eq.s32.totalorder %s9, 0
      %p97 = por %p95, %p96
      %p98 = scmp.ne.s32.totalorder %s87, %s90
      %p99 = scmp.eq.s32.totalorder %s14, 1
      %p100 = por %p98, %p99
      %p101 = scmp.ne.s32.totalorder %s90, %s91
      %p102 = scmp.eq.s32.totalorder %s14, 0
      %p103 = por %p101, %p102
      %p104 = scmp.ne.s32.totalorder %s90, %s91
      %p105 = scmp.eq.s32.totalorder %s15, 1
      %p106 = por %p104, %p105
      %p108 = scmp.ne.s32.totalorder %s91, %s107
      %p109 = scmp.eq.s32.totalorder %s15, 0
      %p110 = por %p108, %p109
      %p111 = scmp.le.s32.totalorder 1, %s9
      %p112 = scmp.lt.s32.totalorder %s9, 3
      %p113 = pnand %p111, %p112
      %p114 = pneg %p113
      // Predicated region
      $region9: #{net_forward.3} parent=5 // pred_check
        _
      $region10: #{net_forward.3} parent=5 // pred_check_branch
        %116 = sbr.rel (%p113) target = $region12
      $region11: #{net_forward.3} parent=5 // pred_region
        %s117 = ssub.s32 %s9, 1
        // Predicated region
        $region13: #{net_forward.3} parent=11 // pred_check
          %p118 = pneg %p56
        $region14: #{net_forward.3} parent=11 // pred_check_branch
          %120 = sbr.rel (%p118) target = $region16
        $region15: #{net_forward.3} parent=11 // pred_region
          _
        $region16: #{net_forward.3} parent=11 // pred_fallthru
          _
        // Predicated region
        $region17: #{net_forward.3} parent=11 // pred_check
          %p121 = pneg %p77
        $region18: #{net_forward.3} parent=11 // pred_check_branch
          %123 = sbr.rel (%p121) target = $region20
        $region19: #{net_forward.3} parent=11 // pred_region
          _
        $region20: #{net_forward.3} parent=11 // pred_fallthru
          _
      $region12: #{net_forward.3} parent=5 // pred_fallthru
        _
      %p124 = scmp.lt.s32.totalorder %s9, 2
      // Predicated region
      $region21: #{net_forward.3} parent=5 // pred_check
        %p125 = pneg %p124
      $region22: #{net_forward.3} parent=5 // pred_check_branch
        %127 = sbr.rel (%p125) target = $region24
      $region23: #{net_forward.3} parent=5 // pred_region
        // Predicated region
        $region25: #{net_forward.3} parent=23 // pred_check
          %p128 = pneg %p29
        $region26: #{net_forward.3} parent=23 // pred_check_branch
          %130 = sbr.rel (%p128) target = $region28
        $region27: #{net_forward.3} parent=23 // pred_region
          %s131 = sand.u32 %s19, 1
          %s132 = sand.u32 %s19, 1
          %s133 = smul.addr %s132, 448
          %s134 = scalar_lea.vmem [#allocation2], %s133
          %s135 = smul.u32 28, %s9
          %s136 = smul.addr %s135, 4
          %s137 = scalar_lea.vmem %s0, %s136
          // Predicated region
          $region29: #{net_forward.3} parent=27 // pred_check
            _
          $region30: #{net_forward.3} parent=27 // pred_check_branch
            %139 = sbr.rel (0) target = $region32
          $region31: #{net_forward.3} parent=27 // pred_region
            // Predicated region
            $region33: #{net_forward.3} parent=31 // pred_check
              _
            $region34: #{net_forward.3} parent=31 // pred_check_branch
              %141 = sbr.rel target = $region36
            $region35: #{net_forward.3} parent=31 // pred_region
              // Predicated region
              $region48: #{net_forward.3} parent=35 // pred_check
                _
              $region49: #{net_forward.3} parent=35 // pred_check_branch
                %378 = sbr.rel (0) target = $region51
              $region50: #{net_forward.3} parent=35 // pred_region
                loop: start=0, step=1, limit=1
                $region52: #{net_forward.3} parent=50 // loop_pre_header
                  _
                $region53: #{net_forward.3} parent=50 // loop_header
                  %s380 = sphi 0, %s384
                  %p381 = scmp.ge.s32.totalorder %s380, 1
                  %s385 = sphi %s137, %s137
                  %s386 = sphi %s134, %s134
                $region54: #{net_forward.3} parent=50 // loop_header_branch
                  %383 = sbr.rel (%p381) target = $region58
                $region55: #{net_forward.3} parent=50 // loop_body
                  _
                $region56: #{net_forward.3} parent=50 // loop_footer
                  %s384 = sadd.s32 1, %s380
                $region57: #{net_forward.3} parent=50 // loop_footer_branch
                  %379 = sbr.rel target = $region53
                $region58: #{net_forward.3} parent=50 // loop_exit
                  _
                loop: start=0, step=1, limit=1
                $region59: #{net_forward.3} parent=50 // loop_pre_header
                  _
                $region60: #{net_forward.3} parent=50 // loop_header
                  %s389 = sphi 0, %s393
                  %p390 = scmp.ge.s32.totalorder %s389, 1
                  %s394 = sphi %s137, %s137
                  %s395 = sphi %s134, %s134
                $region61: #{net_forward.3} parent=50 // loop_header_branch
                  %392 = sbr.rel (%p390) target = $region65
                $region62: #{net_forward.3} parent=50 // loop_body
                  %v396 = vld [vmem:[%s394] sm:$0xf]
                  %397 = vst [vmem:[%s395] sm:$0xf] %v396
                  %v398 = vld [vmem:[%s394 + $0x4] sm:$0xf]
                  %399 = vst [vmem:[%s395 + $0x4] sm:$0xf] %v398
                  %v400 = vld [vmem:[%s394 + $0x8] sm:$0xf]
                  %401 = vst [vmem:[%s395 + $0x8] sm:$0xf] %v400
                  %v402 = vld [vmem:[%s394 + $0xc] sm:$0xf]
                  %403 = vst [vmem:[%s395 + $0xc] sm:$0xf] %v402
                  %v404 = vld [vmem:[%s394 + $0x10] sm:$0xf]
                  %405 = vst [vmem:[%s395 + $0x10] sm:$0xf] %v404
                  %v406 = vld [vmem:[%s394 + $0x14] sm:$0xf]
                  %407 = vst [vmem:[%s395 + $0x14] sm:$0xf] %v406
                  %v408 = vld [vmem:[%s394 + $0x18] sm:$0xf]
                  %409 = vst [vmem:[%s395 + $0x18] sm:$0xf] %v408
                  %v410 = vld [vmem:[%s394 + $0x1c] sm:$0xf]
                  %411 = vst [vmem:[%s395 + $0x1c] sm:$0xf] %v410
                  %v412 = vld [vmem:[%s394 + $0x20] sm:$0xf]
                  %413 = vst [vmem:[%s395 + $0x20] sm:$0xf] %v412
                  %v414 = vld [vmem:[%s394 + $0x24] sm:$0xf]
                  %415 = vst [vmem:[%s395 + $0x24] sm:$0xf] %v414
                  %v416 = vld [vmem:[%s394 + $0x28] sm:$0xf]
                  %417 = vst [vmem:[%s395 + $0x28] sm:$0xf] %v416
                  %v418 = vld [vmem:[%s394 + $0x2c] sm:$0xf]
                  %419 = vst [vmem:[%s395 + $0x2c] sm:$0xf] %v418
                  %v420 = vld [vmem:[%s394 + $0x30] sm:$0xf]
                  %421 = vst [vmem:[%s395 + $0x30] sm:$0xf] %v420
                  %v422 = vld [vmem:[%s394 + $0x34] sm:$0xf]
                  %423 = vst [vmem:[%s395 + $0x34] sm:$0xf] %v422
                  %v424 = vld [vmem:[%s394 + $0x38] sm:$0xf]
                  %425 = vst [vmem:[%s395 + $0x38] sm:$0xf] %v424
                  %v426 = vld [vmem:[%s394 + $0x3c] sm:$0xf]
                  %427 = vst [vmem:[%s395 + $0x3c] sm:$0xf] %v426
                  %v428 = vld [vmem:[%s394 + $0x40] sm:$0xf]
                  %429 = vst [vmem:[%s395 + $0x40] sm:$0xf] %v428
                  %v430 = vld [vmem:[%s394 + $0x44] sm:$0xf]
                  %431 = vst [vmem:[%s395 + $0x44] sm:$0xf] %v430
                  %v432 = vld [vmem:[%s394 + $0x48] sm:$0xf]
                  %433 = vst [vmem:[%s395 + $0x48] sm:$0xf] %v432
                  %v434 = vld [vmem:[%s394 + $0x4c] sm:$0xf]
                  %435 = vst [vmem:[%s395 + $0x4c] sm:$0xf] %v434
                  %v436 = vld [vmem:[%s394 + $0x50] sm:$0xf]
                  %437 = vst [vmem:[%s395 + $0x50] sm:$0xf] %v436
                  %v438 = vld [vmem:[%s394 + $0x54] sm:$0xf]
                  %439 = vst [vmem:[%s395 + $0x54] sm:$0xf] %v438
                  %v440 = vld [vmem:[%s394 + $0x58] sm:$0xf]
                  %441 = vst [vmem:[%s395 + $0x58] sm:$0xf] %v440
                  %v442 = vld [vmem:[%s394 + $0x5c] sm:$0xf]
                  %443 = vst [vmem:[%s395 + $0x5c] sm:$0xf] %v442
                  %v444 = vld [vmem:[%s394 + $0x60] sm:$0xf]
                  %445 = vst [vmem:[%s395 + $0x60] sm:$0xf] %v444
                  %v446 = vld [vmem:[%s394 + $0x64] sm:$0xf]
                  %447 = vst [vmem:[%s395 + $0x64] sm:$0xf] %v446
                  %v448 = vld [vmem:[%s394 + $0x68] sm:$0xf]
                  %449 = vst [vmem:[%s395 + $0x68] sm:$0xf] %v448
                  %v450 = vld [vmem:[%s394 + $0x6c] sm:$0xf]
                  %451 = vst [vmem:[%s395 + $0x6c] sm:$0xf] %v450
                  %v452 = vld [vmem:[%s394 + $0xe0] sm:$0xf]
                  %453 = vst [vmem:[%s395 + $0x70] sm:$0xf] %v452
                  %v454 = vld [vmem:[%s394 + $0xe4] sm:$0xf]
                  %455 = vst [vmem:[%s395 + $0x74] sm:$0xf] %v454
                  %v456 = vld [vmem:[%s394 + $0xe8] sm:$0xf]
                  %457 = vst [vmem:[%s395 + $0x78] sm:$0xf] %v456
                  %v458 = vld [vmem:[%s394 + $0xec] sm:$0xf]
                  %459 = vst [vmem:[%s395 + $0x7c] sm:$0xf] %v458
                  %v460 = vld [vmem:[%s394 + $0xf0] sm:$0xf]
                  %461 = vst [vmem:[%s395 + $0x80] sm:$0xf] %v460
                  %v462 = vld [vmem:[%s394 + $0xf4] sm:$0xf]
                  %463 = vst [vmem:[%s395 + $0x84] sm:$0xf] %v462
                  %v464 = vld [vmem:[%s394 + $0xf8] sm:$0xf]
                  %465 = vst [vmem:[%s395 + $0x88] sm:$0xf] %v464
                  %v466 = vld [vmem:[%s394 + $0xfc] sm:$0xf]
                  %467 = vst [vmem:[%s395 + $0x8c] sm:$0xf] %v466
                  %v468 = vld [vmem:[%s394 + $0x100] sm:$0xf]
                  %469 = vst [vmem:[%s395 + $0x90] sm:$0xf] %v468
                  %v470 = vld [vmem:[%s394 + $0x104] sm:$0xf]
                  %471 = vst [vmem:[%s395 + $0x94] sm:$0xf] %v470
                  %v472 = vld [vmem:[%s394 + $0x108] sm:$0xf]
                  %473 = vst [vmem:[%s395 + $0x98] sm:$0xf] %v472
                  %v474 = vld [vmem:[%s394 + $0x10c] sm:$0xf]
                  %475 = vst [vmem:[%s395 + $0x9c] sm:$0xf] %v474
                  %v476 = vld [vmem:[%s394 + $0x110] sm:$0xf]
                  %477 = vst [vmem:[%s395 + $0xa0] sm:$0xf] %v476
                  %v478 = vld [vmem:[%s394 + $0x114] sm:$0xf]
                  %479 = vst [vmem:[%s395 + $0xa4] sm:$0xf] %v478
                  %v480 = vld [vmem:[%s394 + $0x118] sm:$0xf]
                  %481 = vst [vmem:[%s395 + $0xa8] sm:$0xf] %v480
                  %v482 = vld [vmem:[%s394 + $0x11c] sm:$0xf]
                  %483 = vst [vmem:[%s395 + $0xac] sm:$0xf] %v482
                  %v484 = vld [vmem:[%s394 + $0x120] sm:$0xf]
                  %485 = vst [vmem:[%s395 + $0xb0] sm:$0xf] %v484
                  %v486 = vld [vmem:[%s394 + $0x124] sm:$0xf]
                  %487 = vst [vmem:[%s395 + $0xb4] sm:$0xf] %v486
                  %v488 = vld [vmem:[%s394 + $0x128] sm:$0xf]
                  %489 = vst [vmem:[%s395 + $0xb8] sm:$0xf] %v488
                  %v490 = vld [vmem:[%s394 + $0x12c] sm:$0xf]
                  %491 = vst [vmem:[%s395 + $0xbc] sm:$0xf] %v490
                  %v492 = vld [vmem:[%s394 + $0x130] sm:$0xf]
                  %493 = vst [vmem:[%s395 + $0xc0] sm:$0xf] %v492
                  %v494 = vld [vmem:[%s394 + $0x134] sm:$0xf]
                  %495 = vst [vmem:[%s395 + $0xc4] sm:$0xf] %v494
                  %v496 = vld [vmem:[%s394 + $0x138] sm:$0xf]
                  %497 = vst [vmem:[%s395 + $0xc8] sm:$0xf] %v496
                  %v498 = vld [vmem:[%s394 + $0x13c] sm:$0xf]
                  %499 = vst [vmem:[%s395 + $0xcc] sm:$0xf] %v498
                  %v500 = vld [vmem:[%s394 + $0x140] sm:$0xf]
                  %501 = vst [vmem:[%s395 + $0xd0] sm:$0xf] %v500
                  %v502 = vld [vmem:[%s394 + $0x144] sm:$0xf]
                  %503 = vst [vmem:[%s395 + $0xd4] sm:$0xf] %v502
                  %v504 = vld [vmem:[%s394 + $0x148] sm:$0xf]
                  %505 = vst [vmem:[%s395 + $0xd8] sm:$0xf] %v504
                  %v506 = vld [vmem:[%s394 + $0x14c] sm:$0xf]
                  %507 = vst [vmem:[%s395 + $0xdc] sm:$0xf] %v506
                  %v508 = vld [vmem:[%s394 + $0x1c0] sm:$0xf]
                  %509 = vst [vmem:[%s395 + $0xe0] sm:$0xf] %v508
                  %v510 = vld [vmem:[%s394 + $0x1c4] sm:$0xf]
                  %511 = vst [vmem:[%s395 + $0xe4] sm:$0xf] %v510
                  %v512 = vld [vmem:[%s394 + $0x1c8] sm:$0xf]
                  %513 = vst [vmem:[%s395 + $0xe8] sm:$0xf] %v512
                  %v514 = vld [vmem:[%s394 + $0x1cc] sm:$0xf]
                  %515 = vst [vmem:[%s395 + $0xec] sm:$0xf] %v514
                  %v516 = vld [vmem:[%s394 + $0x1d0] sm:$0xf]
                  %517 = vst [vmem:[%s395 + $0xf0] sm:$0xf] %v516
                  %v518 = vld [vmem:[%s394 + $0x1d4] sm:$0xf]
                  %519 = vst [vmem:[%s395 + $0xf4] sm:$0xf] %v518
                  %v520 = vld [vmem:[%s394 + $0x1d8] sm:$0xf]
                  %521 = vst [vmem:[%s395 + $0xf8] sm:$0xf] %v520
                  %v522 = vld [vmem:[%s394 + $0x1dc] sm:$0xf]
                  %523 = vst [vmem:[%s395 + $0xfc] sm:$0xf] %v522
                  %v524 = vld [vmem:[%s394 + $0x1e0] sm:$0xf]
                  %525 = vst [vmem:[%s395 + $0x100] sm:$0xf] %v524
                  %v526 = vld [vmem:[%s394 + $0x1e4] sm:$0xf]
                  %527 = vst [vmem:[%s395 + $0x104] sm:$0xf] %v526
                  %v528 = vld [vmem:[%s394 + $0x1e8] sm:$0xf]
                  %529 = vst [vmem:[%s395 + $0x108] sm:$0xf] %v528
                  %v530 = vld [vmem:[%s394 + $0x1ec] sm:$0xf]
                  %531 = vst [vmem:[%s395 + $0x10c] sm:$0xf] %v530
                  %v532 = vld [vmem:[%s394 + $0x1f0] sm:$0xf]
                  %533 = vst [vmem:[%s395 + $0x110] sm:$0xf] %v532
                  %v534 = vld [vmem:[%s394 + $0x1f4] sm:$0xf]
                  %535 = vst [vmem:[%s395 + $0x114] sm:$0xf] %v534
                  %v536 = vld [vmem:[%s394 + $0x1f8] sm:$0xf]
                  %537 = vst [vmem:[%s395 + $0x118] sm:$0xf] %v536
                  %v538 = vld [vmem:[%s394 + $0x1fc] sm:$0xf]
                  %539 = vst [vmem:[%s395 + $0x11c] sm:$0xf] %v538
                  %v540 = vld [vmem:[%s394 + $0x200] sm:$0xf]
                  %541 = vst [vmem:[%s395 + $0x120] sm:$0xf] %v540
                  %v542 = vld [vmem:[%s394 + $0x204] sm:$0xf]
                  %543 = vst [vmem:[%s395 + $0x124] sm:$0xf] %v542
                  %v544 = vld [vmem:[%s394 + $0x208] sm:$0xf]
                  %545 = vst [vmem:[%s395 + $0x128] sm:$0xf] %v544
                  %v546 = vld [vmem:[%s394 + $0x20c] sm:$0xf]
                  %547 = vst [vmem:[%s395 + $0x12c] sm:$0xf] %v546
                  %v548 = vld [vmem:[%s394 + $0x210] sm:$0xf]
                  %549 = vst [vmem:[%s395 + $0x130] sm:$0xf] %v548
                  %v550 = vld [vmem:[%s394 + $0x214] sm:$0xf]
                  %551 = vst [vmem:[%s395 + $0x134] sm:$0xf] %v550
                  %v552 = vld [vmem:[%s394 + $0x218] sm:$0xf]
                  %553 = vst [vmem:[%s395 + $0x138] sm:$0xf] %v552
                  %v554 = vld [vmem:[%s394 + $0x21c] sm:$0xf]
                  %555 = vst [vmem:[%s395 + $0x13c] sm:$0xf] %v554
                  %v556 = vld [vmem:[%s394 + $0x220] sm:$0xf]
                  %557 = vst [vmem:[%s395 + $0x140] sm:$0xf] %v556
                  %v558 = vld [vmem:[%s394 + $0x224] sm:$0xf]
                  %559 = vst [vmem:[%s395 + $0x144] sm:$0xf] %v558
                  %v560 = vld [vmem:[%s394 + $0x228] sm:$0xf]
                  %561 = vst [vmem:[%s395 + $0x148] sm:$0xf] %v560
                  %v562 = vld [vmem:[%s394 + $0x22c] sm:$0xf]
                  %563 = vst [vmem:[%s395 + $0x14c] sm:$0xf] %v562
                  %v564 = vld [vmem:[%s394 + $0x2a0] sm:$0xf]
                  %565 = vst [vmem:[%s395 + $0x150] sm:$0xf] %v564
                  %v566 = vld [vmem:[%s394 + $0x2a4] sm:$0xf]
                  %567 = vst [vmem:[%s395 + $0x154] sm:$0xf] %v566
                  %v568 = vld [vmem:[%s394 + $0x2a8] sm:$0xf]
                  %569 = vst [vmem:[%s395 + $0x158] sm:$0xf] %v568
                  %v570 = vld [vmem:[%s394 + $0x2ac] sm:$0xf]
                  %571 = vst [vmem:[%s395 + $0x15c] sm:$0xf] %v570
                  %v572 = vld [vmem:[%s394 + $0x2b0] sm:$0xf]
                  %573 = vst [vmem:[%s395 + $0x160] sm:$0xf] %v572
                  %v574 = vld [vmem:[%s394 + $0x2b4] sm:$0xf]
                  %575 = vst [vmem:[%s395 + $0x164] sm:$0xf] %v574
                  %v576 = vld [vmem:[%s394 + $0x2b8] sm:$0xf]
                  %577 = vst [vmem:[%s395 + $0x168] sm:$0xf] %v576
                  %v578 = vld [vmem:[%s394 + $0x2bc] sm:$0xf]
                  %579 = vst [vmem:[%s395 + $0x16c] sm:$0xf] %v578
                  %v580 = vld [vmem:[%s394 + $0x2c0] sm:$0xf]
                  %581 = vst [vmem:[%s395 + $0x170] sm:$0xf] %v580
                  %v582 = vld [vmem:[%s394 + $0x2c4] sm:$0xf]
                  %583 = vst [vmem:[%s395 + $0x174] sm:$0xf] %v582
                  %v584 = vld [vmem:[%s394 + $0x2c8] sm:$0xf]
                  %585 = vst [vmem:[%s395 + $0x178] sm:$0xf] %v584
                  %v586 = vld [vmem:[%s394 + $0x2cc] sm:$0xf]
                  %587 = vst [vmem:[%s395 + $0x17c] sm:$0xf] %v586
                  %v588 = vld [vmem:[%s394 + $0x2d0] sm:$0xf]
                  %589 = vst [vmem:[%s395 + $0x180] sm:$0xf] %v588
                  %v590 = vld [vmem:[%s394 + $0x2d4] sm:$0xf]
                  %591 = vst [vmem:[%s395 + $0x184] sm:$0xf] %v590
                  %v592 = vld [vmem:[%s394 + $0x2d8] sm:$0xf]
                  %593 = vst [vmem:[%s395 + $0x188] sm:$0xf] %v592
                  %v594 = vld [vmem:[%s394 + $0x2dc] sm:$0xf]
                  %595 = vst [vmem:[%s395 + $0x18c] sm:$0xf] %v594
                  %v596 = vld [vmem:[%s394 + $0x2e0] sm:$0xf]
                  %597 = vst [vmem:[%s395 + $0x190] sm:$0xf] %v596
                  %v598 = vld [vmem:[%s394 + $0x2e4] sm:$0xf]
                  %599 = vst [vmem:[%s395 + $0x194] sm:$0xf] %v598
                  %v600 = vld [vmem:[%s394 + $0x2e8] sm:$0xf]
                  %601 = vst [vmem:[%s395 + $0x198] sm:$0xf] %v600
                  %v602 = vld [vmem:[%s394 + $0x2ec] sm:$0xf]
                  %603 = vst [vmem:[%s395 + $0x19c] sm:$0xf] %v602
                  %v604 = vld [vmem:[%s394 + $0x2f0] sm:$0xf]
                  %605 = vst [vmem:[%s395 + $0x1a0] sm:$0xf] %v604
                  %v606 = vld [vmem:[%s394 + $0x2f4] sm:$0xf]
                  %607 = vst [vmem:[%s395 + $0x1a4] sm:$0xf] %v606
                  %v608 = vld [vmem:[%s394 + $0x2f8] sm:$0xf]
                  %609 = vst [vmem:[%s395 + $0x1a8] sm:$0xf] %v608
                  %v610 = vld [vmem:[%s394 + $0x2fc] sm:$0xf]
                  %611 = vst [vmem:[%s395 + $0x1ac] sm:$0xf] %v610
                  %v612 = vld [vmem:[%s394 + $0x300] sm:$0xf]
                  %613 = vst [vmem:[%s395 + $0x1b0] sm:$0xf] %v612
                  %v614 = vld [vmem:[%s394 + $0x304] sm:$0xf]
                  %615 = vst [vmem:[%s395 + $0x1b4] sm:$0xf] %v614
                  %v616 = vld [vmem:[%s394 + $0x308] sm:$0xf]
                  %617 = vst [vmem:[%s395 + $0x1b8] sm:$0xf] %v616
                  %v618 = vld [vmem:[%s394 + $0x30c] sm:$0xf]
                  %619 = vst [vmem:[%s395 + $0x1bc] sm:$0xf] %v618
                $region63: #{net_forward.3} parent=50 // loop_footer
                  %s393 = sadd.s32 1, %s389
                $region64: #{net_forward.3} parent=50 // loop_footer_branch
                  %388 = sbr.rel target = $region60
                $region65: #{net_forward.3} parent=50 // loop_exit
                  _
              $region51: #{net_forward.3} parent=35 // pred_fallthru
                _
            $region36: #{net_forward.3} parent=31 // pred_fallthru
              _
            // Predicated region
            $region37: #{net_forward.3} parent=31 // pred_check
              _
            $region38: #{net_forward.3} parent=31 // pred_check_branch
              %143 = sbr.rel (0) target = $region40
            $region39: #{net_forward.3} parent=31 // pred_region
              loop: start=0, step=1, limit=1
              $region41: #{net_forward.3} parent=39 // loop_pre_header
                _
              $region42: #{net_forward.3} parent=39 // loop_header
                %s146 = sphi 0, %s150
                %p147 = scmp.ge.s32.totalorder %s146, 1
                %s151 = sphi %s137, %s137
                %s152 = sphi %s134, %s134
              $region43: #{net_forward.3} parent=39 // loop_header_branch
                %149 = sbr.rel (%p147) target = $region47
              $region44: #{net_forward.3} parent=39 // loop_body
                %v153 = vld [vmem:[%s151] sm:$0xf]
                %154 = vst [vmem:[%s152] sm:$0xf] %v153
                %v155 = vld [vmem:[%s151 + $0x4] sm:$0xf]
                %156 = vst [vmem:[%s152 + $0x4] sm:$0xf] %v155
                %v157 = vld [vmem:[%s151 + $0x8] sm:$0xf]
                %158 = vst [vmem:[%s152 + $0x8] sm:$0xf] %v157
                %v159 = vld [vmem:[%s151 + $0xc] sm:$0xf]
                %160 = vst [vmem:[%s152 + $0xc] sm:$0xf] %v159
                %v161 = vld [vmem:[%s151 + $0x10] sm:$0xf]
                %162 = vst [vmem:[%s152 + $0x10] sm:$0xf] %v161
                %v163 = vld [vmem:[%s151 + $0x14] sm:$0xf]
                %164 = vst [vmem:[%s152 + $0x14] sm:$0xf] %v163
                %v165 = vld [vmem:[%s151 + $0x18] sm:$0xf]
                %166 = vst [vmem:[%s152 + $0x18] sm:$0xf] %v165
                %v167 = vld [vmem:[%s151 + $0x1c] sm:$0xf]
                %168 = vst [vmem:[%s152 + $0x1c] sm:$0xf] %v167
                %v169 = vld [vmem:[%s151 + $0x20] sm:$0xf]
                %170 = vst [vmem:[%s152 + $0x20] sm:$0xf] %v169
                %v171 = vld [vmem:[%s151 + $0x24] sm:$0xf]
                %172 = vst [vmem:[%s152 + $0x24] sm:$0xf] %v171
                %v173 = vld [vmem:[%s151 + $0x28] sm:$0xf]
                %174 = vst [vmem:[%s152 + $0x28] sm:$0xf] %v173
                %v175 = vld [vmem:[%s151 + $0x2c] sm:$0xf]
                %176 = vst [vmem:[%s152 + $0x2c] sm:$0xf] %v175
                %v177 = vld [vmem:[%s151 + $0x30] sm:$0xf]
                %178 = vst [vmem:[%s152 + $0x30] sm:$0xf] %v177
                %v179 = vld [vmem:[%s151 + $0x34] sm:$0xf]
                %180 = vst [vmem:[%s152 + $0x34] sm:$0xf] %v179
                %v181 = vld [vmem:[%s151 + $0x38] sm:$0xf]
                %182 = vst [vmem:[%s152 + $0x38] sm:$0xf] %v181
                %v183 = vld [vmem:[%s151 + $0x3c] sm:$0xf]
                %184 = vst [vmem:[%s152 + $0x3c] sm:$0xf] %v183
                %v185 = vld [vmem:[%s151 + $0x40] sm:$0xf]
                %186 = vst [vmem:[%s152 + $0x40] sm:$0xf] %v185
                %v187 = vld [vmem:[%s151 + $0x44] sm:$0xf]
                %188 = vst [vmem:[%s152 + $0x44] sm:$0xf] %v187
                %v189 = vld [vmem:[%s151 + $0x48] sm:$0xf]
                %190 = vst [vmem:[%s152 + $0x48] sm:$0xf] %v189
                %v191 = vld [vmem:[%s151 + $0x4c] sm:$0xf]
                %192 = vst [vmem:[%s152 + $0x4c] sm:$0xf] %v191
                %v193 = vld [vmem:[%s151 + $0x50] sm:$0xf]
                %194 = vst [vmem:[%s152 + $0x50] sm:$0xf] %v193
                %v195 = vld [vmem:[%s151 + $0x54] sm:$0xf]
                %196 = vst [vmem:[%s152 + $0x54] sm:$0xf] %v195
                %v197 = vld [vmem:[%s151 + $0x58] sm:$0xf]
                %198 = vst [vmem:[%s152 + $0x58] sm:$0xf] %v197
                %v199 = vld [vmem:[%s151 + $0x5c] sm:$0xf]
                %200 = vst [vmem:[%s152 + $0x5c] sm:$0xf] %v199
                %v201 = vld [vmem:[%s151 + $0x60] sm:$0xf]
                %202 = vst [vmem:[%s152 + $0x60] sm:$0xf] %v201
                %v203 = vld [vmem:[%s151 + $0x64] sm:$0xf]
                %204 = vst [vmem:[%s152 + $0x64] sm:$0xf] %v203
                %v205 = vld [vmem:[%s151 + $0x68] sm:$0xf]
                %206 = vst [vmem:[%s152 + $0x68] sm:$0xf] %v205
                %v207 = vld [vmem:[%s151 + $0x6c] sm:$0xf]
                %208 = vst [vmem:[%s152 + $0x6c] sm:$0xf] %v207
                %v209 = vld [vmem:[%s151 + $0xe0] sm:$0xf]
                %210 = vst [vmem:[%s152 + $0x70] sm:$0xf] %v209
                %v211 = vld [vmem:[%s151 + $0xe4] sm:$0xf]
                %212 = vst [vmem:[%s152 + $0x74] sm:$0xf] %v211
                %v213 = vld [vmem:[%s151 + $0xe8] sm:$0xf]
                %214 = vst [vmem:[%s152 + $0x78] sm:$0xf] %v213
                %v215 = vld [vmem:[%s151 + $0xec] sm:$0xf]
                %216 = vst [vmem:[%s152 + $0x7c] sm:$0xf] %v215
                %v217 = vld [vmem:[%s151 + $0xf0] sm:$0xf]
                %218 = vst [vmem:[%s152 + $0x80] sm:$0xf] %v217
                %v219 = vld [vmem:[%s151 + $0xf4] sm:$0xf]
                %220 = vst [vmem:[%s152 + $0x84] sm:$0xf] %v219
                %v221 = vld [vmem:[%s151 + $0xf8] sm:$0xf]
                %222 = vst [vmem:[%s152 + $0x88] sm:$0xf] %v221
                %v223 = vld [vmem:[%s151 + $0xfc] sm:$0xf]
                %224 = vst [vmem:[%s152 + $0x8c] sm:$0xf] %v223
                %v225 = vld [vmem:[%s151 + $0x100] sm:$0xf]
                %226 = vst [vmem:[%s152 + $0x90] sm:$0xf] %v225
                %v227 = vld [vmem:[%s151 + $0x104] sm:$0xf]
                %228 = vst [vmem:[%s152 + $0x94] sm:$0xf] %v227
                %v229 = vld [vmem:[%s151 + $0x108] sm:$0xf]
                %230 = vst [vmem:[%s152 + $0x98] sm:$0xf] %v229
                %v231 = vld [vmem:[%s151 + $0x10c] sm:$0xf]
                %232 = vst [vmem:[%s152 + $0x9c] sm:$0xf] %v231
                %v233 = vld [vmem:[%s151 + $0x110] sm:$0xf]
                %234 = vst [vmem:[%s152 + $0xa0] sm:$0xf] %v233
                %v235 = vld [vmem:[%s151 + $0x114] sm:$0xf]
                %236 = vst [vmem:[%s152 + $0xa4] sm:$0xf] %v235
                %v237 = vld [vmem:[%s151 + $0x118] sm:$0xf]
                %238 = vst [vmem:[%s152 + $0xa8] sm:$0xf] %v237
                %v239 = vld [vmem:[%s151 + $0x11c] sm:$0xf]
                %240 = vst [vmem:[%s152 + $0xac] sm:$0xf] %v239
                %v241 = vld [vmem:[%s151 + $0x120] sm:$0xf]
                %242 = vst [vmem:[%s152 + $0xb0] sm:$0xf] %v241
                %v243 = vld [vmem:[%s151 + $0x124] sm:$0xf]
                %244 = vst [vmem:[%s152 + $0xb4] sm:$0xf] %v243
                %v245 = vld [vmem:[%s151 + $0x128] sm:$0xf]
                %246 = vst [vmem:[%s152 + $0xb8] sm:$0xf] %v245
                %v247 = vld [vmem:[%s151 + $0x12c] sm:$0xf]
                %248 = vst [vmem:[%s152 + $0xbc] sm:$0xf] %v247
                %v249 = vld [vmem:[%s151 + $0x130] sm:$0xf]
                %250 = vst [vmem:[%s152 + $0xc0] sm:$0xf] %v249
                %v251 = vld [vmem:[%s151 + $0x134] sm:$0xf]
                %252 = vst [vmem:[%s152 + $0xc4] sm:$0xf] %v251
                %v253 = vld [vmem:[%s151 + $0x138] sm:$0xf]
                %254 = vst [vmem:[%s152 + $0xc8] sm:$0xf] %v253
                %v255 = vld [vmem:[%s151 + $0x13c] sm:$0xf]
                %256 = vst [vmem:[%s152 + $0xcc] sm:$0xf] %v255
                %v257 = vld [vmem:[%s151 + $0x140] sm:$0xf]
                %258 = vst [vmem:[%s152 + $0xd0] sm:$0xf] %v257
                %v259 = vld [vmem:[%s151 + $0x144] sm:$0xf]
                %260 = vst [vmem:[%s152 + $0xd4] sm:$0xf] %v259
                %v261 = vld [vmem:[%s151 + $0x148] sm:$0xf]
                %262 = vst [vmem:[%s152 + $0xd8] sm:$0xf] %v261
                %v263 = vld [vmem:[%s151 + $0x14c] sm:$0xf]
                %264 = vst [vmem:[%s152 + $0xdc] sm:$0xf] %v263
                %v265 = vld [vmem:[%s151 + $0x1c0] sm:$0xf]
                %266 = vst [vmem:[%s152 + $0xe0] sm:$0xf] %v265
                %v267 = vld [vmem:[%s151 + $0x1c4] sm:$0xf]
                %268 = vst [vmem:[%s152 + $0xe4] sm:$0xf] %v267
                %v269 = vld [vmem:[%s151 + $0x1c8] sm:$0xf]
                %270 = vst [vmem:[%s152 + $0xe8] sm:$0xf] %v269
                %v271 = vld [vmem:[%s151 + $0x1cc] sm:$0xf]
                %272 = vst [vmem:[%s152 + $0xec] sm:$0xf] %v271
                %v273 = vld [vmem:[%s151 + $0x1d0] sm:$0xf]
                %274 = vst [vmem:[%s152 + $0xf0] sm:$0xf] %v273
                %v275 = vld [vmem:[%s151 + $0x1d4] sm:$0xf]
                %276 = vst [vmem:[%s152 + $0xf4] sm:$0xf] %v275
                %v277 = vld [vmem:[%s151 + $0x1d8] sm:$0xf]
                %278 = vst [vmem:[%s152 + $0xf8] sm:$0xf] %v277
                %v279 = vld [vmem:[%s151 + $0x1dc] sm:$0xf]
                %280 = vst [vmem:[%s152 + $0xfc] sm:$0xf] %v279
                %v281 = vld [vmem:[%s151 + $0x1e0] sm:$0xf]
                %282 = vst [vmem:[%s152 + $0x100] sm:$0xf] %v281
                %v283 = vld [vmem:[%s151 + $0x1e4] sm:$0xf]
                %284 = vst [vmem:[%s152 + $0x104] sm:$0xf] %v283
                %v285 = vld [vmem:[%s151 + $0x1e8] sm:$0xf]
                %286 = vst [vmem:[%s152 + $0x108] sm:$0xf] %v285
                %v287 = vld [vmem:[%s151 + $0x1ec] sm:$0xf]
                %288 = vst [vmem:[%s152 + $0x10c] sm:$0xf] %v287
                %v289 = vld [vmem:[%s151 + $0x1f0] sm:$0xf]
                %290 = vst [vmem:[%s152 + $0x110] sm:$0xf] %v289
                %v291 = vld [vmem:[%s151 + $0x1f4] sm:$0xf]
                %292 = vst [vmem:[%s152 + $0x114] sm:$0xf] %v291
                %v293 = vld [vmem:[%s151 + $0x1f8] sm:$0xf]
                %294 = vst [vmem:[%s152 + $0x118] sm:$0xf] %v293
                %v295 = vld [vmem:[%s151 + $0x1fc] sm:$0xf]
                %296 = vst [vmem:[%s152 + $0x11c] sm:$0xf] %v295
                %v297 = vld [vmem:[%s151 + $0x200] sm:$0xf]
                %298 = vst [vmem:[%s152 + $0x120] sm:$0xf] %v297
                %v299 = vld [vmem:[%s151 + $0x204] sm:$0xf]
                %300 = vst [vmem:[%s152 + $0x124] sm:$0xf] %v299
                %v301 = vld [vmem:[%s151 + $0x208] sm:$0xf]
                %302 = vst [vmem:[%s152 + $0x128] sm:$0xf] %v301
                %v303 = vld [vmem:[%s151 + $0x20c] sm:$0xf]
                %304 = vst [vmem:[%s152 + $0x12c] sm:$0xf] %v303
                %v305 = vld [vmem:[%s151 + $0x210] sm:$0xf]
                %306 = vst [vmem:[%s152 + $0x130] sm:$0xf] %v305
                %v307 = vld [vmem:[%s151 + $0x214] sm:$0xf]
                %308 = vst [vmem:[%s152 + $0x134] sm:$0xf] %v307
                %v309 = vld [vmem:[%s151 + $0x218] sm:$0xf]
                %310 = vst [vmem:[%s152 + $0x138] sm:$0xf] %v309
                %v311 = vld [vmem:[%s151 + $0x21c] sm:$0xf]
                %312 = vst [vmem:[%s152 + $0x13c] sm:$0xf] %v311
                %v313 = vld [vmem:[%s151 + $0x220] sm:$0xf]
                %314 = vst [vmem:[%s152 + $0x140] sm:$0xf] %v313
                %v315 = vld [vmem:[%s151 + $0x224] sm:$0xf]
                %316 = vst [vmem:[%s152 + $0x144] sm:$0xf] %v315
                %v317 = vld [vmem:[%s151 + $0x228] sm:$0xf]
                %318 = vst [vmem:[%s152 + $0x148] sm:$0xf] %v317
                %v319 = vld [vmem:[%s151 + $0x22c] sm:$0xf]
                %320 = vst [vmem:[%s152 + $0x14c] sm:$0xf] %v319
                %v321 = vld [vmem:[%s151 + $0x2a0] sm:$0xf]
                %322 = vst [vmem:[%s152 + $0x150] sm:$0xf] %v321
                %v323 = vld [vmem:[%s151 + $0x2a4] sm:$0xf]
                %324 = vst [vmem:[%s152 + $0x154] sm:$0xf] %v323
                %v325 = vld [vmem:[%s151 + $0x2a8] sm:$0xf]
                %326 = vst [vmem:[%s152 + $0x158] sm:$0xf] %v325
                %v327 = vld [vmem:[%s151 + $0x2ac] sm:$0xf]
                %328 = vst [vmem:[%s152 + $0x15c] sm:$0xf] %v327
                %v329 = vld [vmem:[%s151 + $0x2b0] sm:$0xf]
                %330 = vst [vmem:[%s152 + $0x160] sm:$0xf] %v329
                %v331 = vld [vmem:[%s151 + $0x2b4] sm:$0xf]
                %332 = vst [vmem:[%s152 + $0x164] sm:$0xf] %v331
                %v333 = vld [vmem:[%s151 + $0x2b8] sm:$0xf]
                %334 = vst [vmem:[%s152 + $0x168] sm:$0xf] %v333
                %v335 = vld [vmem:[%s151 + $0x2bc] sm:$0xf]
                %336 = vst [vmem:[%s152 + $0x16c] sm:$0xf] %v335
                %v337 = vld [vmem:[%s151 + $0x2c0] sm:$0xf]
                %338 = vst [vmem:[%s152 + $0x170] sm:$0xf] %v337
                %v339 = vld [vmem:[%s151 + $0x2c4] sm:$0xf]
                %340 = vst [vmem:[%s152 + $0x174] sm:$0xf] %v339
                %v341 = vld [vmem:[%s151 + $0x2c8] sm:$0xf]
                %342 = vst [vmem:[%s152 + $0x178] sm:$0xf] %v341
                %v343 = vld [vmem:[%s151 + $0x2cc] sm:$0xf]
                %344 = vst [vmem:[%s152 + $0x17c] sm:$0xf] %v343
                %v345 = vld [vmem:[%s151 + $0x2d0] sm:$0xf]
                %346 = vst [vmem:[%s152 + $0x180] sm:$0xf] %v345
                %v347 = vld [vmem:[%s151 + $0x2d4] sm:$0xf]
                %348 = vst [vmem:[%s152 + $0x184] sm:$0xf] %v347
                %v349 = vld [vmem:[%s151 + $0x2d8] sm:$0xf]
                %350 = vst [vmem:[%s152 + $0x188] sm:$0xf] %v349
                %v351 = vld [vmem:[%s151 + $0x2dc] sm:$0xf]
                %352 = vst [vmem:[%s152 + $0x18c] sm:$0xf] %v351
                %v353 = vld [vmem:[%s151 + $0x2e0] sm:$0xf]
                %354 = vst [vmem:[%s152 + $0x190] sm:$0xf] %v353
                %v355 = vld [vmem:[%s151 + $0x2e4] sm:$0xf]
                %356 = vst [vmem:[%s152 + $0x194] sm:$0xf] %v355
                %v357 = vld [vmem:[%s151 + $0x2e8] sm:$0xf]
                %358 = vst [vmem:[%s152 + $0x198] sm:$0xf] %v357
                %v359 = vld [vmem:[%s151 + $0x2ec] sm:$0xf]
                %360 = vst [vmem:[%s152 + $0x19c] sm:$0xf] %v359
                %v361 = vld [vmem:[%s151 + $0x2f0] sm:$0xf]
                %362 = vst [vmem:[%s152 + $0x1a0] sm:$0xf] %v361
                %v363 = vld [vmem:[%s151 + $0x2f4] sm:$0xf]
                %364 = vst [vmem:[%s152 + $0x1a4] sm:$0xf] %v363
                %v365 = vld [vmem:[%s151 + $0x2f8] sm:$0xf]
                %366 = vst [vmem:[%s152 + $0x1a8] sm:$0xf] %v365
                %v367 = vld [vmem:[%s151 + $0x2fc] sm:$0xf]
                %368 = vst [vmem:[%s152 + $0x1ac] sm:$0xf] %v367
                %v369 = vld [vmem:[%s151 + $0x300] sm:$0xf]
                %370 = vst [vmem:[%s152 + $0x1b0] sm:$0xf] %v369
                %v371 = vld [vmem:[%s151 + $0x304] sm:$0xf]
                %372 = vst [vmem:[%s152 + $0x1b4] sm:$0xf] %v371
                %v373 = vld [vmem:[%s151 + $0x308] sm:$0xf]
                %374 = vst [vmem:[%s152 + $0x1b8] sm:$0xf] %v373
                %v375 = vld [vmem:[%s151 + $0x30c] sm:$0xf]
                %376 = vst [vmem:[%s152 + $0x1bc] sm:$0xf] %v375
              $region45: #{net_forward.3} parent=39 // loop_footer
                %s150 = sadd.s32 1, %s146
              $region46: #{net_forward.3} parent=39 // loop_footer_branch
                %145 = sbr.rel target = $region42
              $region47: #{net_forward.3} parent=39 // loop_exit
                _
            $region40: #{net_forward.3} parent=31 // pred_fallthru
              _
          $region32: #{net_forward.3} parent=27 // pred_fallthru
            _
          %620 = vnop
        $region28: #{net_forward.3} parent=23 // pred_fallthru
          _
      $region24: #{net_forward.3} parent=5 // pred_fallthru
        _
      %p621 = scmp.le.s32.totalorder 1, %s9
      %p622 = scmp.lt.s32.totalorder %s9, 3
      %p623 = pnand %p621, %p622
      %p624 = pneg %p623
      // Predicated region
      $region66: #{net_forward.3} parent=5 // pred_check
        _
      $region67: #{net_forward.3} parent=5 // pred_check_branch
        %626 = sbr.rel (%p623) target = $region69
      $region68: #{net_forward.3} parent=5 // pred_region
        %s627 = ssub.s32 %s9, 1
        %s628 = sand.u32 %s22, 1
        %s629 = sand.u32 %s22, 1
        %s630 = smul.addr %s629, 448
        %s631 = scalar_lea.vmem [#allocation2], %s630
        // Predicated region
        $region70: #{net_forward.3} parent=68 // pred_check
          %p632 = pneg %p35
        $region71: #{net_forward.3} parent=68 // pred_check_branch
          %634 = sbr.rel (%p632) target = $region73
        $region72: #{net_forward.3} parent=68 // pred_region
          _
        $region73: #{net_forward.3} parent=68 // pred_fallthru
          _
        %s635 = sand.u32 %s22, 1
        %s636 = sand.u32 %s22, 1
        %s637 = smul.addr %s636, 448
        %s638 = scalar_lea.vmem [#allocation2], %s637
        %p639 = pneg %p35
        %p640 = pneg %p32
        %p641 = pneg %p56
        %p642 = pneg %p53
        %p643 = pneg %p77
        %p644 = pneg %p74
        %p645 = pneg %p103
        %p646 = pneg %p100
        %s647 = smul.u32 28, %s14
        %p648 = scmp.lt.s32.totalorder %s647, 55
        %s649 = scalar_select %p648, %s647, 55
        %s650 = smul.addr %s649, 4
        %s651 = scalar_lea.vmem %s3, %s650
        %s652 = smul.u32 28, %s14
        %s653 = smul.u32 28, %s14
        %p654 = scmp.lt.s32.totalorder %s653, 55
        %s655 = scalar_select %p654, %s653, 55
        %s656 = smul.addr %s655, 4
        %s657 = scalar_lea.vmem %s3, %s656
        %s658 = smul.u32 28, %s14
        %v660 = vld [vmem:[%s631] sm:$0xf]
        %v661 = vld [vmem:[%s631 + $0x4] sm:$0xf]
        %v662 = vld [vmem:[%s631 + $0x8] sm:$0xf]
        %v663 = vld [vmem:[%s631 + $0xc] sm:$0xf]
        %v664 = vld [vmem:[%s631 + $0x10] sm:$0xf]
        %v665 = vld [vmem:[%s631 + $0x14] sm:$0xf]
        %v666 = vld [vmem:[%s631 + $0x18] sm:$0xf]
        %v667 = vld [vmem:[%s631 + $0x1c] sm:$0xf]
        %v668 = vld [vmem:[%s631 + $0x20] sm:$0xf]
        %v669 = vld [vmem:[%s631 + $0x24] sm:$0xf]
        %v670 = vld [vmem:[%s631 + $0x28] sm:$0xf]
        %v671 = vld [vmem:[%s631 + $0x2c] sm:$0xf]
        %v672 = vld [vmem:[%s631 + $0x30] sm:$0xf]
        %v673 = vld [vmem:[%s631 + $0x34] sm:$0xf]
        %v674 = vld [vmem:[%s631 + $0x38] sm:$0xf]
        %v675 = vld [vmem:[%s631 + $0x3c] sm:$0xf]
        %v676 = vld [vmem:[%s631 + $0x40] sm:$0xf]
        %v677 = vld [vmem:[%s631 + $0x44] sm:$0xf]
        %v678 = vld [vmem:[%s631 + $0x48] sm:$0xf]
        %v679 = vld [vmem:[%s631 + $0x4c] sm:$0xf]
        %v680 = vld [vmem:[%s631 + $0x50] sm:$0xf]
        %v681 = vld [vmem:[%s631 + $0x54] sm:$0xf]
        %v682 = vld [vmem:[%s631 + $0x58] sm:$0xf]
        %v683 = vld [vmem:[%s631 + $0x5c] sm:$0xf]
        %v684 = vld [vmem:[%s631 + $0x60] sm:$0xf]
        %v685 = vld [vmem:[%s631 + $0x64] sm:$0xf]
        %v686 = vld [vmem:[%s631 + $0x68] sm:$0xf]
        %v687 = vld [vmem:[%s631 + $0x6c] sm:$0xf]
        %v688 = vld [vmem:[%s631 + $0x70] sm:$0xf]
        %v689 = vld [vmem:[%s631 + $0x74] sm:$0xf]
        %v690 = vld [vmem:[%s631 + $0x78] sm:$0xf]
        %v691 = vld [vmem:[%s631 + $0x7c] sm:$0xf]
        %v692 = vld [vmem:[%s631 + $0x80] sm:$0xf]
        %v693 = vld [vmem:[%s631 + $0x84] sm:$0xf]
        %v694 = vld [vmem:[%s631 + $0x88] sm:$0xf]
        %v695 = vld [vmem:[%s631 + $0x8c] sm:$0xf]
        %v696 = vld [vmem:[%s631 + $0x90] sm:$0xf]
        %v697 = vld [vmem:[%s631 + $0x94] sm:$0xf]
        %v698 = vld [vmem:[%s631 + $0x98] sm:$0xf]
        %v699 = vld [vmem:[%s631 + $0x9c] sm:$0xf]
        %v700 = vld [vmem:[%s631 + $0xa0] sm:$0xf]
        %v701 = vld [vmem:[%s631 + $0xa4] sm:$0xf]
        %v702 = vld [vmem:[%s631 + $0xa8] sm:$0xf]
        %v703 = vld [vmem:[%s631 + $0xac] sm:$0xf]
        %v704 = vld [vmem:[%s631 + $0xb0] sm:$0xf]
        %v705 = vld [vmem:[%s631 + $0xb4] sm:$0xf]
        %v706 = vld [vmem:[%s631 + $0xb8] sm:$0xf]
        %v707 = vld [vmem:[%s631 + $0xbc] sm:$0xf]
        %v708 = vld [vmem:[%s631 + $0xc0] sm:$0xf]
        %v709 = vld [vmem:[%s631 + $0xc4] sm:$0xf]
        %v710 = vld [vmem:[%s631 + $0xc8] sm:$0xf]
        %v711 = vld [vmem:[%s631 + $0xcc] sm:$0xf]
        %v712 = vld [vmem:[%s631 + $0xd0] sm:$0xf]
        %v713 = vld [vmem:[%s631 + $0xd4] sm:$0xf]
        %v714 = vld [vmem:[%s631 + $0xd8] sm:$0xf]
        %v715 = vld [vmem:[%s631 + $0xdc] sm:$0xf]
        %v716 = vld [vmem:[%s631 + $0xe0] sm:$0xf]
        %v717 = vld [vmem:[%s631 + $0xe4] sm:$0xf]
        %v718 = vld [vmem:[%s631 + $0xe8] sm:$0xf]
        %v719 = vld [vmem:[%s631 + $0xec] sm:$0xf]
        %v720 = vld [vmem:[%s631 + $0xf0] sm:$0xf]
        %v721 = vld [vmem:[%s631 + $0xf4] sm:$0xf]
        %v722 = vld [vmem:[%s631 + $0xf8] sm:$0xf]
        %v723 = vld [vmem:[%s631 + $0xfc] sm:$0xf]
        %v724 = vld [vmem:[%s631 + $0x100] sm:$0xf]
        %v725 = vld [vmem:[%s631 + $0x104] sm:$0xf]
        %v726 = vld [vmem:[%s631 + $0x108] sm:$0xf]
        %v727 = vld [vmem:[%s631 + $0x10c] sm:$0xf]
        %v728 = vld [vmem:[%s631 + $0x110] sm:$0xf]
        %v729 = vld [vmem:[%s631 + $0x114] sm:$0xf]
        %v730 = vld [vmem:[%s631 + $0x118] sm:$0xf]
        %v731 = vld [vmem:[%s631 + $0x11c] sm:$0xf]
        %v732 = vld [vmem:[%s631 + $0x120] sm:$0xf]
        %v733 = vld [vmem:[%s631 + $0x124] sm:$0xf]
        %v734 = vld [vmem:[%s631 + $0x128] sm:$0xf]
        %v735 = vld [vmem:[%s631 + $0x12c] sm:$0xf]
        %v736 = vld [vmem:[%s631 + $0x130] sm:$0xf]
        %v737 = vld [vmem:[%s631 + $0x134] sm:$0xf]
        %v738 = vld [vmem:[%s631 + $0x138] sm:$0xf]
        %v739 = vld [vmem:[%s631 + $0x13c] sm:$0xf]
        %v740 = vld [vmem:[%s631 + $0x140] sm:$0xf]
        %v741 = vld [vmem:[%s631 + $0x144] sm:$0xf]
        %v742 = vld [vmem:[%s631 + $0x148] sm:$0xf]
        %v743 = vld [vmem:[%s631 + $0x14c] sm:$0xf]
        %v744 = vld [vmem:[%s631 + $0x150] sm:$0xf]
        %v745 = vld [vmem:[%s631 + $0x154] sm:$0xf]
        %v746 = vld [vmem:[%s631 + $0x158] sm:$0xf]
        %v747 = vld [vmem:[%s631 + $0x15c] sm:$0xf]
        %v748 = vld [vmem:[%s631 + $0x160] sm:$0xf]
        %v749 = vld [vmem:[%s631 + $0x164] sm:$0xf]
        %v750 = vld [vmem:[%s631 + $0x168] sm:$0xf]
        %v751 = vld [vmem:[%s631 + $0x16c] sm:$0xf]
        %v752 = vld [vmem:[%s631 + $0x170] sm:$0xf]
        %v753 = vld [vmem:[%s631 + $0x174] sm:$0xf]
        %v754 = vld [vmem:[%s631 + $0x178] sm:$0xf]
        %v755 = vld [vmem:[%s631 + $0x17c] sm:$0xf]
        %v756 = vld [vmem:[%s631 + $0x180] sm:$0xf]
        %v757 = vld [vmem:[%s631 + $0x184] sm:$0xf]
        %v758 = vld [vmem:[%s631 + $0x188] sm:$0xf]
        %v759 = vld [vmem:[%s631 + $0x18c] sm:$0xf]
        %v760 = vld [vmem:[%s631 + $0x190] sm:$0xf]
        %v761 = vld [vmem:[%s631 + $0x194] sm:$0xf]
        %v762 = vld [vmem:[%s631 + $0x198] sm:$0xf]
        %v763 = vld [vmem:[%s631 + $0x19c] sm:$0xf]
        %v764 = vld [vmem:[%s631 + $0x1a0] sm:$0xf]
        %v765 = vld [vmem:[%s631 + $0x1a4] sm:$0xf]
        %v766 = vld [vmem:[%s631 + $0x1a8] sm:$0xf]
        %v767 = vld [vmem:[%s631 + $0x1ac] sm:$0xf]
        %v768 = vld [vmem:[%s631 + $0x1b0] sm:$0xf]
        %v769 = vld [vmem:[%s631 + $0x1b4] sm:$0xf]
        %v770 = vld [vmem:[%s631 + $0x1b8] sm:$0xf]
        %v771 = vld [vmem:[%s631 + $0x1bc] sm:$0xf]
        %v772 = vld [vmem:[%s1] sm:$0xf]
        %v773 = vld [vmem:[%s1 + $0x4] sm:$0xf]
        %v774 = vld [vmem:[%s1 + $0x8] sm:$0xf]
        %v775 = vld [vmem:[%s1 + $0xc] sm:$0xf]
        %v776 = vld [vmem:[%s1 + $0x10] sm:$0xf]
        %v777 = vld [vmem:[%s1 + $0x14] sm:$0xf]
        %v778 = vld [vmem:[%s1 + $0x18] sm:$0xf]
        %v779 = vld [vmem:[%s1 + $0x1c] sm:$0xf]
        %v780 = vld [vmem:[%s1 + $0x20] sm:$0xf]
        %v781 = vld [vmem:[%s1 + $0x24] sm:$0x3]
        %v894 = vunpack.c.l.b16 %v660
        %v895 = vunpack.c.l.b16 %v661
        %v896 = vunpack.c.l.b16 %v662
        %v897 = vunpack.c.l.b16 %v663
        %v898 = vunpack.c.l.b16 %v664
        %v899 = vunpack.c.l.b16 %v665
        %v900 = vunpack.c.l.b16 %v666
        %v901 = vunpack.c.l.b16 %v667
        %v902 = vunpack.c.l.b16 %v668
        %v903 = vunpack.c.l.b16 %v669
        %v904 = vunpack.c.l.b16 %v670
        %v905 = vunpack.c.l.b16 %v671
        %v906 = vunpack.c.l.b16 %v672
        %v907 = vunpack.c.l.b16 %v673
        %v908 = vunpack.c.l.b16 %v674
        %v909 = vunpack.c.l.b16 %v675
        %v910 = vunpack.c.l.b16 %v676
        %v911 = vunpack.c.l.b16 %v677
        %v912 = vunpack.c.l.b16 %v678
        %v913 = vunpack.c.l.b16 %v679
        %v914 = vunpack.c.l.b16 %v680
        %v915 = vunpack.c.l.b16 %v681
        %v916 = vunpack.c.l.b16 %v682
        %v917 = vunpack.c.l.b16 %v683
        %v918 = vunpack.c.l.b16 %v684
        %v919 = vunpack.c.l.b16 %v685
        %v920 = vunpack.c.l.b16 %v686
        %v921 = vunpack.c.l.b16 %v687
        %v922 = vunpack.c.l.b16 %v688
        %v923 = vunpack.c.l.b16 %v689
        %v924 = vunpack.c.l.b16 %v690
        %v925 = vunpack.c.l.b16 %v691
        %v926 = vunpack.c.l.b16 %v692
        %v927 = vunpack.c.l.b16 %v693
        %v928 = vunpack.c.l.b16 %v694
        %v929 = vunpack.c.l.b16 %v695
        %v930 = vunpack.c.l.b16 %v696
        %v931 = vunpack.c.l.b16 %v697
        %v932 = vunpack.c.l.b16 %v698
        %v933 = vunpack.c.l.b16 %v699
        %v934 = vunpack.c.l.b16 %v700
        %v935 = vunpack.c.l.b16 %v701
        %v936 = vunpack.c.l.b16 %v702
        %v937 = vunpack.c.l.b16 %v703
        %v938 = vunpack.c.l.b16 %v704
        %v939 = vunpack.c.l.b16 %v705
        %v940 = vunpack.c.l.b16 %v706
        %v941 = vunpack.c.l.b16 %v707
        %v942 = vunpack.c.l.b16 %v708
        %v943 = vunpack.c.l.b16 %v709
        %v944 = vunpack.c.l.b16 %v710
        %v945 = vunpack.c.l.b16 %v711
        %v946 = vunpack.c.l.b16 %v712
        %v947 = vunpack.c.l.b16 %v713
        %v948 = vunpack.c.l.b16 %v714
        %v949 = vunpack.c.l.b16 %v715
        %v950 = vunpack.c.l.b16 %v716
        %v951 = vunpack.c.l.b16 %v717
        %v952 = vunpack.c.l.b16 %v718
        %v953 = vunpack.c.l.b16 %v719
        %v954 = vunpack.c.l.b16 %v720
        %v955 = vunpack.c.l.b16 %v721
        %v956 = vunpack.c.l.b16 %v722
        %v957 = vunpack.c.l.b16 %v723
        %v958 = vunpack.c.l.b16 %v724
        %v959 = vunpack.c.l.b16 %v725
        %v960 = vunpack.c.l.b16 %v726
        %v961 = vunpack.c.l.b16 %v727
        %v962 = vunpack.c.l.b16 %v728
        %v963 = vunpack.c.l.b16 %v729
        %v964 = vunpack.c.l.b16 %v730
        %v965 = vunpack.c.l.b16 %v731
        %v966 = vunpack.c.l.b16 %v732
        %v967 = vunpack.c.l.b16 %v733
        %v968 = vunpack.c.l.b16 %v734
        %v969 = vunpack.c.l.b16 %v735
        %v970 = vunpack.c.l.b16 %v736
        %v971 = vunpack.c.l.b16 %v737
        %v972 = vunpack.c.l.b16 %v738
        %v973 = vunpack.c.l.b16 %v739
        %v974 = vunpack.c.l.b16 %v740
        %v975 = vunpack.c.l.b16 %v741
        %v976 = vunpack.c.l.b16 %v742
        %v977 = vunpack.c.l.b16 %v743
        %v978 = vunpack.c.l.b16 %v744
        %v979 = vunpack.c.l.b16 %v745
        %v980 = vunpack.c.l.b16 %v746
        %v981 = vunpack.c.l.b16 %v747
        %v982 = vunpack.c.l.b16 %v748
        %v983 = vunpack.c.l.b16 %v749
        %v984 = vunpack.c.l.b16 %v750
        %v985 = vunpack.c.l.b16 %v751
        %v986 = vunpack.c.l.b16 %v752
        %v987 = vunpack.c.l.b16 %v753
        %v988 = vunpack.c.l.b16 %v754
        %v989 = vunpack.c.l.b16 %v755
        %v990 = vunpack.c.l.b16 %v756
        %v991 = vunpack.c.l.b16 %v757
        %v992 = vunpack.c.l.b16 %v758
        %v993 = vunpack.c.l.b16 %v759
        %v994 = vunpack.c.l.b16 %v760
        %v995 = vunpack.c.l.b16 %v761
        %v996 = vunpack.c.l.b16 %v762
        %v997 = vunpack.c.l.b16 %v763
        %v998 = vunpack.c.l.b16 %v764
        %v999 = vunpack.c.l.b16 %v765
        %v1000 = vunpack.c.l.b16 %v766
        %v1001 = vunpack.c.l.b16 %v767
        %v1002 = vunpack.c.l.b16 %v768
        %v1003 = vunpack.c.l.b16 %v769
        %v1004 = vunpack.c.l.b16 %v770
        %v1005 = vunpack.c.l.b16 %v771
        %v1006 = vpack.c.b16 %v895, %v894
        %v1007 = vpack.c.b16 %v897, %v896
        %v1008 = vpack.c.b16 %v899, %v898
        %v1009 = vpack.c.b16 %v901, %v900
        %v1010 = vpack.c.b16 %v903, %v902
        %v1011 = vpack.c.b16 %v905, %v904
        %v1012 = vpack.c.b16 %v907, %v906
        %v1013 = vpack.c.b16 %v909, %v908
        %v1014 = vpack.c.b16 %v911, %v910
        %v1015 = vpack.c.b16 %v913, %v912
        %v1016 = vpack.c.b16 %v915, %v914
        %v1017 = vpack.c.b16 %v917, %v916
        %v1018 = vpack.c.b16 %v919, %v918
        %v1019 = vpack.c.b16 %v921, %v920
        %v1020 = vpack.c.b16 %v923, %v922
        %v1021 = vpack.c.b16 %v925, %v924
        %v1022 = vpack.c.b16 %v927, %v926
        %v1023 = vpack.c.b16 %v929, %v928
        %v1024 = vpack.c.b16 %v931, %v930
        %v1025 = vpack.c.b16 %v933, %v932
        %v1026 = vpack.c.b16 %v935, %v934
        %v1027 = vpack.c.b16 %v937, %v936
        %v1028 = vpack.c.b16 %v939, %v938
        %v1029 = vpack.c.b16 %v941, %v940
        %v1030 = vpack.c.b16 %v943, %v942
        %v1031 = vpack.c.b16 %v945, %v944
        %v1032 = vpack.c.b16 %v947, %v946
        %v1033 = vpack.c.b16 %v949, %v948
        %v1034 = vpack.c.b16 %v951, %v950
        %v1035 = vpack.c.b16 %v953, %v952
        %v1036 = vpack.c.b16 %v955, %v954
        %v1037 = vpack.c.b16 %v957, %v956
        %v1038 = vpack.c.b16 %v959, %v958
        %v1039 = vpack.c.b16 %v961, %v960
        %v1040 = vpack.c.b16 %v963, %v962
        %v1041 = vpack.c.b16 %v965, %v964
        %v1042 = vpack.c.b16 %v967, %v966
        %v1043 = vpack.c.b16 %v969, %v968
        %v1044 = vpack.c.b16 %v971, %v970
        %v1045 = vpack.c.b16 %v973, %v972
        %v1046 = vpack.c.b16 %v975, %v974
        %v1047 = vpack.c.b16 %v977, %v976
        %v1048 = vpack.c.b16 %v979, %v978
        %v1049 = vpack.c.b16 %v981, %v980
        %v1050 = vpack.c.b16 %v983, %v982
        %v1051 = vpack.c.b16 %v985, %v984
        %v1052 = vpack.c.b16 %v987, %v986
        %v1053 = vpack.c.b16 %v989, %v988
        %v1054 = vpack.c.b16 %v991, %v990
        %v1055 = vpack.c.b16 %v993, %v992
        %v1056 = vpack.c.b16 %v995, %v994
        %v1057 = vpack.c.b16 %v997, %v996
        %v1058 = vpack.c.b16 %v999, %v998
        %v1059 = vpack.c.b16 %v1001, %v1000
        %v1060 = vpack.c.b16 %v1003, %v1002
        %v1061 = vpack.c.b16 %v1005, %v1004
        %v1072 = vunpack.c.l.b16 %v772
        %v1073 = vunpack.c.l.b16 %v773
        %v1074 = vunpack.c.l.b16 %v774
        %v1075 = vunpack.c.l.b16 %v775
        %v1076 = vunpack.c.l.b16 %v776
        %v1077 = vunpack.c.l.b16 %v777
        %v1078 = vunpack.c.l.b16 %v778
        %v1079 = vunpack.c.l.b16 %v779
        %v1080 = vunpack.c.l.b16 %v780
        %v1081 = vunpack.c.l.b16 %v781
        %v1082 = vpack.c.b16 %v1073, %v1072
        %v1083 = vpack.c.b16 %v1075, %v1074
        %v1084 = vpack.c.b16 %v1077, %v1076
        %v1085 = vpack.c.b16 %v1079, %v1078
        %v1086 = vpack.c.b16 %v1081, %v1080
        %vm1091 = vcmask 613376
        %v1093 = vsel %vm1091, %v1006, 0
        %v1096 = vsel %vm1091, %v1007, 0
        %v1099 = vsel %vm1091, %v1008, 0
        %v1102 = vsel %vm1091, %v1009, 0
        %v1105 = vsel %vm1091, %v1010, 0
        %v1108 = vsel %vm1091, %v1011, 0
        %v1111 = vsel %vm1091, %v1012, 0
        %v1114 = vsel %vm1091, %v1013, 0
        %v1117 = vsel %vm1091, %v1014, 0
        %v1120 = vsel %vm1091, %v1015, 0
        %v1123 = vsel %vm1091, %v1016, 0
        %v1126 = vsel %vm1091, %v1017, 0
        %v1129 = vsel %vm1091, %v1018, 0
        %v1132 = vsel %vm1091, %v1019, 0
        %v1135 = vsel %vm1091, %v1020, 0
        %v1138 = vsel %vm1091, %v1021, 0
        %v1141 = vsel %vm1091, %v1022, 0
        %v1144 = vsel %vm1091, %v1023, 0
        %v1147 = vsel %vm1091, %v1024, 0
        %v1150 = vsel %vm1091, %v1025, 0
        %v1153 = vsel %vm1091, %v1026, 0
        %v1156 = vsel %vm1091, %v1027, 0
        %v1159 = vsel %vm1091, %v1028, 0
        %v1162 = vsel %vm1091, %v1029, 0
        %v1165 = vsel %vm1091, %v1030, 0
        %v1168 = vsel %vm1091, %v1031, 0
        %v1171 = vsel %vm1091, %v1032, 0
        %v1174 = vsel %vm1091, %v1033, 0
        %v1177 = vsel %vm1091, %v1034, 0
        %v1180 = vsel %vm1091, %v1035, 0
        %v1183 = vsel %vm1091, %v1036, 0
        %v1186 = vsel %vm1091, %v1037, 0
        %v1189 = vsel %vm1091, %v1038, 0
        %v1192 = vsel %vm1091, %v1039, 0
        %v1195 = vsel %vm1091, %v1040, 0
        %v1198 = vsel %vm1091, %v1041, 0
        %v1201 = vsel %vm1091, %v1042, 0
        %v1204 = vsel %vm1091, %v1043, 0
        %v1207 = vsel %vm1091, %v1044, 0
        %v1210 = vsel %vm1091, %v1045, 0
        %v1213 = vsel %vm1091, %v1046, 0
        %v1216 = vsel %vm1091, %v1047, 0
        %v1219 = vsel %vm1091, %v1048, 0
        %v1222 = vsel %vm1091, %v1049, 0
        %v1225 = vsel %vm1091, %v1050, 0
        %v1228 = vsel %vm1091, %v1051, 0
        %v1231 = vsel %vm1091, %v1052, 0
        %v1234 = vsel %vm1091, %v1053, 0
        %v1237 = vsel %vm1091, %v1054, 0
        %v1240 = vsel %vm1091, %v1055, 0
        %v1243 = vsel %vm1091, %v1056, 0
        %v1246 = vsel %vm1091, %v1057, 0
        %v1249 = vsel %vm1091, %v1058, 0
        %v1252 = vsel %vm1091, %v1059, 0
        %v1255 = vsel %vm1091, %v1060, 0
        %v1258 = vsel %vm1091, %v1061, 0
        %vm1260 = vcmask 1044480
        %vm1261 = vcmask 1045504
        %v1262 = vsel %vm1260, 4294967295, 65535
        %v1263 = vsel %vm1261, %v1262, 0
        %v1265 = vand.u32 %v1086, %v1263
        %1267 = vmatprep.subr.bf16.mxu0 0
        %1268 = vmatpush1.bf16.msra.mxu0 %v1082
        %1269 = vmatprep.subr.bf16.mxu0 0
        %1270 = vmatpush1.bf16.msra.mxu0 %v1083
        %1271 = vmatprep.subr.bf16.mxu0 0
        %1272 = vmatpush1.bf16.msra.mxu0 %v1084
        %1273 = vmatprep.subr.bf16.mxu0 0
        %1274 = vmatpush1.bf16.msra.mxu0 %v1085
        %1275 = vmatprep.subr.bf16.mxu0 0
        %1276 = vmatpush1.bf16.msra.mxu0 %v1265
        %1277 = vmatprep.subr.bf16.mxu0 0
        %1278 = vmatpush1.bf16.msra.mxu0 0
        %1279 = vmatprep.subr.bf16.mxu0 0
        %1280 = vmatpush1.bf16.msra.mxu0 0
        %1281 = vmatprep.subr.bf16.mxu0 0
        %1282 = vmatpush1.bf16.msra.mxu0 0
        %1283 = vmatprep.subr.bf16.mxu0 0
        %1284 = vmatpush1.bf16.msra.mxu0 0
        %1285 = vmatprep.subr.bf16.mxu0 0
        %1286 = vmatpush1.bf16.msra.mxu0 0
        %1287 = vmatprep.subr.bf16.mxu0 0
        %1288 = vmatpush1.bf16.msra.mxu0 0
        %1289 = vmatprep.subr.bf16.mxu0 0
        %1290 = vmatpush1.bf16.msra.mxu0 0
        %1291 = vmatprep.subr.bf16.mxu0 0
        %1292 = vmatpush1.bf16.msra.mxu0 0
        %1293 = vmatprep.subr.bf16.mxu0 0
        %1294 = vmatpush1.bf16.msra.mxu0 0
        %1295 = vmatprep.subr.bf16.mxu0 0
        %1296 = vmatpush1.bf16.msra.mxu0 0
        %1297 = vmatprep.subr.bf16.mxu0 0
        %1298 = vmatpush1.bf16.msra.mxu0 0
        %1299 = vmatprep.mubr.bf16.mxu0 0
        %1300 = vmatmul.mubr.bf16.gmra.mrb[0].mxu0 %v1093
        %v1301 = vpop.f32.mrb[0].mxu0
        %v1302 = vadd.f32 0.0, %v1301
        %v1303 = vpop.f32.mrb[0].mxu0
        %v1304 = vpop.f32.mrb[0].mxu0
        %v1305 = vadd.f32 0.0, %v1304
        %v1306 = vpop.f32.mrb[0].mxu0
        %1307 = vmatprep.mubr.bf16.mxu0 0
        %1308 = vmatmul.mubr.bf16.gmra.mrb[0].mxu0 %v1096
        %v1309 = vpop.f32.mrb[0].mxu0
        %v1310 = vadd.f32 0.0, %v1309
        %v1311 = vpop.f32.mrb[0].mxu0
        %v1312 = vpop.f32.mrb[0].mxu0
        %v1313 = vadd.f32 0.0, %v1312
        %v1314 = vpop.f32.mrb[0].mxu0
        %1315 = vmatprep.mubr.bf16.mxu0 0
        %1316 = vmatmul.mubr.bf16.gmra.mrb[0].mxu0 %v1099
        %v1317 = vpop.f32.mrb[0].mxu0
        %v1318 = vadd.f32 0.0, %v1317
        %v1319 = vpop.f32.mrb[0].mxu0
        %v1320 = vpop.f32.mrb[0].mxu0
        %v1321 = vadd.f32 0.0, %v1320
        %v1322 = vpop.f32.mrb[0].mxu0
        %1323 = vmatprep.mubr.bf16.mxu0 0
        %1324 = vmatmul.mubr.bf16.gmra.mrb[0].mxu0 %v1102
        %v1325 = vpop.f32.mrb[0].mxu0
        %v1326 = vadd.f32 0.0, %v1325
        %v1327 = vpop.f32.mrb[0].mxu0
        %v1328 = vpop.f32.mrb[0].mxu0
        %v1329 = vadd.f32 0.0, %v1328
        %v1330 = vpop.f32.mrb[0].mxu0
        %1331 = vmatprep.mubr.bf16.mxu0 0
        %1332 = vmatmul.mubr.bf16.gmra.mrb[0].mxu0 %v1105
        %v1333 = vpop.f32.mrb[0].mxu0
        %v1334 = vadd.f32 0.0, %v1333
        %v1335 = vpop.f32.mrb[0].mxu0
        %v1336 = vpop.f32.mrb[0].mxu0
        %v1337 = vadd.f32 0.0, %v1336
        %v1338 = vpop.f32.mrb[0].mxu0
        %1339 = vmatprep.mubr.bf16.mxu0 0
        %1340 = vmatmul.mubr.bf16.gmra.mrb[0].mxu0 %v1108
        %v1341 = vpop.f32.mrb[0].mxu0
        %v1342 = vadd.f32 0.0, %v1341
        %v1343 = vpop.f32.mrb[0].mxu0
        %v1344 = vpop.f32.mrb[0].mxu0
        %v1345 = vadd.f32 0.0, %v1344
        %v1346 = vpop.f32.mrb[0].mxu0
        %1347 = vmatprep.mubr.bf16.mxu0 0
        %1348 = vmatmul.mubr.bf16.gmra.mrb[0].mxu0 %v1111
        %v1349 = vpop.f32.mrb[0].mxu0
        %v1350 = vadd.f32 0.0, %v1349
        %v1351 = vpop.f32.mrb[0].mxu0
        %v1352 = vpop.f32.mrb[0].mxu0
        %v1353 = vadd.f32 0.0, %v1352
        %v1354 = vpop.f32.mrb[0].mxu0
        %1355 = vmatprep.mubr.bf16.mxu0 0
        %1356 = vmatmul.mubr.bf16.gmra.mrb[0].mxu0 %v1114
        %v1357 = vpop.f32.mrb[0].mxu0
        %v1358 = vadd.f32 0.0, %v1357
        %v1359 = vpop.f32.mrb[0].mxu0
        %v1360 = vpop.f32.mrb[0].mxu0
        %v1361 = vadd.f32 0.0, %v1360
        %v1362 = vpop.f32.mrb[0].mxu0
        %1363 = vmatprep.mubr.bf16.mxu0 0
        %1364 = vmatmul.mubr.bf16.gmra.mrb[0].mxu0 %v1117
        %v1365 = vpop.f32.mrb[0].mxu0
        %v1366 = vadd.f32 0.0, %v1365
        %v1367 = vpop.f32.mrb[0].mxu0
        %v1368 = vpop.f32.mrb[0].mxu0
        %v1369 = vadd.f32 0.0, %v1368
        %v1370 = vpop.f32.mrb[0].mxu0
        %1371 = vmatprep.mubr.bf16.mxu0 0
        %1372 = vmatmul.mubr.bf16.gmra.mrb[0].mxu0 %v1120
        %v1373 = vpop.f32.mrb[0].mxu0
        %v1374 = vadd.f32 0.0, %v1373
        %v1375 = vpop.f32.mrb[0].mxu0
        %v1376 = vpop.f32.mrb[0].mxu0
        %v1377 = vadd.f32 0.0, %v1376
        %v1378 = vpop.f32.mrb[0].mxu0
        %1379 = vmatprep.mubr.bf16.mxu0 0
        %1380 = vmatmul.mubr.bf16.gmra.mrb[0].mxu0 %v1123
        %v1381 = vpop.f32.mrb[0].mxu0
        %v1382 = vadd.f32 0.0, %v1381
        %v1383 = vpop.f32.mrb[0].mxu0
        %v1384 = vpop.f32.mrb[0].mxu0
        %v1385 = vadd.f32 0.0, %v1384
        %v1386 = vpop.f32.mrb[0].mxu0
        %1387 = vmatprep.mubr.bf16.mxu0 0
        %1388 = vmatmul.mubr.bf16.gmra.mrb[0].mxu0 %v1126
        %v1389 = vpop.f32.mrb[0].mxu0
        %v1390 = vadd.f32 0.0, %v1389
        %v1391 = vpop.f32.mrb[0].mxu0
        %v1392 = vpop.f32.mrb[0].mxu0
        %v1393 = vadd.f32 0.0, %v1392
        %v1394 = vpop.f32.mrb[0].mxu0
        %1395 = vmatprep.mubr.bf16.mxu0 0
        %1396 = vmatmul.mubr.bf16.gmra.mrb[0].mxu0 %v1129
        %v1397 = vpop.f32.mrb[0].mxu0
        %v1398 = vadd.f32 0.0, %v1397
        %v1399 = vpop.f32.mrb[0].mxu0
        %v1400 = vpop.f32.mrb[0].mxu0
        %v1401 = vadd.f32 0.0, %v1400
        %v1402 = vpop.f32.mrb[0].mxu0
        %1403 = vmatprep.mubr.bf16.mxu0 0
        %1404 = vmatmul.mubr.bf16.gmra.mrb[0].mxu0 %v1132
        %v1405 = vpop.f32.mrb[0].mxu0
        %v1406 = vadd.f32 0.0, %v1405
        %v1407 = vpop.f32.mrb[0].mxu0
        %v1408 = vpop.f32.mrb[0].mxu0
        %v1409 = vadd.f32 0.0, %v1408
        %v1410 = vpop.f32.mrb[0].mxu0
        %1411 = vmatprep.mubr.bf16.mxu0 0
        %1412 = vmatmul.mubr.bf16.gmra.mrb[0].mxu0 %v1135
        %v1413 = vpop.f32.mrb[0].mxu0
        %v1414 = vadd.f32 0.0, %v1413
        %v1415 = vpop.f32.mrb[0].mxu0
        %v1416 = vpop.f32.mrb[0].mxu0
        %v1417 = vadd.f32 0.0, %v1416
        %v1418 = vpop.f32.mrb[0].mxu0
        %1419 = vmatprep.mubr.bf16.mxu0 0
        %1420 = vmatmul.mubr.bf16.gmra.mrb[0].mxu0 %v1138
        %v1421 = vpop.f32.mrb[0].mxu0
        %v1422 = vadd.f32 0.0, %v1421
        %v1423 = vpop.f32.mrb[0].mxu0
        %v1424 = vpop.f32.mrb[0].mxu0
        %v1425 = vadd.f32 0.0, %v1424
        %v1426 = vpop.f32.mrb[0].mxu0
        %1427 = vmatprep.mubr.bf16.mxu0 0
        %1428 = vmatmul.mubr.bf16.gmra.mrb[0].mxu0 %v1141
        %v1429 = vpop.f32.mrb[0].mxu0
        %v1430 = vadd.f32 0.0, %v1429
        %v1431 = vpop.f32.mrb[0].mxu0
        %v1432 = vpop.f32.mrb[0].mxu0
        %v1433 = vadd.f32 0.0, %v1432
        %v1434 = vpop.f32.mrb[0].mxu0
        %1435 = vmatprep.mubr.bf16.mxu0 0
        %1436 = vmatmul.mubr.bf16.gmra.mrb[0].mxu0 %v1144
        %v1437 = vpop.f32.mrb[0].mxu0
        %v1438 = vadd.f32 0.0, %v1437
        %v1439 = vpop.f32.mrb[0].mxu0
        %v1440 = vpop.f32.mrb[0].mxu0
        %v1441 = vadd.f32 0.0, %v1440
        %v1442 = vpop.f32.mrb[0].mxu0
        %1443 = vmatprep.mubr.bf16.mxu0 0
        %1444 = vmatmul.mubr.bf16.gmra.mrb[0].mxu0 %v1147
        %v1445 = vpop.f32.mrb[0].mxu0
        %v1446 = vadd.f32 0.0, %v1445
        %v1447 = vpop.f32.mrb[0].mxu0
        %v1448 = vpop.f32.mrb[0].mxu0
        %v1449 = vadd.f32 0.0, %v1448
        %v1450 = vpop.f32.mrb[0].mxu0
        %1451 = vmatprep.mubr.bf16.mxu0 0
        %1452 = vmatmul.mubr.bf16.gmra.mrb[0].mxu0 %v1150
        %v1453 = vpop.f32.mrb[0].mxu0
        %v1454 = vadd.f32 0.0, %v1453
        %v1455 = vpop.f32.mrb[0].mxu0
        %v1456 = vpop.f32.mrb[0].mxu0
        %v1457 = vadd.f32 0.0, %v1456
        %v1458 = vpop.f32.mrb[0].mxu0
        %1459 = vmatprep.mubr.bf16.mxu0 0
        %1460 = vmatmul.mubr.bf16.gmra.mrb[0].mxu0 %v1153
        %v1461 = vpop.f32.mrb[0].mxu0
        %v1462 = vadd.f32 0.0, %v1461
        %v1463 = vpop.f32.mrb[0].mxu0
        %v1464 = vpop.f32.mrb[0].mxu0
        %v1465 = vadd.f32 0.0, %v1464
        %v1466 = vpop.f32.mrb[0].mxu0
        %1467 = vmatprep.mubr.bf16.mxu0 0
        %1468 = vmatmul.mubr.bf16.gmra.mrb[0].mxu0 %v1156
        %v1469 = vpop.f32.mrb[0].mxu0
        %v1470 = vadd.f32 0.0, %v1469
        %v1471 = vpop.f32.mrb[0].mxu0
        %v1472 = vpop.f32.mrb[0].mxu0
        %v1473 = vadd.f32 0.0, %v1472
        %v1474 = vpop.f32.mrb[0].mxu0
        %1475 = vmatprep.mubr.bf16.mxu0 0
        %1476 = vmatmul.mubr.bf16.gmra.mrb[0].mxu0 %v1159
        %v1477 = vpop.f32.mrb[0].mxu0
        %v1478 = vadd.f32 0.0, %v1477
        %v1479 = vpop.f32.mrb[0].mxu0
        %v1480 = vpop.f32.mrb[0].mxu0
        %v1481 = vadd.f32 0.0, %v1480
        %v1482 = vpop.f32.mrb[0].mxu0
        %1483 = vmatprep.mubr.bf16.mxu0 0
        %1484 = vmatmul.mubr.bf16.gmra.mrb[0].mxu0 %v1162
        %v1485 = vpop.f32.mrb[0].mxu0
        %v1486 = vadd.f32 0.0, %v1485
        %v1487 = vpop.f32.mrb[0].mxu0
        %v1488 = vpop.f32.mrb[0].mxu0
        %v1489 = vadd.f32 0.0, %v1488
        %v1490 = vpop.f32.mrb[0].mxu0
        %1491 = vmatprep.mubr.bf16.mxu0 0
        %1492 = vmatmul.mubr.bf16.gmra.mrb[0].mxu0 %v1165
        %v1493 = vpop.f32.mrb[0].mxu0
        %v1494 = vadd.f32 0.0, %v1493
        %v1495 = vpop.f32.mrb[0].mxu0
        %v1496 = vpop.f32.mrb[0].mxu0
        %v1497 = vadd.f32 0.0, %v1496
        %v1498 = vpop.f32.mrb[0].mxu0
        %1499 = vmatprep.mubr.bf16.mxu0 0
        %1500 = vmatmul.mubr.bf16.gmra.mrb[0].mxu0 %v1168
        %v1501 = vpop.f32.mrb[0].mxu0
        %v1502 = vadd.f32 0.0, %v1501
        %v1503 = vpop.f32.mrb[0].mxu0
        %v1504 = vpop.f32.mrb[0].mxu0
        %v1505 = vadd.f32 0.0, %v1504
        %v1506 = vpop.f32.mrb[0].mxu0
        %1507 = vmatprep.mubr.bf16.mxu0 0
        %1508 = vmatmul.mubr.bf16.gmra.mrb[0].mxu0 %v1171
        %v1509 = vpop.f32.mrb[0].mxu0
        %v1510 = vadd.f32 0.0, %v1509
        %v1511 = vpop.f32.mrb[0].mxu0
        %v1512 = vpop.f32.mrb[0].mxu0
        %v1513 = vadd.f32 0.0, %v1512
        %v1514 = vpop.f32.mrb[0].mxu0
        %1515 = vmatprep.mubr.bf16.mxu0 0
        %1516 = vmatmul.mubr.bf16.gmra.mrb[0].mxu0 %v1174
        %v1517 = vpop.f32.mrb[0].mxu0
        %v1518 = vadd.f32 0.0, %v1517
        %v1519 = vpop.f32.mrb[0].mxu0
        %v1520 = vpop.f32.mrb[0].mxu0
        %v1521 = vadd.f32 0.0, %v1520
        %v1522 = vpop.f32.mrb[0].mxu0
        %1523 = vmatprep.mubr.bf16.mxu0 0
        %1524 = vmatmul.mubr.bf16.gmra.mrb[0].mxu0 %v1177
        %v1525 = vpop.f32.mrb[0].mxu0
        %v1526 = vadd.f32 0.0, %v1525
        %v1527 = vpop.f32.mrb[0].mxu0
        %v1528 = vpop.f32.mrb[0].mxu0
        %v1529 = vadd.f32 0.0, %v1528
        %v1530 = vpop.f32.mrb[0].mxu0
        %1531 = vmatprep.mubr.bf16.mxu0 0
        %1532 = vmatmul.mubr.bf16.gmra.mrb[0].mxu0 %v1180
        %v1533 = vpop.f32.mrb[0].mxu0
        %v1534 = vadd.f32 0.0, %v1533
        %v1535 = vpop.f32.mrb[0].mxu0
        %v1536 = vpop.f32.mrb[0].mxu0
        %v1537 = vadd.f32 0.0, %v1536
        %v1538 = vpop.f32.mrb[0].mxu0
        %1539 = vmatprep.mubr.bf16.mxu0 0
        %1540 = vmatmul.mubr.bf16.gmra.mrb[0].mxu0 %v1183
        %v1541 = vpop.f32.mrb[0].mxu0
        %v1542 = vadd.f32 0.0, %v1541
        %v1543 = vpop.f32.mrb[0].mxu0
        %v1544 = vpop.f32.mrb[0].mxu0
        %v1545 = vadd.f32 0.0, %v1544
        %v1546 = vpop.f32.mrb[0].mxu0
        %1547 = vmatprep.mubr.bf16.mxu0 0
        %1548 = vmatmul.mubr.bf16.gmra.mrb[0].mxu0 %v1186
        %v1549 = vpop.f32.mrb[0].mxu0
        %v1550 = vadd.f32 0.0, %v1549
        %v1551 = vpop.f32.mrb[0].mxu0
        %v1552 = vpop.f32.mrb[0].mxu0
        %v1553 = vadd.f32 0.0, %v1552
        %v1554 = vpop.f32.mrb[0].mxu0
        %1555 = vmatprep.mubr.bf16.mxu0 0
        %1556 = vmatmul.mubr.bf16.gmra.mrb[0].mxu0 %v1189
        %v1557 = vpop.f32.mrb[0].mxu0
        %v1558 = vadd.f32 0.0, %v1557
        %v1559 = vpop.f32.mrb[0].mxu0
        %v1560 = vpop.f32.mrb[0].mxu0
        %v1561 = vadd.f32 0.0, %v1560
        %v1562 = vpop.f32.mrb[0].mxu0
        %1563 = vmatprep.mubr.bf16.mxu0 0
        %1564 = vmatmul.mubr.bf16.gmra.mrb[0].mxu0 %v1192
        %v1565 = vpop.f32.mrb[0].mxu0
        %v1566 = vadd.f32 0.0, %v1565
        %v1567 = vpop.f32.mrb[0].mxu0
        %v1568 = vpop.f32.mrb[0].mxu0
        %v1569 = vadd.f32 0.0, %v1568
        %v1570 = vpop.f32.mrb[0].mxu0
        %1571 = vmatprep.mubr.bf16.mxu0 0
        %1572 = vmatmul.mubr.bf16.gmra.mrb[0].mxu0 %v1195
        %v1573 = vpop.f32.mrb[0].mxu0
        %v1574 = vadd.f32 0.0, %v1573
        %v1575 = vpop.f32.mrb[0].mxu0
        %v1576 = vpop.f32.mrb[0].mxu0
        %v1577 = vadd.f32 0.0, %v1576
        %v1578 = vpop.f32.mrb[0].mxu0
        %1579 = vmatprep.mubr.bf16.mxu0 0
        %1580 = vmatmul.mubr.bf16.gmra.mrb[0].mxu0 %v1198
        %v1581 = vpop.f32.mrb[0].mxu0
        %v1582 = vadd.f32 0.0, %v1581
        %v1583 = vpop.f32.mrb[0].mxu0
        %v1584 = vpop.f32.mrb[0].mxu0
        %v1585 = vadd.f32 0.0, %v1584
        %v1586 = vpop.f32.mrb[0].mxu0
        %1587 = vmatprep.mubr.bf16.mxu0 0
        %1588 = vmatmul.mubr.bf16.gmra.mrb[0].mxu0 %v1201
        %v1589 = vpop.f32.mrb[0].mxu0
        %v1590 = vadd.f32 0.0, %v1589
        %v1591 = vpop.f32.mrb[0].mxu0
        %v1592 = vpop.f32.mrb[0].mxu0
        %v1593 = vadd.f32 0.0, %v1592
        %v1594 = vpop.f32.mrb[0].mxu0
        %1595 = vmatprep.mubr.bf16.mxu0 0
        %1596 = vmatmul.mubr.bf16.gmra.mrb[0].mxu0 %v1204
        %v1597 = vpop.f32.mrb[0].mxu0
        %v1598 = vadd.f32 0.0, %v1597
        %v1599 = vpop.f32.mrb[0].mxu0
        %v1600 = vpop.f32.mrb[0].mxu0
        %v1601 = vadd.f32 0.0, %v1600
        %v1602 = vpop.f32.mrb[0].mxu0
        %1603 = vmatprep.mubr.bf16.mxu0 0
        %1604 = vmatmul.mubr.bf16.gmra.mrb[0].mxu0 %v1207
        %v1605 = vpop.f32.mrb[0].mxu0
        %v1606 = vadd.f32 0.0, %v1605
        %v1607 = vpop.f32.mrb[0].mxu0
        %v1608 = vpop.f32.mrb[0].mxu0
        %v1609 = vadd.f32 0.0, %v1608
        %v1610 = vpop.f32.mrb[0].mxu0
        %1611 = vmatprep.mubr.bf16.mxu0 0
        %1612 = vmatmul.mubr.bf16.gmra.mrb[0].mxu0 %v1210
        %v1613 = vpop.f32.mrb[0].mxu0
        %v1614 = vadd.f32 0.0, %v1613
        %v1615 = vpop.f32.mrb[0].mxu0
        %v1616 = vpop.f32.mrb[0].mxu0
        %v1617 = vadd.f32 0.0, %v1616
        %v1618 = vpop.f32.mrb[0].mxu0
        %1619 = vmatprep.mubr.bf16.mxu0 0
        %1620 = vmatmul.mubr.bf16.gmra.mrb[0].mxu0 %v1213
        %v1621 = vpop.f32.mrb[0].mxu0
        %v1622 = vadd.f32 0.0, %v1621
        %v1623 = vpop.f32.mrb[0].mxu0
        %v1624 = vpop.f32.mrb[0].mxu0
        %v1625 = vadd.f32 0.0, %v1624
        %v1626 = vpop.f32.mrb[0].mxu0
        %1627 = vmatprep.mubr.bf16.mxu0 0
        %1628 = vmatmul.mubr.bf16.gmra.mrb[0].mxu0 %v1216
        %v1629 = vpop.f32.mrb[0].mxu0
        %v1630 = vadd.f32 0.0, %v1629
        %v1631 = vpop.f32.mrb[0].mxu0
        %v1632 = vpop.f32.mrb[0].mxu0
        %v1633 = vadd.f32 0.0, %v1632
        %v1634 = vpop.f32.mrb[0].mxu0
        %1635 = vmatprep.mubr.bf16.mxu0 0
        %1636 = vmatmul.mubr.bf16.gmra.mrb[0].mxu0 %v1219
        %v1637 = vpop.f32.mrb[0].mxu0
        %v1638 = vadd.f32 0.0, %v1637
        %v1639 = vpop.f32.mrb[0].mxu0
        %v1640 = vpop.f32.mrb[0].mxu0
        %v1641 = vadd.f32 0.0, %v1640
        %v1642 = vpop.f32.mrb[0].mxu0
        %1643 = vmatprep.mubr.bf16.mxu0 0
        %1644 = vmatmul.mubr.bf16.gmra.mrb[0].mxu0 %v1222
        %v1645 = vpop.f32.mrb[0].mxu0
        %v1646 = vadd.f32 0.0, %v1645
        %v1647 = vpop.f32.mrb[0].mxu0
        %v1648 = vpop.f32.mrb[0].mxu0
        %v1649 = vadd.f32 0.0, %v1648
        %v1650 = vpop.f32.mrb[0].mxu0
        %1651 = vmatprep.mubr.bf16.mxu0 0
        %1652 = vmatmul.mubr.bf16.gmra.mrb[0].mxu0 %v1225
        %v1653 = vpop.f32.mrb[0].mxu0
        %v1654 = vadd.f32 0.0, %v1653
        %v1655 = vpop.f32.mrb[0].mxu0
        %v1656 = vpop.f32.mrb[0].mxu0
        %v1657 = vadd.f32 0.0, %v1656
        %v1658 = vpop.f32.mrb[0].mxu0
        %1659 = vmatprep.mubr.bf16.mxu0 0
        %1660 = vmatmul.mubr.bf16.gmra.mrb[0].mxu0 %v1228
        %v1661 = vpop.f32.mrb[0].mxu0
        %v1662 = vadd.f32 0.0, %v1661
        %v1663 = vpop.f32.mrb[0].mxu0
        %v1664 = vpop.f32.mrb[0].mxu0
        %v1665 = vadd.f32 0.0, %v1664
        %v1666 = vpop.f32.mrb[0].mxu0
        %1667 = vmatprep.mubr.bf16.mxu0 0
        %1668 = vmatmul.mubr.bf16.gmra.mrb[0].mxu0 %v1231
        %v1669 = vpop.f32.mrb[0].mxu0
        %v1670 = vadd.f32 0.0, %v1669
        %v1671 = vpop.f32.mrb[0].mxu0
        %v1672 = vpop.f32.mrb[0].mxu0
        %v1673 = vadd.f32 0.0, %v1672
        %v1674 = vpop.f32.mrb[0].mxu0
        %1675 = vmatprep.mubr.bf16.mxu0 0
        %1676 = vmatmul.mubr.bf16.gmra.mrb[0].mxu0 %v1234
        %v1677 = vpop.f32.mrb[0].mxu0
        %v1678 = vadd.f32 0.0, %v1677
        %v1679 = vpop.f32.mrb[0].mxu0
        %v1680 = vpop.f32.mrb[0].mxu0
        %v1681 = vadd.f32 0.0, %v1680
        %v1682 = vpop.f32.mrb[0].mxu0
        %1683 = vmatprep.mubr.bf16.mxu0 0
        %1684 = vmatmul.mubr.bf16.gmra.mrb[0].mxu0 %v1237
        %v1685 = vpop.f32.mrb[0].mxu0
        %v1686 = vadd.f32 0.0, %v1685
        %v1687 = vpop.f32.mrb[0].mxu0
        %v1688 = vpop.f32.mrb[0].mxu0
        %v1689 = vadd.f32 0.0, %v1688
        %v1690 = vpop.f32.mrb[0].mxu0
        %1691 = vmatprep.mubr.bf16.mxu0 0
        %1692 = vmatmul.mubr.bf16.gmra.mrb[0].mxu0 %v1240
        %v1693 = vpop.f32.mrb[0].mxu0
        %v1694 = vadd.f32 0.0, %v1693
        %v1695 = vpop.f32.mrb[0].mxu0
        %v1696 = vpop.f32.mrb[0].mxu0
        %v1697 = vadd.f32 0.0, %v1696
        %v1698 = vpop.f32.mrb[0].mxu0
        %1699 = vmatprep.mubr.bf16.mxu0 0
        %1700 = vmatmul.mubr.bf16.gmra.mrb[0].mxu0 %v1243
        %v1701 = vpop.f32.mrb[0].mxu0
        %v1702 = vadd.f32 0.0, %v1701
        %v1703 = vpop.f32.mrb[0].mxu0
        %v1704 = vpop.f32.mrb[0].mxu0
        %v1705 = vadd.f32 0.0, %v1704
        %v1706 = vpop.f32.mrb[0].mxu0
        %1707 = vmatprep.mubr.bf16.mxu0 0
        %1708 = vmatmul.mubr.bf16.gmra.mrb[0].mxu0 %v1246
        %v1709 = vpop.f32.mrb[0].mxu0
        %v1710 = vadd.f32 0.0, %v1709
        %v1711 = vpop.f32.mrb[0].mxu0
        %v1712 = vpop.f32.mrb[0].mxu0
        %v1713 = vadd.f32 0.0, %v1712
        %v1714 = vpop.f32.mrb[0].mxu0
        %1715 = vmatprep.mubr.bf16.mxu0 0
        %1716 = vmatmul.mubr.bf16.gmra.mrb[0].mxu0 %v1249
        %v1717 = vpop.f32.mrb[0].mxu0
        %v1718 = vadd.f32 0.0, %v1717
        %v1719 = vpop.f32.mrb[0].mxu0
        %v1720 = vpop.f32.mrb[0].mxu0
        %v1721 = vadd.f32 0.0, %v1720
        %v1722 = vpop.f32.mrb[0].mxu0
        %1723 = vmatprep.mubr.bf16.mxu0 0
        %1724 = vmatmul.mubr.bf16.gmra.mrb[0].mxu0 %v1252
        %v1725 = vpop.f32.mrb[0].mxu0
        %v1726 = vadd.f32 0.0, %v1725
        %v1727 = vpop.f32.mrb[0].mxu0
        %v1728 = vpop.f32.mrb[0].mxu0
        %v1729 = vadd.f32 0.0, %v1728
        %v1730 = vpop.f32.mrb[0].mxu0
        %1731 = vmatprep.mubr.bf16.mxu0 0
        %1732 = vmatmul.mubr.bf16.gmra.mrb[0].mxu0 %v1255
        %v1733 = vpop.f32.mrb[0].mxu0
        %v1734 = vadd.f32 0.0, %v1733
        %v1735 = vpop.f32.mrb[0].mxu0
        %v1736 = vpop.f32.mrb[0].mxu0
        %v1737 = vadd.f32 0.0, %v1736
        %v1738 = vpop.f32.mrb[0].mxu0
        %1739 = vmatprep.mubr.bf16.mxu0 0
        %1740 = vmatmul.mubr.bf16.gmra.mrb[0].mxu0 %v1258
        %v1741 = vpop.f32.mrb[0].mxu0
        %v1742 = vadd.f32 0.0, %v1741
        %v1743 = vpop.f32.mrb[0].mxu0
        %v1744 = vpop.f32.mrb[0].mxu0
        %v1745 = vadd.f32 0.0, %v1744
        %v1746 = vpop.f32.mrb[0].mxu0
        %1747 = vdwg.mxu0
        %v1748 = vmax.f32 %v1302, %v1414
        %v1749 = vmax.f32 %v1305, %v1417
        %v1750 = vmax.f32 %v1310, %v1422
        %v1751 = vmax.f32 %v1313, %v1425
        %v1752 = vmax.f32 %v1318, %v1430
        %v1753 = vmax.f32 %v1321, %v1433
        %v1754 = vmax.f32 %v1326, %v1438
        %v1755 = vmax.f32 %v1329, %v1441
        %v1756 = vmax.f32 %v1334, %v1446
        %v1757 = vmax.f32 %v1337, %v1449
        %v1758 = vmax.f32 %v1342, %v1454
        %v1759 = vmax.f32 %v1345, %v1457
        %v1760 = vmax.f32 %v1350, %v1462
        %v1761 = vmax.f32 %v1353, %v1465
        %v1762 = vmax.f32 %v1358, %v1470
        %v1763 = vmax.f32 %v1361, %v1473
        %v1764 = vmax.f32 %v1366, %v1478
        %v1765 = vmax.f32 %v1369, %v1481
        %v1766 = vmax.f32 %v1374, %v1486
        %v1767 = vmax.f32 %v1377, %v1489
        %v1768 = vmax.f32 %v1382, %v1494
        %v1769 = vmax.f32 %v1385, %v1497
        %v1770 = vmax.f32 %v1390, %v1502
        %v1771 = vmax.f32 %v1393, %v1505
        %v1772 = vmax.f32 %v1398, %v1510
        %v1773 = vmax.f32 %v1401, %v1513
        %v1774 = vmax.f32 %v1406, %v1518
        %v1775 = vmax.f32 %v1409, %v1521
        %v1776 = vmax.f32 %v1526, %v1638
        %v1777 = vmax.f32 %v1529, %v1641
        %v1778 = vmax.f32 %v1534, %v1646
        %v1779 = vmax.f32 %v1537, %v1649
        %v1780 = vmax.f32 %v1542, %v1654
        %v1781 = vmax.f32 %v1545, %v1657
        %v1782 = vmax.f32 %v1550, %v1662
        %v1783 = vmax.f32 %v1553, %v1665
        %v1784 = vmax.f32 %v1558, %v1670
        %v1785 = vmax.f32 %v1561, %v1673
        %v1786 = vmax.f32 %v1566, %v1678
        %v1787 = vmax.f32 %v1569, %v1681
        %v1788 = vmax.f32 %v1574, %v1686
        %v1789 = vmax.f32 %v1577, %v1689
        %v1790 = vmax.f32 %v1582, %v1694
        %v1791 = vmax.f32 %v1585, %v1697
        %v1792 = vmax.f32 %v1590, %v1702
        %v1793 = vmax.f32 %v1593, %v1705
        %v1794 = vmax.f32 %v1598, %v1710
        %v1795 = vmax.f32 %v1601, %v1713
        %v1796 = vmax.f32 %v1606, %v1718
        %v1797 = vmax.f32 %v1609, %v1721
        %v1798 = vmax.f32 %v1614, %v1726
        %v1799 = vmax.f32 %v1617, %v1729
        %v1800 = vmax.f32 %v1622, %v1734
        %v1801 = vmax.f32 %v1625, %v1737
        %v1802 = vmax.f32 %v1630, %v1742
        %v1803 = vmax.f32 %v1633, %v1745
        %v1804 = vmax.f32 %v1748, %v1776
        %v1805 = vmax.f32 %v1749, %v1777
        %v1806 = vmax.f32 %v1750, %v1778
        %v1807 = vmax.f32 %v1751, %v1779
        %v1808 = vmax.f32 %v1752, %v1780
        %v1809 = vmax.f32 %v1753, %v1781
        %v1810 = vmax.f32 %v1754, %v1782
        %v1811 = vmax.f32 %v1755, %v1783
        %v1812 = vmax.f32 %v1756, %v1784
        %v1813 = vmax.f32 %v1757, %v1785
        %v1814 = vmax.f32 %v1758, %v1786
        %v1815 = vmax.f32 %v1759, %v1787
        %v1816 = vmax.f32 %v1760, %v1788
        %v1817 = vmax.f32 %v1761, %v1789
        %v1818 = vmax.f32 %v1762, %v1790
        %v1819 = vmax.f32 %v1763, %v1791
        %v1820 = vmax.f32 %v1764, %v1792
        %v1821 = vmax.f32 %v1765, %v1793
        %v1822 = vmax.f32 %v1766, %v1794
        %v1823 = vmax.f32 %v1767, %v1795
        %v1824 = vmax.f32 %v1768, %v1796
        %v1825 = vmax.f32 %v1769, %v1797
        %v1826 = vmax.f32 %v1770, %v1798
        %v1827 = vmax.f32 %v1771, %v1799
        %v1828 = vmax.f32 %v1772, %v1800
        %v1829 = vmax.f32 %v1773, %v1801
        %v1830 = vmax.f32 %v1774, %v1802
        %v1831 = vmax.f32 %v1775, %v1803
        %v1832 = vld [vmem:[%s2] sm:$0x1]
        %v1834 = vlaneseq
        %v1835 = vshrl.u32 %v1834, 7
        %v1836 = vsub.s32 0, %v1835
        %v1837 = vrot.slane %v1832, %v1836
        %v1839 = vadd.f32 %v1804, %v1837
        %v1840 = vadd.f32 %v1805, %v1837
        %v1841 = vadd.f32 %v1806, %v1837
        %v1842 = vadd.f32 %v1807, %v1837
        %v1843 = vadd.f32 %v1808, %v1837
        %v1844 = vadd.f32 %v1809, %v1837
        %v1845 = vadd.f32 %v1810, %v1837
        %v1846 = vadd.f32 %v1811, %v1837
        %v1847 = vadd.f32 %v1812, %v1837
        %v1848 = vadd.f32 %v1813, %v1837
        %v1849 = vadd.f32 %v1814, %v1837
        %v1850 = vadd.f32 %v1815, %v1837
        %v1851 = vadd.f32 %v1816, %v1837
        %v1852 = vadd.f32 %v1817, %v1837
        %v1853 = vadd.f32 %v1818, %v1837
        %v1854 = vadd.f32 %v1819, %v1837
        %v1855 = vadd.f32 %v1820, %v1837
        %v1856 = vadd.f32 %v1821, %v1837
        %v1857 = vadd.f32 %v1822, %v1837
        %v1858 = vadd.f32 %v1823, %v1837
        %v1859 = vadd.f32 %v1824, %v1837
        %v1860 = vadd.f32 %v1825, %v1837
        %v1861 = vadd.f32 %v1826, %v1837
        %v1862 = vadd.f32 %v1827, %v1837
        %v1863 = vadd.f32 %v1828, %v1837
        %v1864 = vadd.f32 %v1829, %v1837
        %v1865 = vadd.f32 %v1830, %v1837
        %v1866 = vadd.f32 %v1831, %v1837
        %v1867 = vmax.f32 %v1839, 0.0
        %v1868 = vmax.f32 %v1840, 0.0
        %v1869 = vmax.f32 %v1841, 0.0
        %v1870 = vmax.f32 %v1842, 0.0
        %v1871 = vmax.f32 %v1843, 0.0
        %v1872 = vmax.f32 %v1844, 0.0
        %v1873 = vmax.f32 %v1845, 0.0
        %v1874 = vmax.f32 %v1846, 0.0
        %v1875 = vmax.f32 %v1847, 0.0
        %v1876 = vmax.f32 %v1848, 0.0
        %v1877 = vmax.f32 %v1849, 0.0
        %v1878 = vmax.f32 %v1850, 0.0
        %v1879 = vmax.f32 %v1851, 0.0
        %v1880 = vmax.f32 %v1852, 0.0
        %v1881 = vmax.f32 %v1853, 0.0
        %v1882 = vmax.f32 %v1854, 0.0
        %v1883 = vmax.f32 %v1855, 0.0
        %v1884 = vmax.f32 %v1856, 0.0
        %v1885 = vmax.f32 %v1857, 0.0
        %v1886 = vmax.f32 %v1858, 0.0
        %v1887 = vmax.f32 %v1859, 0.0
        %v1888 = vmax.f32 %v1860, 0.0
        %v1889 = vmax.f32 %v1861, 0.0
        %v1890 = vmax.f32 %v1862, 0.0
        %v1891 = vmax.f32 %v1863, 0.0
        %v1892 = vmax.f32 %v1864, 0.0
        %v1893 = vmax.f32 %v1865, 0.0
        %v1894 = vmax.f32 %v1866, 0.0
        %v1895 = vpack.c.bf16 %v1868, %v1867
        %v1896 = vpack.c.bf16 %v1870, %v1869
        %v1897 = vpack.c.bf16 %v1872, %v1871
        %v1898 = vpack.c.bf16 %v1874, %v1873
        %v1899 = vpack.c.bf16 %v1876, %v1875
        %v1900 = vpack.c.bf16 %v1878, %v1877
        %v1901 = vpack.c.bf16 %v1880, %v1879
        %v1902 = vpack.c.bf16 %v1882, %v1881
        %v1903 = vpack.c.bf16 %v1884, %v1883
        %v1904 = vpack.c.bf16 %v1886, %v1885
        %v1905 = vpack.c.bf16 %v1888, %v1887
        %v1906 = vpack.c.bf16 %v1890, %v1889
        %v1907 = vpack.c.bf16 %v1892, %v1891
        %v1908 = vpack.c.bf16 %v1894, %v1893
        %v1923 = vunpack.c.l.b16 %v1895
        %v1924 = vunpack.c.h.b16 %v1895
        %v1925 = vunpack.c.l.b16 %v1896
        %v1926 = vunpack.c.h.b16 %v1896
        %v1927 = vunpack.c.l.b16 %v1897
        %v1928 = vunpack.c.h.b16 %v1897
        %v1929 = vunpack.c.l.b16 %v1898
        %v1930 = vunpack.c.h.b16 %v1898
        %v1931 = vunpack.c.l.b16 %v1899
        %v1932 = vunpack.c.h.b16 %v1899
        %v1933 = vunpack.c.l.b16 %v1900
        %v1934 = vunpack.c.h.b16 %v1900
        %v1935 = vunpack.c.l.b16 %v1901
        %v1936 = vunpack.c.h.b16 %v1901
        %v1937 = vunpack.c.l.b16 %v1902
        %v1938 = vunpack.c.h.b16 %v1902
        %v1939 = vunpack.c.l.b16 %v1903
        %v1940 = vunpack.c.h.b16 %v1903
        %v1941 = vunpack.c.l.b16 %v1904
        %v1942 = vunpack.c.h.b16 %v1904
        %v1943 = vunpack.c.l.b16 %v1905
        %v1944 = vunpack.c.h.b16 %v1905
        %v1945 = vunpack.c.l.b16 %v1906
        %v1946 = vunpack.c.h.b16 %v1906
        %v1947 = vunpack.c.l.b16 %v1907
        %v1948 = vunpack.c.h.b16 %v1907
        %v1949 = vunpack.c.l.b16 %v1908
        %v1950 = vunpack.c.h.b16 %v1908
        %v1951 = vpack.c.b16 %v1923, %v1923
        %v1952 = vpack.c.b16 %v1924, %v1924
        %v1953 = vpack.c.b16 %v1925, %v1925
        %v1954 = vpack.c.b16 %v1926, %v1926
        %v1955 = vpack.c.b16 %v1927, %v1927
        %v1956 = vpack.c.b16 %v1928, %v1928
        %v1957 = vpack.c.b16 %v1929, %v1929
        %v1958 = vpack.c.b16 %v1930, %v1930
        %v1959 = vpack.c.b16 %v1931, %v1931
        %v1960 = vpack.c.b16 %v1932, %v1932
        %v1961 = vpack.c.b16 %v1933, %v1933
        %v1962 = vpack.c.b16 %v1934, %v1934
        %v1963 = vpack.c.b16 %v1935, %v1935
        %v1964 = vpack.c.b16 %v1936, %v1936
        %v1965 = vpack.c.b16 %v1937, %v1937
        %v1966 = vpack.c.b16 %v1938, %v1938
        %v1967 = vpack.c.b16 %v1939, %v1939
        %v1968 = vpack.c.b16 %v1940, %v1940
        %v1969 = vpack.c.b16 %v1941, %v1941
        %v1970 = vpack.c.b16 %v1942, %v1942
        %v1971 = vpack.c.b16 %v1943, %v1943
        %v1972 = vpack.c.b16 %v1944, %v1944
        %v1973 = vpack.c.b16 %v1945, %v1945
        %v1974 = vpack.c.b16 %v1946, %v1946
        %v1975 = vpack.c.b16 %v1947, %v1947
        %v1976 = vpack.c.b16 %v1948, %v1948
        %v1977 = vpack.c.b16 %v1949, %v1949
        %v1978 = vpack.c.b16 %v1950, %v1950
        %vm2007 = vcmask 44032
        %2008 = vst.msk [vmem:[%s657] sm:$0xf] %vm2007, %v1951
        %2009 = vst.msk [vmem:[%s657 + $0x4] sm:$0xf] %vm2007, %v1952
        %2010 = vst.msk [vmem:[%s657 + $0x8] sm:$0xf] %vm2007, %v1953
        %2011 = vst.msk [vmem:[%s657 + $0xc] sm:$0xf] %vm2007, %v1954
        %2012 = vst.msk [vmem:[%s657 + $0x10] sm:$0xf] %vm2007, %v1955
        %2013 = vst.msk [vmem:[%s657 + $0x14] sm:$0xf] %vm2007, %v1956
        %2014 = vst.msk [vmem:[%s657 + $0x18] sm:$0xf] %vm2007, %v1957
        %2015 = vst.msk [vmem:[%s657 + $0x1c] sm:$0xf] %vm2007, %v1958
        %2016 = vst.msk [vmem:[%s657 + $0x20] sm:$0xf] %vm2007, %v1959
        %2017 = vst.msk [vmem:[%s657 + $0x24] sm:$0xf] %vm2007, %v1960
        %2018 = vst.msk [vmem:[%s657 + $0x28] sm:$0xf] %vm2007, %v1961
        %2019 = vst.msk [vmem:[%s657 + $0x2c] sm:$0xf] %vm2007, %v1962
        %2020 = vst.msk [vmem:[%s657 + $0x30] sm:$0xf] %vm2007, %v1963
        %2021 = vst.msk [vmem:[%s657 + $0x34] sm:$0xf] %vm2007, %v1964
        %2022 = vst.msk [vmem:[%s657 + $0x38] sm:$0xf] %vm2007, %v1965
        %2023 = vst.msk [vmem:[%s657 + $0x3c] sm:$0xf] %vm2007, %v1966
        %2024 = vst.msk [vmem:[%s657 + $0x40] sm:$0xf] %vm2007, %v1967
        %2025 = vst.msk [vmem:[%s657 + $0x44] sm:$0xf] %vm2007, %v1968
        %2026 = vst.msk [vmem:[%s657 + $0x48] sm:$0xf] %vm2007, %v1969
        %2027 = vst.msk [vmem:[%s657 + $0x4c] sm:$0xf] %vm2007, %v1970
        %2028 = vst.msk [vmem:[%s657 + $0x50] sm:$0xf] %vm2007, %v1971
        %2029 = vst.msk [vmem:[%s657 + $0x54] sm:$0xf] %vm2007, %v1972
        %2030 = vst.msk [vmem:[%s657 + $0x58] sm:$0xf] %vm2007, %v1973
        %2031 = vst.msk [vmem:[%s657 + $0x5c] sm:$0xf] %vm2007, %v1974
        %2032 = vst.msk [vmem:[%s657 + $0x60] sm:$0xf] %vm2007, %v1975
        %2033 = vst.msk [vmem:[%s657 + $0x64] sm:$0xf] %vm2007, %v1976
        %2034 = vst.msk [vmem:[%s657 + $0x68] sm:$0xf] %vm2007, %v1977
        %2035 = vst.msk [vmem:[%s657 + $0x6c] sm:$0xf] %vm2007, %v1978
        %s2036 = smul.u32 28, %s14
        %p2037 = scmp.lt.s32.totalorder %s2036, 55
        %s2038 = scalar_select %p2037, %s2036, 55
        %s2039 = smul.addr %s2038, 4
        %s2040 = scalar_lea.vmem %s3, %s2039
        // Predicated region
        $region74: #{net_forward.3} parent=68 // pred_check
          %p2041 = pneg %p100
        $region75: #{net_forward.3} parent=68 // pred_check_branch
          %2043 = sbr.rel (%p2041) target = $region77
        $region76: #{net_forward.3} parent=68 // pred_region
          %s2044 = smul.u32 28, %s14
        $region77: #{net_forward.3} parent=68 // pred_fallthru
          _
      $region69: #{net_forward.3} parent=5 // pred_fallthru
        _
      %p2045 = scmp.le.s32.totalorder 2, %s9
      // Predicated region
      $region78: #{net_forward.3} parent=5 // pred_check
        %p2046 = pneg %p2045
      $region79: #{net_forward.3} parent=5 // pred_check_branch
        %2048 = sbr.rel (%p2046) target = $region81
      $region80: #{net_forward.3} parent=5 // pred_region
        %s2049 = ssub.s32 %s9, 2
        // Predicated region
        $region82: #{net_forward.3} parent=80 // pred_check
          %p2050 = pneg %p106
        $region83: #{net_forward.3} parent=80 // pred_check_branch
          %2052 = sbr.rel (%p2050) target = $region85
        $region84: #{net_forward.3} parent=80 // pred_region
          %s2053 = smul.u32 28, %s15
          %p2054 = scmp.lt.s32.totalorder %s2053, 55
          %s2055 = scalar_select %p2054, %s2053, 55
          %s2056 = smul.addr %s2055, 4
          %s2057 = scalar_lea.vmem %s3, %s2056
        $region85: #{net_forward.3} parent=80 // pred_fallthru
          _
      $region81: #{net_forward.3} parent=5 // pred_fallthru
        _
    $region6: #{net_forward.3} parent=1 // loop_footer
      %s13 = sadd.s32 1, %s9
    $region7: #{net_forward.3} parent=1 // loop_footer_branch
      %8 = sbr.rel target = $region3
    $region8: #{net_forward.3} parent=1 // loop_exit
      _

// kernel: net_forward.4
$region0: #{net_forward.4}
  #allocation0 [shape = 'u32[]', space=smem, size = 0x4, offset = 0x4, fixed_abs, tag = 'smem constant byte address 0x4 - core index']
  #allocation1 [shape = 'u32[144,128]{1,0:T(1,128)}', space=vmem, size = 0x12000, scoped, tag = 'internal scratch']
  %s0 = inlined_call_operand.vmem [shape: bf16[4,64,150], index: 0, kind: input, shape index: {}]
  %s1 = inlined_call_operand.vmem [shape: bf16[150,128], index: 1, kind: input, shape index: {}]
  %s2 = inlined_call_operand.vmem [shape: f32[1,128], index: 2, kind: input, shape index: {}]
  %s3 = inlined_call_operand.vmem [shape: bf16[64,16], index: 3, kind: output, shape index: {}]
  %s4 = sld [smem:[#allocation0]]
  $region83: #{net_forward.4} parent=0
    _
  %s6 = ssub.s32 1, %s4
  %s7 = scalar_select 0, %s6, %s4
  $region1: #{net_forward.4} parent=0
    #allocation2 [shape = 'u8[131072]{0}', space=vmem, size = 0x20000, scoped, tag = 'input window, operand 0']
    loop: start=0, step=1, limit=4
    $region2: #{net_forward.4} parent=1 // loop_pre_header
      _
    $region3: #{net_forward.4} parent=1 // loop_header
      %s9 = sphi 0, %s13
      %p10 = scmp.ge.s32.totalorder %s9, 4
      %s19 = sphi 0, %s21
      %s22 = sphi 0, %s19
      %s23 = sphi 0, %s22
      %s39 = sphi 0, %s23
      %s43 = sphi 0, %s43
      %s45 = sphi 0, %s43
      %s46 = sphi 0, %s45
      %s60 = sphi 0, %s46
      %s64 = sphi 0, %s64
      %s66 = sphi 0, %s64
      %s67 = sphi 0, %s66
      %s81 = sphi 0, %s67
      %s87 = sphi 0, %s89
      %s90 = sphi 0, %s87
      %s91 = sphi 0, %s90
      %s107 = sphi 0, %s91
    $region4: #{net_forward.4} parent=1 // loop_header_branch
      %12 = sbr.rel (%p10) target = $region8
    $region5: #{net_forward.4} parent=1 // loop_body
      %s14 = ssub.s32 %s9, 1
      %s15 = ssub.s32 %s9, 2
      %s16 = sadd.s32 %s9, 1
      %s17 = ssub.s32 %s9, %s16
      %p18 = scmp.eq.s32.totalorder %s17, 0
      %s20 = sadd.s32 %s19, 1
      %s21 = scalar_select %p18, %s19, %s20
      %p24 = pneg %p18
      %p25 = scmp.eq.s32.totalorder %s9, 1
      %p26 = por %p24, %p25
      %p27 = scmp.ne.s32.totalorder %s19, %s22
      %p28 = scmp.eq.s32.totalorder %s9, 0
      %p29 = por %p27, %p28
      %p30 = scmp.ne.s32.totalorder %s19, %s22
      %p31 = scmp.eq.s32.totalorder %s14, 1
      %p32 = por %p30, %p31
      %p33 = scmp.ne.s32.totalorder %s22, %s23
      %p34 = scmp.eq.s32.totalorder %s14, 0
      %p35 = por %p33, %p34
      %p36 = scmp.ne.s32.totalorder %s22, %s23
      %p37 = scmp.eq.s32.totalorder %s15, 1
      %p38 = por %p36, %p37
      %p40 = scmp.ne.s32.totalorder %s23, %s39
      %p41 = scmp.eq.s32.totalorder %s15, 0
      %p42 = por %p40, %p41
      %s44 = sadd.s32 %s43, 1
      %p47 = scmp.eq.s32.totalorder %s9, 1
      %p48 = scmp.ne.s32.totalorder %s43, %s45
      %p49 = scmp.eq.s32.totalorder %s9, 0
      %p50 = por %p48, %p49
      %p51 = scmp.ne.s32.totalorder %s43, %s45
      %p52 = scmp.eq.s32.totalorder %s14, 1
      %p53 = por %p51, %p52
      %p54 = scmp.ne.s32.totalorder %s45, %s46
      %p55 = scmp.eq.s32.totalorder %s14, 0
      %p56 = por %p54, %p55
      %p57 = scmp.ne.s32.totalorder %s45, %s46
      %p58 = scmp.eq.s32.totalorder %s15, 1
      %p59 = por %p57, %p58
      %p61 = scmp.ne.s32.totalorder %s46, %s60
      %p62 = scmp.eq.s32.totalorder %s15, 0
      %p63 = por %p61, %p62
      %s65 = sadd.s32 %s64, 1
      %p68 = scmp.eq.s32.totalorder %s9, 1
      %p69 = scmp.ne.s32.totalorder %s64, %s66
      %p70 = scmp.eq.s32.totalorder %s9, 0
      %p71 = por %p69, %p70
      %p72 = scmp.ne.s32.totalorder %s64, %s66
      %p73 = scmp.eq.s32.totalorder %s14, 1
      %p74 = por %p72, %p73
      %p75 = scmp.ne.s32.totalorder %s66, %s67
      %p76 = scmp.eq.s32.totalorder %s14, 0
      %p77 = por %p75, %p76
      %p78 = scmp.ne.s32.totalorder %s66, %s67
      %p79 = scmp.eq.s32.totalorder %s15, 1
      %p80 = por %p78, %p79
      %p82 = scmp.ne.s32.totalorder %s67, %s81
      %p83 = scmp.eq.s32.totalorder %s15, 0
      %p84 = por %p82, %p83
      %s85 = ssub.s32 %s9, %s16
      %p86 = scmp.eq.s32.totalorder %s85, 0
      %s88 = sadd.s32 %s87, 1
      %s89 = scalar_select %p86, %s87, %s88
      %p92 = pneg %p86
      %p93 = scmp.eq.s32.totalorder %s9, 1
      %p94 = por %p92, %p93
      %p95 = scmp.ne.s32.totalorder %s87, %s90
      %p96 = scmp.eq.s32.totalorder %s9, 0
      %p97 = por %p95, %p96
      %p98 = scmp.ne.s32.totalorder %s87, %s90
      %p99 = scmp.eq.s32.totalorder %s14, 1
      %p100 = por %p98, %p99
      %p101 = scmp.ne.s32.totalorder %s90, %s91
      %p102 = scmp.eq.s32.totalorder %s14, 0
      %p103 = por %p101, %p102
      %p104 = scmp.ne.s32.totalorder %s90, %s91
      %p105 = scmp.eq.s32.totalorder %s15, 1
      %p106 = por %p104, %p105
      %p108 = scmp.ne.s32.totalorder %s91, %s107
      %p109 = scmp.eq.s32.totalorder %s15, 0
      %p110 = por %p108, %p109
      %p111 = scmp.le.s32.totalorder 1, %s9
      %p112 = scmp.lt.s32.totalorder %s9, 3
      %p113 = pnand %p111, %p112
      %p114 = pneg %p113
      // Predicated region
      $region9: #{net_forward.4} parent=5 // pred_check
        _
      $region10: #{net_forward.4} parent=5 // pred_check_branch
        %116 = sbr.rel (%p113) target = $region12
      $region11: #{net_forward.4} parent=5 // pred_region
        %s117 = ssub.s32 %s9, 1
        // Predicated region
        $region13: #{net_forward.4} parent=11 // pred_check
          %p118 = pneg %p56
        $region14: #{net_forward.4} parent=11 // pred_check_branch
          %120 = sbr.rel (%p118) target = $region16
        $region15: #{net_forward.4} parent=11 // pred_region
          _
        $region16: #{net_forward.4} parent=11 // pred_fallthru
          _
        // Predicated region
        $region17: #{net_forward.4} parent=11 // pred_check
          %p121 = pneg %p77
        $region18: #{net_forward.4} parent=11 // pred_check_branch
          %123 = sbr.rel (%p121) target = $region20
        $region19: #{net_forward.4} parent=11 // pred_region
          _
        $region20: #{net_forward.4} parent=11 // pred_fallthru
          _
      $region12: #{net_forward.4} parent=5 // pred_fallthru
        _
      %p124 = scmp.lt.s32.totalorder %s9, 2
      // Predicated region
      $region21: #{net_forward.4} parent=5 // pred_check
        %p125 = pneg %p124
      $region22: #{net_forward.4} parent=5 // pred_check_branch
        %127 = sbr.rel (%p125) target = $region24
      $region23: #{net_forward.4} parent=5 // pred_region
        // Predicated region
        $region25: #{net_forward.4} parent=23 // pred_check
          %p128 = pneg %p29
        $region26: #{net_forward.4} parent=23 // pred_check_branch
          %130 = sbr.rel (%p128) target = $region28
        $region27: #{net_forward.4} parent=23 // pred_region
          %s131 = sand.u32 %s19, 1
          %s132 = sand.u32 %s19, 1
          %s133 = smul.addr %s132, 128
          %s134 = scalar_lea.vmem [#allocation2], %s133
          %s135 = smul.u32 4, %s9
          %s136 = smul.addr %s135, 2
          %s137 = smul.addr %s136, 4
          %s138 = scalar_lea.vmem %s0, %s137
          // Predicated region
          $region29: #{net_forward.4} parent=27 // pred_check
            _
          $region30: #{net_forward.4} parent=27 // pred_check_branch
            %140 = sbr.rel (0) target = $region32
          $region31: #{net_forward.4} parent=27 // pred_region
            // Predicated region
            $region33: #{net_forward.4} parent=31 // pred_check
              _
            $region34: #{net_forward.4} parent=31 // pred_check_branch
              %142 = sbr.rel (0) target = $region36
            $region35: #{net_forward.4} parent=31 // pred_region
              // Predicated region
              $region48: #{net_forward.4} parent=35 // pred_check
                _
              $region49: #{net_forward.4} parent=35 // pred_check_branch
                %187 = sbr.rel (0) target = $region51
              $region50: #{net_forward.4} parent=35 // pred_region
                loop: start=0, step=1, limit=1
                $region52: #{net_forward.4} parent=50 // loop_pre_header
                  _
                $region53: #{net_forward.4} parent=50 // loop_header
                  %s189 = sphi 0, %s193
                  %p190 = scmp.ge.s32.totalorder %s189, 1
                  %s194 = sphi %s138, %s138
                  %s195 = sphi %s134, %s134
                $region54: #{net_forward.4} parent=50 // loop_header_branch
                  %192 = sbr.rel (%p190) target = $region58
                $region55: #{net_forward.4} parent=50 // loop_body
                  %v196 = vld [vmem:[%s194] sm:$0xff]
                  %197 = vst [vmem:[%s195] sm:$0xff] %v196
                  %v198 = vld [vmem:[%s194 + $0x8] sm:$0xff]
                  %199 = vst [vmem:[%s195 + $0x8] sm:$0xff] %v198
                  %v200 = vld [vmem:[%s194 + $0x10] sm:$0xff]
                  %201 = vst [vmem:[%s195 + $0x10] sm:$0xff] %v200
                  %v202 = vld [vmem:[%s194 + $0x18] sm:$0xff]
                  %203 = vst [vmem:[%s195 + $0x18] sm:$0xff] %v202
                  %v204 = vld [vmem:[%s194 + $0x40] sm:$0xff]
                  %205 = vst [vmem:[%s195 + $0x20] sm:$0xff] %v204
                  %v206 = vld [vmem:[%s194 + $0x48] sm:$0xff]
                  %207 = vst [vmem:[%s195 + $0x28] sm:$0xff] %v206
                  %v208 = vld [vmem:[%s194 + $0x50] sm:$0xff]
                  %209 = vst [vmem:[%s195 + $0x30] sm:$0xff] %v208
                  %v210 = vld [vmem:[%s194 + $0x58] sm:$0xff]
                  %211 = vst [vmem:[%s195 + $0x38] sm:$0xff] %v210
                  %v212 = vld [vmem:[%s194 + $0x80] sm:$0xff]
                  %213 = vst [vmem:[%s195 + $0x40] sm:$0xff] %v212
                  %v214 = vld [vmem:[%s194 + $0x88] sm:$0xff]
                  %215 = vst [vmem:[%s195 + $0x48] sm:$0xff] %v214
                  %v216 = vld [vmem:[%s194 + $0x90] sm:$0xff]
                  %217 = vst [vmem:[%s195 + $0x50] sm:$0xff] %v216
                  %v218 = vld [vmem:[%s194 + $0x98] sm:$0xff]
                  %219 = vst [vmem:[%s195 + $0x58] sm:$0xff] %v218
                  %v220 = vld [vmem:[%s194 + $0xc0] sm:$0xff]
                  %221 = vst [vmem:[%s195 + $0x60] sm:$0xff] %v220
                  %v222 = vld [vmem:[%s194 + $0xc8] sm:$0xff]
                  %223 = vst [vmem:[%s195 + $0x68] sm:$0xff] %v222
                  %v224 = vld [vmem:[%s194 + $0xd0] sm:$0xff]
                  %225 = vst [vmem:[%s195 + $0x70] sm:$0xff] %v224
                  %v226 = vld [vmem:[%s194 + $0xd8] sm:$0xff]
                  %227 = vst [vmem:[%s195 + $0x78] sm:$0xff] %v226
                $region56: #{net_forward.4} parent=50 // loop_footer
                  %s193 = sadd.s32 1, %s189
                $region57: #{net_forward.4} parent=50 // loop_footer_branch
                  %188 = sbr.rel target = $region53
                $region58: #{net_forward.4} parent=50 // loop_exit
                  _
              $region51: #{net_forward.4} parent=35 // pred_fallthru
                _
              // Predicated region
              $region59: #{net_forward.4} parent=35 // pred_check
                _
              $region60: #{net_forward.4} parent=35 // pred_check_branch
                %229 = sbr.rel target = $region62
              $region61: #{net_forward.4} parent=35 // pred_region
                _
              $region62: #{net_forward.4} parent=35 // pred_fallthru
                _
            $region36: #{net_forward.4} parent=31 // pred_fallthru
              _
            // Predicated region
            $region37: #{net_forward.4} parent=31 // pred_check
              _
            $region38: #{net_forward.4} parent=31 // pred_check_branch
              %144 = sbr.rel target = $region40
            $region39: #{net_forward.4} parent=31 // pred_region
              loop: start=0, step=1, limit=1
              $region41: #{net_forward.4} parent=39 // loop_pre_header
                _
              $region42: #{net_forward.4} parent=39 // loop_header
                %s147 = sphi 0, %s151
                %p148 = scmp.ge.s32.totalorder %s147, 1
                %s152 = sphi %s138, %s138
                %s153 = sphi %s134, %s134
              $region43: #{net_forward.4} parent=39 // loop_header_branch
                %150 = sbr.rel (%p148) target = $region47
              $region44: #{net_forward.4} parent=39 // loop_body
                %v154 = vld [vmem:[%s152] sm:$0xff]
                %155 = vst [vmem:[%s153] sm:$0xff] %v154
                %v156 = vld [vmem:[%s152 + $0x8] sm:$0xff]
                %157 = vst [vmem:[%s153 + $0x8] sm:$0xff] %v156
                %v158 = vld [vmem:[%s152 + $0x10] sm:$0xff]
                %159 = vst [vmem:[%s153 + $0x10] sm:$0xff] %v158
                %v160 = vld [vmem:[%s152 + $0x18] sm:$0xff]
                %161 = vst [vmem:[%s153 + $0x18] sm:$0xff] %v160
                %v162 = vld [vmem:[%s152 + $0x40] sm:$0xff]
                %163 = vst [vmem:[%s153 + $0x20] sm:$0xff] %v162
                %v164 = vld [vmem:[%s152 + $0x48] sm:$0xff]
                %165 = vst [vmem:[%s153 + $0x28] sm:$0xff] %v164
                %v166 = vld [vmem:[%s152 + $0x50] sm:$0xff]
                %167 = vst [vmem:[%s153 + $0x30] sm:$0xff] %v166
                %v168 = vld [vmem:[%s152 + $0x58] sm:$0xff]
                %169 = vst [vmem:[%s153 + $0x38] sm:$0xff] %v168
                %v170 = vld [vmem:[%s152 + $0x80] sm:$0xff]
                %171 = vst [vmem:[%s153 + $0x40] sm:$0xff] %v170
                %v172 = vld [vmem:[%s152 + $0x88] sm:$0xff]
                %173 = vst [vmem:[%s153 + $0x48] sm:$0xff] %v172
                %v174 = vld [vmem:[%s152 + $0x90] sm:$0xff]
                %175 = vst [vmem:[%s153 + $0x50] sm:$0xff] %v174
                %v176 = vld [vmem:[%s152 + $0x98] sm:$0xff]
                %177 = vst [vmem:[%s153 + $0x58] sm:$0xff] %v176
                %v178 = vld [vmem:[%s152 + $0xc0] sm:$0xff]
                %179 = vst [vmem:[%s153 + $0x60] sm:$0xff] %v178
                %v180 = vld [vmem:[%s152 + $0xc8] sm:$0xff]
                %181 = vst [vmem:[%s153 + $0x68] sm:$0xff] %v180
                %v182 = vld [vmem:[%s152 + $0xd0] sm:$0xff]
                %183 = vst [vmem:[%s153 + $0x70] sm:$0xff] %v182
                %v184 = vld [vmem:[%s152 + $0xd8] sm:$0xff]
                %185 = vst [vmem:[%s153 + $0x78] sm:$0xff] %v184
              $region45: #{net_forward.4} parent=39 // loop_footer
                %s151 = sadd.s32 1, %s147
              $region46: #{net_forward.4} parent=39 // loop_footer_branch
                %146 = sbr.rel target = $region42
              $region47: #{net_forward.4} parent=39 // loop_exit
                _
            $region40: #{net_forward.4} parent=31 // pred_fallthru
              _
          $region32: #{net_forward.4} parent=27 // pred_fallthru
            _
          %230 = vnop
        $region28: #{net_forward.4} parent=23 // pred_fallthru
          _
      $region24: #{net_forward.4} parent=5 // pred_fallthru
        _
      %p231 = scmp.le.s32.totalorder 1, %s9
      %p232 = scmp.lt.s32.totalorder %s9, 3
      %p233 = pnand %p231, %p232
      %p234 = pneg %p233
      // Predicated region
      $region63: #{net_forward.4} parent=5 // pred_check
        _
      $region64: #{net_forward.4} parent=5 // pred_check_branch
        %236 = sbr.rel (%p233) target = $region66
      $region65: #{net_forward.4} parent=5 // pred_region
        %s237 = ssub.s32 %s9, 1
        %s238 = sand.u32 %s22, 1
        %s239 = sand.u32 %s22, 1
        %s240 = smul.addr %s239, 128
        %s241 = scalar_lea.vmem [#allocation2], %s240
        // Predicated region
        $region67: #{net_forward.4} parent=65 // pred_check
          %p242 = pneg %p35
        $region68: #{net_forward.4} parent=65 // pred_check_branch
          %244 = sbr.rel (%p242) target = $region70
        $region69: #{net_forward.4} parent=65 // pred_region
          _
        $region70: #{net_forward.4} parent=65 // pred_fallthru
          _
        %s245 = sand.u32 %s22, 1
        %s246 = sand.u32 %s22, 1
        %s247 = smul.addr %s246, 128
        %s248 = scalar_lea.vmem [#allocation2], %s247
        %p249 = pneg %p35
        %p250 = pneg %p32
        %p251 = pneg %p56
        %p252 = pneg %p53
        %p253 = pneg %p77
        %p254 = pneg %p74
        %p255 = pneg %p103
        %p256 = pneg %p100
        %s257 = smul.u32 4, %s14
        %p258 = scmp.lt.s32.totalorder %s257, 7
        %s259 = scalar_select %p258, %s257, 7
        %s260 = smul.addr %s259, 4
        %s261 = scalar_lea.vmem %s3, %s260
        %s262 = smul.u32 4, %s14
        %s263 = smul.u32 4, %s14
        %p264 = scmp.lt.s32.totalorder %s263, 7
        %s265 = scalar_select %p264, %s263, 7
        %s266 = smul.addr %s265, 4
        %s267 = scalar_lea.vmem %s3, %s266
        %s268 = smul.u32 4, %s14
        %v270 = vld [vmem:[%s241] sm:$0xff]
        %v271 = vld [vmem:[%s241 + $0x8] sm:$0xff]
        %v272 = vld [vmem:[%s241 + $0x10] sm:$0xff]
        %v273 = vld [vmem:[%s241 + $0x18] sm:$0xff]
        %v274 = vld [vmem:[%s241 + $0x20] sm:$0xff]
        %v275 = vld [vmem:[%s241 + $0x28] sm:$0xff]
        %v276 = vld [vmem:[%s241 + $0x30] sm:$0xff]
        %v277 = vld [vmem:[%s241 + $0x38] sm:$0xff]
        %v278 = vld [vmem:[%s241 + $0x40] sm:$0xff]
        %v279 = vld [vmem:[%s241 + $0x48] sm:$0xff]
        %v280 = vld [vmem:[%s241 + $0x50] sm:$0xff]
        %v281 = vld [vmem:[%s241 + $0x58] sm:$0xff]
        %v282 = vld [vmem:[%s241 + $0x60] sm:$0xff]
        %v283 = vld [vmem:[%s241 + $0x68] sm:$0xff]
        %v284 = vld [vmem:[%s241 + $0x70] sm:$0xff]
        %v285 = vld [vmem:[%s241 + $0x78] sm:$0xff]
        %v286 = vld [vmem:[%s1] sm:$0xf]
        %v287 = vld [vmem:[%s1 + $0x4] sm:$0xf]
        %v288 = vld [vmem:[%s1 + $0x8] sm:$0xf]
        %v289 = vld [vmem:[%s1 + $0xc] sm:$0xf]
        %v290 = vld [vmem:[%s1 + $0x10] sm:$0xf]
        %v291 = vld [vmem:[%s1 + $0x14] sm:$0xf]
        %v292 = vld [vmem:[%s1 + $0x18] sm:$0xf]
        %v293 = vld [vmem:[%s1 + $0x1c] sm:$0xf]
        %v294 = vld [vmem:[%s1 + $0x20] sm:$0xf]
        %v295 = vld [vmem:[%s1 + $0x24] sm:$0xf]
        %v296 = vld [vmem:[%s1 + $0x28] sm:$0xf]
        %v297 = vld [vmem:[%s1 + $0x2c] sm:$0xf]
        %v298 = vld [vmem:[%s1 + $0x30] sm:$0xf]
        %v299 = vld [vmem:[%s1 + $0x34] sm:$0xf]
        %v300 = vld [vmem:[%s1 + $0x38] sm:$0xf]
        %v301 = vld [vmem:[%s1 + $0x3c] sm:$0xf]
        %v302 = vld [vmem:[%s1 + $0x40] sm:$0xf]
        %v303 = vld [vmem:[%s1 + $0x44] sm:$0xf]
        %v304 = vld [vmem:[%s1 + $0x48] sm:$0x7]
        %v321 = vunpack.c.l.b16 %v270
        %v322 = vunpack.c.h.b16 %v270
        %v323 = vunpack.c.l.b16 %v271
        %v324 = vunpack.c.h.b16 %v271
        %v325 = vunpack.c.l.b16 %v272
        %v326 = vunpack.c.h.b16 %v272
        %v327 = vunpack.c.l.b16 %v273
        %v328 = vunpack.c.h.b16 %v273
        %v329 = vunpack.c.l.b16 %v274
        %v330 = vunpack.c.h.b16 %v274
        %v331 = vunpack.c.l.b16 %v275
        %v332 = vunpack.c.h.b16 %v275
        %v333 = vunpack.c.l.b16 %v276
        %v334 = vunpack.c.h.b16 %v276
        %v335 = vunpack.c.l.b16 %v277
        %v336 = vunpack.c.h.b16 %v277
        %v337 = vunpack.c.l.b16 %v278
        %v338 = vunpack.c.h.b16 %v278
        %v339 = vunpack.c.l.b16 %v279
        %v340 = vunpack.c.h.b16 %v279
        %v341 = vunpack.c.l.b16 %v280
        %v342 = vunpack.c.h.b16 %v280
        %v343 = vunpack.c.l.b16 %v281
        %v344 = vunpack.c.h.b16 %v281
        %v345 = vunpack.c.l.b16 %v282
        %v346 = vunpack.c.h.b16 %v282
        %v347 = vunpack.c.l.b16 %v283
        %v348 = vunpack.c.h.b16 %v283
        %v349 = vunpack.c.l.b16 %v284
        %v350 = vunpack.c.h.b16 %v284
        %v351 = vunpack.c.l.b16 %v285
        %v352 = vunpack.c.h.b16 %v285
        %v353 = vpack.c.b16 %v323, %v321
        %v354 = vpack.c.b16 %v324, %v322
        %v355 = vpack.c.b16 %v327, %v325
        %v356 = vpack.c.b16 %v328, %v326
        %v357 = vpack.c.b16 %v331, %v329
        %v358 = vpack.c.b16 %v332, %v330
        %v359 = vpack.c.b16 %v335, %v333
        %v360 = vpack.c.b16 %v336, %v334
        %v361 = vpack.c.b16 %v339, %v337
        %v362 = vpack.c.b16 %v340, %v338
        %v363 = vpack.c.b16 %v343, %v341
        %v364 = vpack.c.b16 %v344, %v342
        %v365 = vpack.c.b16 %v347, %v345
        %v366 = vpack.c.b16 %v348, %v346
        %v367 = vpack.c.b16 %v351, %v349
        %v368 = vpack.c.b16 %v352, %v350
        %v396 = vunpack.c.l.b16 %v286
        %v397 = vunpack.c.l.b16 %v287
        %v398 = vunpack.c.l.b16 %v288
        %v399 = vunpack.c.l.b16 %v289
        %v400 = vunpack.c.l.b16 %v290
        %v401 = vunpack.c.l.b16 %v291
        %v402 = vunpack.c.l.b16 %v292
        %v403 = vunpack.c.l.b16 %v293
        %v404 = vunpack.c.l.b16 %v294
        %v405 = vunpack.c.l.b16 %v295
        %v406 = vunpack.c.l.b16 %v296
        %v407 = vunpack.c.l.b16 %v297
        %v408 = vunpack.c.l.b16 %v298
        %v409 = vunpack.c.l.b16 %v299
        %v410 = vunpack.c.l.b16 %v300
        %v411 = vunpack.c.l.b16 %v301
        %v412 = vunpack.c.l.b16 %v302
        %v413 = vunpack.c.l.b16 %v303
        %v414 = vunpack.c.l.b16 %v304
        %v415 = vpack.c.b16 %v397, %v396
        %v416 = vpack.c.b16 %v399, %v398
        %v417 = vpack.c.b16 %v401, %v400
        %v418 = vpack.c.b16 %v403, %v402
        %v419 = vpack.c.b16 %v405, %v404
        %v420 = vpack.c.b16 %v407, %v406
        %v421 = vpack.c.b16 %v409, %v408
        %v422 = vpack.c.b16 %v411, %v410
        %v423 = vpack.c.b16 %v413, %v412
        %v424 = vpack.c.b16 %v414, %v414
        %vm434 = vcmask 179200
        %v436 = vsel %vm434, %v354, 0
        %v439 = vsel %vm434, %v356, 0
        %v442 = vsel %vm434, %v358, 0
        %v445 = vsel %vm434, %v360, 0
        %v448 = vsel %vm434, %v362, 0
        %v451 = vsel %vm434, %v364, 0
        %v454 = vsel %vm434, %v366, 0
        %v457 = vsel %vm434, %v368, 0
        %vm459 = vcmask 1042432
        %v461 = vsel %vm459, %v424, 0
        %463 = vmatprep.subr.bf16.mxu0 0
        %464 = vmatpush1.bf16.msra.mxu0 %v415
        %465 = vmatprep.subr.bf16.mxu0 0
        %466 = vmatpush1.bf16.msra.mxu0 %v416
        %467 = vmatprep.subr.bf16.mxu0 0
        %468 = vmatpush1.bf16.msra.mxu0 %v417
        %469 = vmatprep.subr.bf16.mxu0 0
        %470 = vmatpush1.bf16.msra.mxu0 %v418
        %471 = vmatprep.subr.bf16.mxu0 0
        %472 = vmatpush1.bf16.msra.mxu0 %v419
        %473 = vmatprep.subr.bf16.mxu0 0
        %474 = vmatpush1.bf16.msra.mxu0 %v420
        %475 = vmatprep.subr.bf16.mxu0 0
        %476 = vmatpush1.bf16.msra.mxu0 %v421
        %477 = vmatprep.subr.bf16.mxu0 0
        %478 = vmatpush1.bf16.msra.mxu0 %v422
        %479 = vmatprep.subr.bf16.mxu0 0
        %480 = vmatpush1.bf16.msra.mxu0 %v423
        %481 = vmatprep.subr.bf16.mxu0 0
        %482 = vmatpush1.bf16.msra.mxu0 %v461
        %483 = vmatprep.subr.bf16.mxu0 0
        %484 = vmatpush1.bf16.msra.mxu0 0
        %485 = vmatprep.subr.bf16.mxu0 0
        %486 = vmatpush1.bf16.msra.mxu0 0
        %487 = vmatprep.subr.bf16.mxu0 0
        %488 = vmatpush1.bf16.msra.mxu0 0
        %489 = vmatprep.subr.bf16.mxu0 0
        %490 = vmatpush1.bf16.msra.mxu0 0
        %491 = vmatprep.subr.bf16.mxu0 0
        %492 = vmatpush1.bf16.msra.mxu0 0
        %493 = vmatprep.subr.bf16.mxu0 0
        %494 = vmatpush1.bf16.msra.mxu0 0
        %495 = vmatprep.mubr.bf16.mxu0 %v436
        %496 = vmatmul.mubr.bf16.gmra.mrb[0].mxu0 %v353
        %v497 = vpop.f32.mrb[0].mxu0
        %v498 = vadd.f32 0.0, %v497
        %v499 = vpop.f32.mrb[0].mxu0
        %v500 = vpop.f32.mrb[0].mxu0
        %v501 = vadd.f32 0.0, %v500
        %v502 = vpop.f32.mrb[0].mxu0
        %503 = vmatprep.mubr.bf16.mxu0 %v439
        %504 = vmatmul.mubr.bf16.gmra.mrb[0].mxu0 %v355
        %v505 = vpop.f32.mrb[0].mxu0
        %v506 = vadd.f32 0.0, %v505
        %v507 = vpop.f32.mrb[0].mxu0
        %v508 = vpop.f32.mrb[0].mxu0
        %v509 = vadd.f32 0.0, %v508
        %v510 = vpop.f32.mrb[0].mxu0
        %511 = vmatprep.mubr.bf16.mxu0 %v442
        %512 = vmatmul.mubr.bf16.gmra.mrb[0].mxu0 %v357
        %v513 = vpop.f32.mrb[0].mxu0
        %v514 = vadd.f32 0.0, %v513
        %v515 = vpop.f32.mrb[0].mxu0
        %v516 = vpop.f32.mrb[0].mxu0
        %v517 = vadd.f32 0.0, %v516
        %v518 = vpop.f32.mrb[0].mxu0
        %519 = vmatprep.mubr.bf16.mxu0 %v445
        %520 = vmatmul.mubr.bf16.gmra.mrb[0].mxu0 %v359
        %v521 = vpop.f32.mrb[0].mxu0
        %v522 = vadd.f32 0.0, %v521
        %v523 = vpop.f32.mrb[0].mxu0
        %v524 = vpop.f32.mrb[0].mxu0
        %v525 = vadd.f32 0.0, %v524
        %v526 = vpop.f32.mrb[0].mxu0
        %527 = vmatprep.mubr.bf16.mxu0 %v448
        %528 = vmatmul.mubr.bf16.gmra.mrb[0].mxu0 %v361
        %v529 = vpop.f32.mrb[0].mxu0
        %v530 = vadd.f32 0.0, %v529
        %v531 = vpop.f32.mrb[0].mxu0
        %v532 = vpop.f32.mrb[0].mxu0
        %v533 = vadd.f32 0.0, %v532
        %v534 = vpop.f32.mrb[0].mxu0
        %535 = vmatprep.mubr.bf16.mxu0 %v451
        %536 = vmatmul.mubr.bf16.gmra.mrb[0].mxu0 %v363
        %v537 = vpop.f32.mrb[0].mxu0
        %v538 = vadd.f32 0.0, %v537
        %v539 = vpop.f32.mrb[0].mxu0
        %v540 = vpop.f32.mrb[0].mxu0
        %v541 = vadd.f32 0.0, %v540
        %v542 = vpop.f32.mrb[0].mxu0
        %543 = vmatprep.mubr.bf16.mxu0 %v454
        %544 = vmatmul.mubr.bf16.gmra.mrb[0].mxu0 %v365
        %v545 = vpop.f32.mrb[0].mxu0
        %v546 = vadd.f32 0.0, %v545
        %v547 = vpop.f32.mrb[0].mxu0
        %v548 = vpop.f32.mrb[0].mxu0
        %v549 = vadd.f32 0.0, %v548
        %v550 = vpop.f32.mrb[0].mxu0
        %551 = vmatprep.mubr.bf16.mxu0 %v457
        %552 = vmatmul.mubr.bf16.gmra.mrb[0].mxu0 %v367
        %v553 = vpop.f32.mrb[0].mxu0
        %v554 = vadd.f32 0.0, %v553
        %v555 = vpop.f32.mrb[0].mxu0
        %v556 = vpop.f32.mrb[0].mxu0
        %v557 = vadd.f32 0.0, %v556
        %v558 = vpop.f32.mrb[0].mxu0
        %559 = vdwg.mxu0
        %v560 = vmax.f32 %v498, %v514
        %v561 = vmax.f32 %v501, %v517
        %v562 = vmax.f32 %v506, %v522
        %v563 = vmax.f32 %v509, %v525
        %v564 = vmax.f32 %v530, %v546
        %v565 = vmax.f32 %v533, %v549
        %v566 = vmax.f32 %v538, %v554
        %v567 = vmax.f32 %v541, %v557
        %v568 = vmax.f32 %v560, %v564
        %v569 = vmax.f32 %v561, %v565
        %v570 = vmax.f32 %v562, %v566
        %v571 = vmax.f32 %v563, %v567
        %v572 = vld [vmem:[%s2] sm:$0x1]
        %v574 = vlaneseq
        %v575 = vshrl.u32 %v574, 7
        %v576 = vsub.s32 0, %v575
        %v577 = vrot.slane %v572, %v576
        %v579 = vadd.f32 %v568, %v577
        %v580 = vadd.f32 %v569, %v577
        %v581 = vadd.f32 %v570, %v577
        %v582 = vadd.f32 %v571, %v577
        %v583 = vmax.f32 %v579, 0.0
        %v584 = vmax.f32 %v580, 0.0
        %v585 = vmax.f32 %v581, 0.0
        %v586 = vmax.f32 %v582, 0.0
        %v587 = vpack.c.bf16 %v584, %v583
        %v588 = vpack.c.bf16 %v586, %v585
        %v591 = vunpack.c.l.b16 %v587
        %v592 = vunpack.c.h.b16 %v587
        %v593 = vunpack.c.l.b16 %v588
        %v594 = vunpack.c.h.b16 %v588
        %v595 = vpack.c.b16 %v591, %v591
        %v596 = vpack.c.b16 %v592, %v592
        %v597 = vpack.c.b16 %v593, %v593
        %v598 = vpack.c.b16 %v594, %v594
        %vm603 = vcmask 125952
        %604 = vst.msk [vmem:[%s267] sm:$0xf] %vm603, %v595
        %605 = vst.msk [vmem:[%s267 + $0x4] sm:$0xf] %vm603, %v596
        %606 = vst.msk [vmem:[%s267 + $0x8] sm:$0xf] %vm603, %v597
        %607 = vst.msk [vmem:[%s267 + $0xc] sm:$0xf] %vm603, %v598
        %s608 = smul.u32 4, %s14
        %p609 = scmp.lt.s32.totalorder %s608, 7
        %s610 = scalar_select %p609, %s608, 7
        %s611 = smul.addr %s610, 4
        %s612 = scalar_lea.vmem %s3, %s611
        // Predicated region
        $region71: #{net_forward.4} parent=65 // pred_check
          %p613 = pneg %p100
        $region72: #{net_forward.4} parent=65 // pred_check_branch
          %615 = sbr.rel (%p613) target = $region74
        $region73: #{net_forward.4} parent=65 // pred_region
          %s616 = smul.u32 4, %s14
        $region74: #{net_forward.4} parent=65 // pred_fallthru
          _
      $region66: #{net_forward.4} parent=5 // pred_fallthru
        _
      %p617 = scmp.le.s32.totalorder 2, %s9
      // Predicated region
      $region75: #{net_forward.4} parent=5 // pred_check
        %p618 = pneg %p617
      $region76: #{net_forward.4} parent=5 // pred_check_branch
        %620 = sbr.rel (%p618) target = $region78
      $region77: #{net_forward.4} parent=5 // pred_region
        %s621 = ssub.s32 %s9, 2
        // Predicated region
        $region79: #{net_forward.4} parent=77 // pred_check
          %p622 = pneg %p106
        $region80: #{net_forward.4} parent=77 // pred_check_branch
          %624 = sbr.rel (%p622) target = $region82
        $region81: #{net_forward.4} parent=77 // pred_region
          %s625 = smul.u32 4, %s15
          %p626 = scmp.lt.s32.totalorder %s625, 7
          %s627 = scalar_select %p626, %s625, 7
          %s628 = smul.addr %s627, 4
          %s629 = scalar_lea.vmem %s3, %s628
        $region82: #{net_forward.4} parent=77 // pred_fallthru
          _
      $region78: #{net_forward.4} parent=5 // pred_fallthru
        _
    $region6: #{net_forward.4} parent=1 // loop_footer
      %s13 = sadd.s32 1, %s9
    $region7: #{net_forward.4} parent=1 // loop_footer_branch
      %8 = sbr.rel target = $region3
    $region8: #{net_forward.4} parent=1 // loop_exit
      _

// kernel: net_forward.5
$region0: #{net_forward.5}
  #allocation0 [shape = 'u32[]', space=smem, size = 0x4, offset = 0x4, fixed_abs, tag = 'smem constant byte address 0x4 - core index']
  #allocation1 [shape = 'u32[144,128]{1,0:T(1,128)}', space=vmem, size = 0x12000, scoped, tag = 'internal scratch']
  %s0 = inlined_call_operand.vmem [shape: bf16[32,400], index: 0, kind: input, shape index: {}]
  %s1 = inlined_call_operand.vmem [shape: bf16[400,128], index: 1, kind: input, shape index: {}]
  %s2 = inlined_call_operand.vmem [shape: f32[1,128], index: 2, kind: input, shape index: {}]
  %s3 = inlined_call_operand.vmem [shape: bf16[128,128], index: 3, kind: input, shape index: {}]
  %s4 = inlined_call_operand.vmem [shape: f32[1,128], index: 4, kind: input, shape index: {}]
  %s5 = inlined_call_operand.vmem [shape: bf16[128,10], index: 5, kind: input, shape index: {}]
  %s6 = inlined_call_operand.vmem [shape: f32[1,10], index: 6, kind: input, shape index: {}]
  %s7 = inlined_call_operand.vmem [shape: f32[32,10], index: 7, kind: output, shape index: {}]
  %s8 = sld [smem:[#allocation0]]
  $region38: #{net_forward.5} parent=0
    _
  %s10 = ssub.s32 1, %s8
  %s11 = scalar_select 0, %s10, %s8
  // Predicated region
  $region2: #{net_forward.5} parent=0 // pred_check
    _
  $region3: #{net_forward.5} parent=0 // pred_check_branch
    %13 = sbr.rel (0) target = $region5
  $region4: #{net_forward.5} parent=0 // pred_region
    _
  $region5: #{net_forward.5} parent=0 // pred_fallthru
    _
  // Predicated region
  $region6: #{net_forward.5} parent=0 // pred_check
    _
  $region7: #{net_forward.5} parent=0 // pred_check_branch
    %15 = sbr.rel (0) target = $region9
  $region8: #{net_forward.5} parent=0 // pred_region
    _
  $region9: #{net_forward.5} parent=0 // pred_fallthru
    _
  // Predicated region
  $region10: #{net_forward.5} parent=0 // pred_check
    _
  $region11: #{net_forward.5} parent=0 // pred_check_branch
    %17 = sbr.rel (0) target = $region13
  $region12: #{net_forward.5} parent=0 // pred_region
    _
  $region13: #{net_forward.5} parent=0 // pred_fallthru
    _
  // Predicated region
  $region14: #{net_forward.5} parent=0 // pred_check
    _
  $region15: #{net_forward.5} parent=0 // pred_check_branch
    %19 = sbr.rel (0) target = $region17
  $region16: #{net_forward.5} parent=0 // pred_region
    _
  $region17: #{net_forward.5} parent=0 // pred_fallthru
    _
  // Predicated region
  $region18: #{net_forward.5} parent=0 // pred_check
    _
  $region19: #{net_forward.5} parent=0 // pred_check_branch
    %21 = sbr.rel (0) target = $region21
  $region20: #{net_forward.5} parent=0 // pred_region
    _
  $region21: #{net_forward.5} parent=0 // pred_fallthru
    _
  // Predicated region
  $region22: #{net_forward.5} parent=0 // pred_check
    _
  $region23: #{net_forward.5} parent=0 // pred_check_branch
    %23 = sbr.rel (0) target = $region25
  $region24: #{net_forward.5} parent=0 // pred_region
    _
  $region25: #{net_forward.5} parent=0 // pred_fallthru
    _
  // Predicated region
  $region26: #{net_forward.5} parent=0 // pred_check
    _
  $region27: #{net_forward.5} parent=0 // pred_check_branch
    %25 = sbr.rel (0) target = $region29
  $region28: #{net_forward.5} parent=0 // pred_region
    _
  $region29: #{net_forward.5} parent=0 // pred_fallthru
    _
  %v27 = vld [vmem:[%s0] sm:$0xff]
  %v28 = vld [vmem:[%s0 + $0x8] sm:$0xff]
  %v29 = vld [vmem:[%s0 + $0x10] sm:$0xff]
  %v30 = vld [vmem:[%s0 + $0x18] sm:$0xff]
  %v31 = vld [vmem:[%s0 + $0x20] sm:$0xff]
  %v32 = vld [vmem:[%s0 + $0x28] sm:$0xff]
  %v33 = vld [vmem:[%s0 + $0x30] sm:$0xff]
  %v34 = vld [vmem:[%s0 + $0x38] sm:$0xff]
  %v35 = vld [vmem:[%s1] sm:$0xf]
  %v36 = vld [vmem:[%s1 + $0x4] sm:$0xf]
  %v37 = vld [vmem:[%s1 + $0x8] sm:$0xf]
  %v38 = vld [vmem:[%s1 + $0xc] sm:$0xf]
  %v39 = vld [vmem:[%s1 + $0x10] sm:$0xf]
  %v40 = vld [vmem:[%s1 + $0x14] sm:$0xf]
  %v41 = vld [vmem:[%s1 + $0x18] sm:$0xf]
  %v42 = vld [vmem:[%s1 + $0x1c] sm:$0xf]
  %v43 = vld [vmem:[%s1 + $0x20] sm:$0xf]
  %v44 = vld [vmem:[%s1 + $0x24] sm:$0xf]
  %v45 = vld [vmem:[%s1 + $0x28] sm:$0xf]
  %v46 = vld [vmem:[%s1 + $0x2c] sm:$0xf]
  %v47 = vld [vmem:[%s1 + $0x30] sm:$0xf]
  %v48 = vld [vmem:[%s1 + $0x34] sm:$0xf]
  %v49 = vld [vmem:[%s1 + $0x38] sm:$0xf]
  %v50 = vld [vmem:[%s1 + $0x3c] sm:$0xf]
  %v51 = vld [vmem:[%s1 + $0x40] sm:$0xf]
  %v52 = vld [vmem:[%s1 + $0x44] sm:$0xf]
  %v53 = vld [vmem:[%s1 + $0x48] sm:$0xf]
  %v54 = vld [vmem:[%s1 + $0x4c] sm:$0xf]
  %v55 = vld [vmem:[%s1 + $0x50] sm:$0xf]
  %v56 = vld [vmem:[%s1 + $0x54] sm:$0xf]
  %v57 = vld [vmem:[%s1 + $0x58] sm:$0xf]
  %v58 = vld [vmem:[%s1 + $0x5c] sm:$0xf]
  %v59 = vld [vmem:[%s1 + $0x60] sm:$0xf]
  %v60 = vld [vmem:[%s1 + $0x64] sm:$0xf]
  %v61 = vld [vmem:[%s1 + $0x68] sm:$0xf]
  %v62 = vld [vmem:[%s1 + $0x6c] sm:$0xf]
  %v63 = vld [vmem:[%s1 + $0x70] sm:$0xf]
  %v64 = vld [vmem:[%s1 + $0x74] sm:$0xf]
  %v65 = vld [vmem:[%s1 + $0x78] sm:$0xf]
  %v66 = vld [vmem:[%s1 + $0x7c] sm:$0xf]
  %v67 = vld [vmem:[%s1 + $0x80] sm:$0xf]
  %v68 = vld [vmem:[%s1 + $0x84] sm:$0xf]
  %v69 = vld [vmem:[%s1 + $0x88] sm:$0xf]
  %v70 = vld [vmem:[%s1 + $0x8c] sm:$0xf]
  %v71 = vld [vmem:[%s1 + $0x90] sm:$0xf]
  %v72 = vld [vmem:[%s1 + $0x94] sm:$0xf]
  %v73 = vld [vmem:[%s1 + $0x98] sm:$0xf]
  %v74 = vld [vmem:[%s1 + $0x9c] sm:$0xf]
  %v75 = vld [vmem:[%s1 + $0xa0] sm:$0xf]
  %v76 = vld [vmem:[%s1 + $0xa4] sm:$0xf]
  %v77 = vld [vmem:[%s1 + $0xa8] sm:$0xf]
  %v78 = vld [vmem:[%s1 + $0xac] sm:$0xf]
  %v79 = vld [vmem:[%s1 + $0xb0] sm:$0xf]
  %v80 = vld [vmem:[%s1 + $0xb4] sm:$0xf]
  %v81 = vld [vmem:[%s1 + $0xb8] sm:$0xf]
  %v82 = vld [vmem:[%s1 + $0xbc] sm:$0xf]
  %v83 = vld [vmem:[%s1 + $0xc0] sm:$0xf]
  %v84 = vld [vmem:[%s1 + $0xc4] sm:$0xf]
  %v85 = vld [vmem:[%s2] sm:$0x1]
  %v87 = vlaneseq
  %v88 = vshrl.u32 %v87, 7
  %v89 = vsub.s32 0, %v88
  %v90 = vrot.slane %v85, %v89
  %v100 = vunpack.c.l.b16 %v27
  %v101 = vunpack.c.h.b16 %v27
  %v102 = vunpack.c.l.b16 %v28
  %v103 = vunpack.c.h.b16 %v28
  %v104 = vunpack.c.l.b16 %v29
  %v105 = vunpack.c.h.b16 %v29
  %v106 = vunpack.c.l.b16 %v30
  %v107 = vunpack.c.h.b16 %v30
  %v108 = vunpack.c.l.b16 %v31
  %v109 = vunpack.c.h.b16 %v31
  %v110 = vunpack.c.l.b16 %v32
  %v111 = vunpack.c.h.b16 %v32
  %v112 = vunpack.c.l.b16 %v33
  %v113 = vunpack.c.h.b16 %v33
  %v114 = vunpack.c.l.b16 %v34
  %v115 = vunpack.c.h.b16 %v34
  %v116 = vpack.c.b16 %v104, %v100
  %v117 = vpack.c.b16 %v105, %v101
  %v118 = vpack.c.b16 %v106, %v102
  %v119 = vpack.c.b16 %v107, %v103
  %v120 = vpack.c.b16 %v112, %v108
  %v121 = vpack.c.b16 %v113, %v109
  %v122 = vpack.c.b16 %v114, %v110
  %v123 = vpack.c.b16 %v115, %v111
  %v180 = vunpack.c.l.b16 %v35
  %v181 = vunpack.c.l.b16 %v36
  %v182 = vunpack.c.l.b16 %v37
  %v183 = vunpack.c.l.b16 %v38
  %v184 = vunpack.c.l.b16 %v39
  %v185 = vunpack.c.l.b16 %v40
  %v186 = vunpack.c.l.b16 %v41
  %v187 = vunpack.c.l.b16 %v42
  %v188 = vunpack.c.l.b16 %v43
  %v189 = vunpack.c.l.b16 %v44
  %v190 = vunpack.c.l.b16 %v45
  %v191 = vunpack.c.l.b16 %v46
  %v192 = vunpack.c.l.b16 %v47
  %v193 = vunpack.c.l.b16 %v48
  %v194 = vunpack.c.l.b16 %v49
  %v195 = vunpack.c.l.b16 %v50
  %v196 = vunpack.c.l.b16 %v51
  %v197 = vunpack.c.l.b16 %v52
  %v198 = vunpack.c.l.b16 %v53
  %v199 = vunpack.c.l.b16 %v54
  %v200 = vunpack.c.l.b16 %v55
  %v201 = vunpack.c.l.b16 %v56
  %v202 = vunpack.c.l.b16 %v57
  %v203 = vunpack.c.l.b16 %v58
  %v204 = vunpack.c.l.b16 %v59
  %v205 = vunpack.c.l.b16 %v60
  %v206 = vunpack.c.l.b16 %v61
  %v207 = vunpack.c.l.b16 %v62
  %v208 = vunpack.c.l.b16 %v63
  %v209 = vunpack.c.l.b16 %v64
  %v210 = vunpack.c.l.b16 %v65
  %v211 = vunpack.c.l.b16 %v66
  %v212 = vunpack.c.l.b16 %v67
  %v213 = vunpack.c.l.b16 %v68
  %v214 = vunpack.c.l.b16 %v69
  %v215 = vunpack.c.l.b16 %v70
  %v216 = vunpack.c.l.b16 %v71
  %v217 = vunpack.c.l.b16 %v72
  %v218 = vunpack.c.l.b16 %v73
  %v219 = vunpack.c.l.b16 %v74
  %v220 = vunpack.c.l.b16 %v75
  %v221 = vunpack.c.l.b16 %v76
  %v222 = vunpack.c.l.b16 %v77
  %v223 = vunpack.c.l.b16 %v78
  %v224 = vunpack.c.l.b16 %v79
  %v225 = vunpack.c.l.b16 %v80
  %v226 = vunpack.c.l.b16 %v81
  %v227 = vunpack.c.l.b16 %v82
  %v228 = vunpack.c.l.b16 %v83
  %v229 = vunpack.c.l.b16 %v84
  %v230 = vpack.c.b16 %v181, %v180
  %v231 = vpack.c.b16 %v183, %v182
  %v232 = vpack.c.b16 %v185, %v184
  %v233 = vpack.c.b16 %v187, %v186
  %v234 = vpack.c.b16 %v189, %v188
  %v235 = vpack.c.b16 %v191, %v190
  %v236 = vpack.c.b16 %v193, %v192
  %v237 = vpack.c.b16 %v195, %v194
  %v238 = vpack.c.b16 %v197, %v196
  %v239 = vpack.c.b16 %v199, %v198
  %v240 = vpack.c.b16 %v201, %v200
  %v241 = vpack.c.b16 %v203, %v202
  %v242 = vpack.c.b16 %v205, %v204
  %v243 = vpack.c.b16 %v207, %v206
  %v244 = vpack.c.b16 %v209, %v208
  %v245 = vpack.c.b16 %v211, %v210
  %v246 = vpack.c.b16 %v213, %v212
  %v247 = vpack.c.b16 %v215, %v214
  %v248 = vpack.c.b16 %v217, %v216
  %v249 = vpack.c.b16 %v219, %v218
  %v250 = vpack.c.b16 %v221, %v220
  %v251 = vpack.c.b16 %v223, %v222
  %v252 = vpack.c.b16 %v225, %v224
  %v253 = vpack.c.b16 %v227, %v226
  %v254 = vpack.c.b16 %v229, %v228
  %vm280 = vcmask 130048
  %v282 = vsel %vm280, %v119, 0
  %v285 = vsel %vm280, %v123, 0
  %287 = vmatprep.subr.bf16.mxu0 0
  %288 = vmatpush1.bf16.msra.mxu0 %v230
  %289 = vmatprep.subr.bf16.mxu0 0
  %290 = vmatpush1.bf16.msra.mxu0 %v231
  %291 = vmatprep.subr.bf16.mxu0 0
  %292 = vmatpush1.bf16.msra.mxu0 %v232
  %293 = vmatprep.subr.bf16.mxu0 0
  %294 = vmatpush1.bf16.msra.mxu0 %v233
  %295 = vmatprep.subr.bf16.mxu0 0
  %296 = vmatpush1.bf16.msra.mxu0 %v234
  %297 = vmatprep.subr.bf16.mxu0 0
  %298 = vmatpush1.bf16.msra.mxu0 %v235
  %299 = vmatprep.subr.bf16.mxu0 0
  %300 = vmatpush1.bf16.msra.mxu0 %v236
  %301 = vmatprep.subr.bf16.mxu0 0
  %302 = vmatpush1.bf16.msra.mxu0 %v237
  %303 = vmatprep.subr.bf16.mxu0 0
  %304 = vmatpush1.bf16.msra.mxu0 %v238
  %305 = vmatprep.subr.bf16.mxu0 0
  %306 = vmatpush1.bf16.msra.mxu0 %v239
  %307 = vmatprep.subr.bf16.mxu0 0
  %308 = vmatpush1.bf16.msra.mxu0 %v240
  %309 = vmatprep.subr.bf16.mxu0 0
  %310 = vmatpush1.bf16.msra.mxu0 %v241
  %311 = vmatprep.subr.bf16.mxu0 0
  %312 = vmatpush1.bf16.msra.mxu0 %v242
  %313 = vmatprep.subr.bf16.mxu0 0
  %314 = vmatpush1.bf16.msra.mxu0 %v243
  %315 = vmatprep.subr.bf16.mxu0 0
  %316 = vmatpush1.bf16.msra.mxu0 %v244
  %317 = vmatprep.subr.bf16.mxu0 0
  %318 = vmatpush1.bf16.msra.mxu0 %v245
  %319 = vmatprep.mubr.bf16.mxu0 %v117
  %320 = vmatmul.mubr.bf16.gmra.mrb[0].mxu0 %v116
  %v321 = vpop.f32.mrb[0].mxu0
  %v322 = vadd.f32 %v90, %v321
  %v323 = vpop.f32.mrb[0].mxu0
  %v324 = vpop.f32.mrb[0].mxu0
  %v325 = vadd.f32 %v90, %v324
  %v326 = vpop.f32.mrb[0].mxu0
  %327 = vmatprep.mubr.bf16.mxu0 %v121
  %328 = vmatmul.mubr.bf16.gmra.mrb[0].mxu0 %v120
  %v329 = vpop.f32.mrb[0].mxu0
  %v330 = vadd.f32 %v90, %v329
  %v331 = vpop.f32.mrb[0].mxu0
  %v332 = vpop.f32.mrb[0].mxu0
  %v333 = vadd.f32 %v90, %v332
  %v334 = vpop.f32.mrb[0].mxu0
  %335 = vdwg.mxu0
  %336 = vmatprep.subr.bf16.mxu0 0
  %337 = vmatpush1.bf16.msra.mxu0 %v246
  %338 = vmatprep.subr.bf16.mxu0 0
  %339 = vmatpush1.bf16.msra.mxu0 %v247
  %340 = vmatprep.subr.bf16.mxu0 0
  %341 = vmatpush1.bf16.msra.mxu0 %v248
  %342 = vmatprep.subr.bf16.mxu0 0
  %343 = vmatpush1.bf16.msra.mxu0 %v249
  %344 = vmatprep.subr.bf16.mxu0 0
  %345 = vmatpush1.bf16.msra.mxu0 %v250
  %346 = vmatprep.subr.bf16.mxu0 0
  %347 = vmatpush1.bf16.msra.mxu0 %v251
  %348 = vmatprep.subr.bf16.mxu0 0
  %349 = vmatpush1.bf16.msra.mxu0 %v252
  %350 = vmatprep.subr.bf16.mxu0 0
  %351 = vmatpush1.bf16.msra.mxu0 %v253
  %352 = vmatprep.subr.bf16.mxu0 0
  %353 = vmatpush1.bf16.msra.mxu0 %v254
  %354 = vmatprep.subr.bf16.mxu0 0
  %355 = vmatpush1.bf16.msra.mxu0 0
  %356 = vmatprep.subr.bf16.mxu0 0
  %357 = vmatpush1.bf16.msra.mxu0 0
  %358 = vmatprep.subr.bf16.mxu0 0
  %359 = vmatpush1.bf16.msra.mxu0 0
  %360 = vmatprep.subr.bf16.mxu0 0
  %361 = vmatpush1.bf16.msra.mxu0 0
  %362 = vmatprep.subr.bf16.mxu0 0
  %363 = vmatpush1.bf16.msra.mxu0 0
  %364 = vmatprep.subr.bf16.mxu0 0
  %365 = vmatpush1.bf16.msra.mxu0 0
  %366 = vmatprep.subr.bf16.mxu0 0
  %367 = vmatpush1.bf16.msra.mxu0 0
  %368 = vmatprep.mubr.bf16.mxu0 %v282
  %369 = vmatmul.mubr.bf16.gmra.mrb[0].mxu0 %v118
  %v370 = vpop.f32.mrb[0].mxu0
  %v371 = vadd.f32 %v322, %v370
  %v372 = vpop.f32.mrb[0].mxu0
  %v373 = vpop.f32.mrb[0].mxu0
  %v374 = vadd.f32 %v325, %v373
  %v375 = vpop.f32.mrb[0].mxu0
  %376 = vmatprep.mubr.bf16.mxu0 %v285
  %377 = vmatmul.mubr.bf16.gmra.mrb[0].mxu0 %v122
  %v378 = vpop.f32.mrb[0].mxu0
  %v379 = vadd.f32 %v330, %v378
  %v380 = vpop.f32.mrb[0].mxu0
  %v381 = vpop.f32.mrb[0].mxu0
  %v382 = vadd.f32 %v333, %v381
  %v383 = vpop.f32.mrb[0].mxu0
  %384 = vdwg.mxu0
  %v385 = vmax.f32 %v371, 0.0
  %v386 = vmax.f32 %v374, 0.0
  %v387 = vmax.f32 %v379, 0.0
  %v388 = vmax.f32 %v382, 0.0
  %v389 = vpack.c.bf16 %v386, %v385
  %v390 = vpack.c.bf16 %v388, %v387
  %v391 = vld [vmem:[%s3] sm:$0xf]
  %v392 = vld [vmem:[%s3 + $0x4] sm:$0xf]
  %v393 = vld [vmem:[%s3 + $0x8] sm:$0xf]
  %v394 = vld [vmem:[%s3 + $0xc] sm:$0xf]
  %v395 = vld [vmem:[%s3 + $0x10] sm:$0xf]
  %v396 = vld [vmem:[%s3 + $0x14] sm:$0xf]
  %v397 = vld [vmem:[%s3 + $0x18] sm:$0xf]
  %v398 = vld [vmem:[%s3 + $0x1c] sm:$0xf]
  %v399 = vld [vmem:[%s3 + $0x20] sm:$0xf]
  %v400 = vld [vmem:[%s3 + $0x24] sm:$0xf]
  %v401 = vld [vmem:[%s3 + $0x28] sm:$0xf]
  %v402 = vld [vmem:[%s3 + $0x2c] sm:$0xf]
  %v403 = vld [vmem:[%s3 + $0x30] sm:$0xf]
  %v404 = vld [vmem:[%s3 + $0x34] sm:$0xf]
  %v405 = vld [vmem:[%s3 + $0x38] sm:$0xf]
  %v406 = vld [vmem:[%s3 + $0x3c] sm:$0xf]
  %v407 = vld [vmem:[%s4] sm:$0x1]
  %v409 = vlaneseq
  %v410 = vshrl.u32 %v409, 7
  %v411 = vsub.s32 0, %v410
  %v412 = vrot.slane %v407, %v411
  %v430 = vunpack.c.l.b16 %v391
  %v431 = vunpack.c.l.b16 %v392
  %v432 = vunpack.c.l.b16 %v393
  %v433 = vunpack.c.l.b16 %v394
  %v434 = vunpack.c.l.b16 %v395
  %v435 = vunpack.c.l.b16 %v396
  %v436 = vunpack.c.l.b16 %v397
  %v437 = vunpack.c.l.b16 %v398
  %v438 = vunpack.c.l.b16 %v399
  %v439 = vunpack.c.l.b16 %v400
  %v440 = vunpack.c.l.b16 %v401
  %v441 = vunpack.c.l.b16 %v402
  %v442 = vunpack.c.l.b16 %v403
  %v443 = vunpack.c.l.b16 %v404
  %v444 = vunpack.c.l.b16 %v405
  %v445 = vunpack.c.l.b16 %v406
  %v446 = vpack.c.b16 %v431, %v430
  %v447 = vpack.c.b16 %v433, %v432
  %v448 = vpack.c.b16 %v435, %v434
  %v449 = vpack.c.b16 %v437, %v436
  %v450 = vpack.c.b16 %v439, %v438
  %v451 = vpack.c.b16 %v441, %v440
  %v452 = vpack.c.b16 %v443, %v442
  %v453 = vpack.c.b16 %v445, %v444
  %462 = vmatprep.subr.bf16.mxu0 0
  %463 = vmatpush1.bf16.msra.mxu0 %v446
  %464 = vmatprep.subr.bf16.mxu0 0
  %465 = vmatpush1.bf16.msra.mxu0 %v447
  %466 = vmatprep.subr.bf16.mxu0 0
  %467 = vmatpush1.bf16.msra.mxu0 %v448
  %468 = vmatprep.subr.bf16.mxu0 0
  %469 = vmatpush1.bf16.msra.mxu0 %v449
  %470 = vmatprep.subr.bf16.mxu0 0
  %471 = vmatpush1.bf16.msra.mxu0 %v450
  %472 = vmatprep.subr.bf16.mxu0 0
  %473 = vmatpush1.bf16.msra.mxu0 %v451
  %474 = vmatprep.subr.bf16.mxu0 0
  %475 = vmatpush1.bf16.msra.mxu0 %v452
  %476 = vmatprep.subr.bf16.mxu0 0
  %477 = vmatpush1.bf16.msra.mxu0 %v453
  %478 = vmatprep.subr.bf16.mxu0 0
  %479 = vmatpush1.bf16.msra.mxu0 0
  %480 = vmatprep.subr.bf16.mxu0 0
  %481 = vmatpush1.bf16.msra.mxu0 0
  %482 = vmatprep.subr.bf16.mxu0 0
  %483 = vmatpush1.bf16.msra.mxu0 0
  %484 = vmatprep.subr.bf16.mxu0 0
  %485 = vmatpush1.bf16.msra.mxu0 0
  %486 = vmatprep.subr.bf16.mxu0 0
  %487 = vmatpush1.bf16.msra.mxu0 0
  %488 = vmatprep.subr.bf16.mxu0 0
  %489 = vmatpush1.bf16.msra.mxu0 0
  %490 = vmatprep.subr.bf16.mxu0 0
  %491 = vmatpush1.bf16.msra.mxu0 0
  %492 = vmatprep.subr.bf16.mxu0 0
  %493 = vmatpush1.bf16.msra.mxu0 0
  %494 = vmatprep.mubr.bf16.mxu0 0
  %495 = vmatmul.mubr.bf16.gmra.mrb[0].mxu0 %v389
  %v496 = vpop.f32.mrb[0].mxu0
  %v497 = vadd.f32 %v412, %v496
  %v498 = vpop.f32.mrb[0].mxu0
  %v499 = vpop.f32.mrb[0].mxu0
  %v500 = vadd.f32 %v412, %v499
  %v501 = vpop.f32.mrb[0].mxu0
  %502 = vmatprep.mubr.bf16.mxu0 0
  %503 = vmatmul.mubr.bf16.gmra.mrb[0].mxu0 %v390
  %v504 = vpop.f32.mrb[0].mxu0
  %v505 = vadd.f32 %v412, %v504
  %v506 = vpop.f32.mrb[0].mxu0
  %v507 = vpop.f32.mrb[0].mxu0
  %v508 = vadd.f32 %v412, %v507
  %v509 = vpop.f32.mrb[0].mxu0
  %510 = vdwg.mxu0
  %v511 = vmax.f32 %v497, 0.0
  %v512 = vmax.f32 %v500, 0.0
  %v513 = vmax.f32 %v505, 0.0
  %v514 = vmax.f32 %v508, 0.0
  %v515 = vpack.c.bf16 %v512, %v511
  %v516 = vpack.c.bf16 %v514, %v513
  %v517 = vld [vmem:[%s5] sm:$0xf]
  %v518 = vld [vmem:[%s5 + $0x4] sm:$0xf]
  %v519 = vld [vmem:[%s5 + $0x8] sm:$0xf]
  %v520 = vld [vmem:[%s5 + $0xc] sm:$0xf]
  %v521 = vld [vmem:[%s5 + $0x10] sm:$0xf]
  %v522 = vld [vmem:[%s5 + $0x14] sm:$0xf]
  %v523 = vld [vmem:[%s5 + $0x18] sm:$0xf]
  %v524 = vld [vmem:[%s5 + $0x1c] sm:$0xf]
  %v525 = vld [vmem:[%s5 + $0x20] sm:$0xf]
  %v526 = vld [vmem:[%s5 + $0x24] sm:$0xf]
  %v527 = vld [vmem:[%s5 + $0x28] sm:$0xf]
  %v528 = vld [vmem:[%s5 + $0x2c] sm:$0xf]
  %v529 = vld [vmem:[%s5 + $0x30] sm:$0xf]
  %v530 = vld [vmem:[%s5 + $0x34] sm:$0xf]
  %v531 = vld [vmem:[%s5 + $0x38] sm:$0xf]
  %v532 = vld [vmem:[%s5 + $0x3c] sm:$0xf]
  %v533 = vld [vmem:[%s6] sm:$0x1]
  %v535 = vlaneseq
  %v536 = vshrl.u32 %v535, 7
  %v537 = vsub.s32 0, %v536
  %v538 = vrot.slane %v533, %v537
  %v556 = vunpack.c.l.b16 %v517
  %v557 = vunpack.c.l.b16 %v518
  %v558 = vunpack.c.l.b16 %v519
  %v559 = vunpack.c.l.b16 %v520
  %v560 = vunpack.c.l.b16 %v521
  %v561 = vunpack.c.l.b16 %v522
  %v562 = vunpack.c.l.b16 %v523
  %v563 = vunpack.c.l.b16 %v524
  %v564 = vunpack.c.l.b16 %v525
  %v565 = vunpack.c.l.b16 %v526
  %v566 = vunpack.c.l.b16 %v527
  %v567 = vunpack.c.l.b16 %v528
  %v568 = vunpack.c.l.b16 %v529
  %v569 = vunpack.c.l.b16 %v530
  %v570 = vunpack.c.l.b16 %v531
  %v571 = vunpack.c.l.b16 %v532
  %v572 = vpack.c.b16 %v557, %v556
  %v573 = vpack.c.b16 %v559, %v558
  %v574 = vpack.c.b16 %v561, %v560
  %v575 = vpack.c.b16 %v563, %v562
  %v576 = vpack.c.b16 %v565, %v564
  %v577 = vpack.c.b16 %v567, %v566
  %v578 = vpack.c.b16 %v569, %v568
  %v579 = vpack.c.b16 %v571, %v570
  %588 = vmatprep.subr.bf16.mxu0 0
  %589 = vmatpush1.bf16.msra.mxu0 %v572
  %590 = vmatprep.subr.bf16.mxu0 0
  %591 = vmatpush1.bf16.msra.mxu0 %v573
  %592 = vmatprep.subr.bf16.mxu0 0
  %593 = vmatpush1.bf16.msra.mxu0 %v574
  %594 = vmatprep.subr.bf16.mxu0 0
  %595 = vmatpush1.bf16.msra.mxu0 %v575
  %596 = vmatprep.subr.bf16.mxu0 0
  %597 = vmatpush1.bf16.msra.mxu0 %v576
  %598 = vmatprep.subr.bf16.mxu0 0
  %599 = vmatpush1.bf16.msra.mxu0 %v577
  %600 = vmatprep.subr.bf16.mxu0 0
  %601 = vmatpush1.bf16.msra.mxu0 %v578
  %602 = vmatprep.subr.bf16.mxu0 0
  %603 = vmatpush1.bf16.msra.mxu0 %v579
  %604 = vmatprep.subr.bf16.mxu0 0
  %605 = vmatpush1.bf16.msra.mxu0 0
  %606 = vmatprep.subr.bf16.mxu0 0
  %607 = vmatpush1.bf16.msra.mxu0 0
  %608 = vmatprep.subr.bf16.mxu0 0
  %609 = vmatpush1.bf16.msra.mxu0 0
  %610 = vmatprep.subr.bf16.mxu0 0
  %611 = vmatpush1.bf16.msra.mxu0 0
  %612 = vmatprep.subr.bf16.mxu0 0
  %613 = vmatpush1.bf16.msra.mxu0 0
  %614 = vmatprep.subr.bf16.mxu0 0
  %615 = vmatpush1.bf16.msra.mxu0 0
  %616 = vmatprep.subr.bf16.mxu0 0
  %617 = vmatpush1.bf16.msra.mxu0 0
  %618 = vmatprep.subr.bf16.mxu0 0
  %619 = vmatpush1.bf16.msra.mxu0 0
  %620 = vmatprep.mubr.bf16.mxu0 0
  %621 = vmatmul.mubr.bf16.gmra.mrb[0].mxu0 %v515
  %v622 = vpop.f32.mrb[0].mxu0
  %v623 = vadd.f32 %v538, %v622
  %v624 = vpop.f32.mrb[0].mxu0
  %v625 = vpop.f32.mrb[0].mxu0
  %v626 = vadd.f32 %v538, %v625
  %v627 = vpop.f32.mrb[0].mxu0
  %628 = vmatprep.mubr.bf16.mxu0 0
  %629 = vmatmul.mubr.bf16.gmra.mrb[0].mxu0 %v516
  %v630 = vpop.f32.mrb[0].mxu0
  %v631 = vadd.f32 %v538, %v630
  %v632 = vpop.f32.mrb[0].mxu0
  %v633 = vpop.f32.mrb[0].mxu0
  %v634 = vadd.f32 %v538, %v633
  %v635 = vpop.f32.mrb[0].mxu0
  %636 = vdwg.mxu0
  %vm637 = vcmask 80896
  %638 = vst.msk [vmem:[%s7] sm:$0xff] %vm637, %v623
  %639 = vst.msk [vmem:[%s7 + $0x8] sm:$0xff] %vm637, %v626
  %640 = vst.msk [vmem:[%s7 + $0x10] sm:$0xff] %vm637, %v631
  %641 = vst.msk [vmem:[%s7 + $0x18] sm:$0xff] %vm637, %v634
  // Predicated region
  $region30: #{net_forward.5} parent=0 // pred_check
    _
  $region31: #{net_forward.5} parent=0 // pred_check_branch
    %643 = sbr.rel (0) target = $region33
  $region32: #{net_forward.5} parent=0 // pred_region
    _
  $region33: #{net_forward.5} parent=0 // pred_fallthru
    _
  // Predicated region
  $region34: #{net_forward.5} parent=0 // pred_check
    _
  $region35: #{net_forward.5} parent=0 // pred_check_branch
    %645 = sbr.rel (0) target = $region37
  $region36: #{net_forward.5} parent=0 // pred_region
    _
  $region37: #{net_forward.5} parent=0 // pred_fallthru
    _

</llo_original>
